<compile_context>
chip_gen: v6e
topology: v6e:2x2x1
jax: 0.10.0
libtpu: 0.0.40
codegen_flags: <defaults>
</compile_context>

<pallas_src>
import functools

import numpy as np

import jax
import jax.numpy as jnp
from jax.experimental import pallas as pl
from jax.experimental.pallas import tpu as pltpu


# ----------------------------------------------------------------------------
# In-kernel helpers
# ----------------------------------------------------------------------------
def _gelu_tanh(x):
    # tanh-approximate GELU: runs on the EUP (own VLIW slot).
    c = 0.7978845608028654  # sqrt(2/pi)
    return 0.5 * x * (1.0 + jnp.tanh(c * (x + 0.044715 * x * x * x)))


# ----------------------------------------------------------------------------
# Pallas kernel: full Pc_mlp forward for one batch block.
# Slab layout: rows = (a1, a2), lanes = (b_in_block, a3, c) with c fastest.
# ----------------------------------------------------------------------------
def _pc_mlp_kernel(x_ref, khw_ref, bhw_ref, kd_ref, kpu_ref, kc1_ref, kc2_ref,
                   rlx_ref, clx_ref, rw_ref, rlo_ref, avgo_ref, o_ref,
                   *, A, C, C4, Co, bb):
    f32, bf16 = jnp.float32, jnp.bfloat16
    R = A * A
    Lx, Lo, L4 = bb * A * C, bb * A * Co, bb * A * C4
    bbA, bbC, bbC4 = bb * A, bb * C, bb * C4

    x = x_ref[0]                                              # (R, Lx) f32

    # ---- unpack lane-dense operand packs (load once, slice as values) ------
    rlx = rlx_ref[...]                                        # (bbA+bbC+3, Lx)
    exp_c = rlx[0:bbA, :]
    exp_rw = rlx[bbA:bbA + bbC, :]
    r0 = bbA + bbC
    g_row = rlx[r0:r0 + 1, :]
    b_row = rlx[r0 + 1:r0 + 2, :]
    bd_row = rlx[r0 + 2:r0 + 3, :]

    clx = clx_ref[...]                                        # (Lx, bbA+bbC)
    avg_c = clx[:, 0:bbA]
    t_avg = clx[:, bbA:bbA + bbC]

    # ---- layer_norm_before (over C, eps=1e-5, affine); stats via tiny
    #      matmuls (avoids strided sub-lane-group reductions) ----------------
    mu = jnp.dot(x, avg_c, preferred_element_type=f32)        # (R, bbA)
    xc = x - jnp.dot(mu, exp_c, preferred_element_type=f32)
    var = jnp.dot(xc * xc, avg_c, preferred_element_type=f32)
    xn = xc * jnp.dot(jax.lax.rsqrt(var + 1e-5), exp_c,
                      preferred_element_type=f32)
    xn = xn * g_row + b_row
    xnb = xn.astype(bf16)

    # ---- up_sample_mlp(xn): depends only on xn -> issue early so it overlaps
    #      the whole serial reweight chain ------------------------------------
    up = jnp.dot(xnb, kpu_ref[:, Lo:2 * Lo], preferred_element_type=f32)

    # ---- WeightedPermuteMLP_3d spatial mixing (h & w fused in one stacked
    #      left matmul; d is a right matmul) ---------------------------------
    hw = jnp.dot(khw_ref[...], xnb, preferred_element_type=f32) + bhw_ref[...]
    h = hw[0:R]                                   # mixes spatial axis 2
    w = hw[R:2 * R]                               # mixes spatial axis 1
    d = jnp.dot(xnb, kd_ref[...], preferred_element_type=f32) + bd_row

    # ---- reweight MLP on the per-(batch,channel) global spatial mean,
    #      3-way softmax over branches ---------------------------------------
    rw = rw_ref[...]
    wr1t = rw[0:bbC, 0:bbC4]
    wr2t = rw[bbC:bbC + bbC4, 0:3 * bbC]
    br1 = rw[bbC + bbC4:bbC + bbC4 + 1, 0:bbC4]
    br2 = rw[bbC + bbC4 + 1:bbC + bbC4 + 2, 0:3 * bbC]

    a_sum = h + w + d
    rowmean = jnp.mean(a_sum, axis=0, keepdims=True)                    # (1, Lx)
    amean = jnp.dot(rowmean, t_avg, preferred_element_type=f32)         # (1, bbC)
    r1 = _gelu_tanh(jnp.dot(amean, wr1t, preferred_element_type=f32) + br1)
    logits = jnp.dot(r1, wr2t, preferred_element_type=f32) + br2        # (1, 3bbC)
    s_h = logits[:, 0:bbC]
    s_w = logits[:, bbC:2 * bbC]
    s_d = logits[:, 2 * bbC:3 * bbC]
    m = jnp.maximum(jnp.maximum(s_h, s_w), s_d)
    e_h, e_w, e_d = jnp.exp(s_h - m), jnp.exp(s_w - m), jnp.exp(s_d - m)
    inv = 1.0 / (e_h + e_w + e_d)
    # single lane-expansion matmul for all three branch gates
    gates = jnp.concatenate([e_h * inv, e_w * inv, e_d * inv], axis=0)  # (3, bbC)
    a_all = jnp.dot(gates, exp_rw, preferred_element_type=f32)          # (3, Lx)
    xw = h * a_all[0:1, :] + w * a_all[1:2, :] + d * a_all[2:3, :]

    # ---- output-side packed rows --------------------------------------------
    rlo = rlo_ref[...]                                        # (bbA+5, >=Lo)
    exp_o = rlo[0:bbA, 0:Lo]
    bpu = rlo[bbA:bbA + 1, 0:Lo]
    bc1 = rlo[bbA + 1:bbA + 2, 0:L4]
    bc2 = rlo[bbA + 2:bbA + 3, 0:Lo]
    ga = rlo[bbA + 3:bbA + 4, 0:Lo]
    ba = rlo[bbA + 4:bbA + 5, 0:Lo]

    # ---- ef = proj(xw) + up_sample_mlp(xn)  (split matmuls, no lane concat) -
    ef = (jnp.dot(xw.astype(bf16), kpu_ref[:, 0:Lo], preferred_element_type=f32)
          + up + bpu)

    # ---- channle_mlp (out_dim -> dim//4 -> out_dim, GELU) + residual --------
    c1 = _gelu_tanh(jnp.dot(ef.astype(bf16), kc1_ref[...],
                            preferred_element_type=f32) + bc1)
    c2 = jnp.dot(c1.astype(bf16), kc2_ref[...], preferred_element_type=f32) + bc2
    o = ef + c2

    # ---- layer_norm_after (over out_dim) ------------------------------------
    avg_o = avgo_ref[...]
    mu2 = jnp.dot(o, avg_o, preferred_element_type=f32)
    oc = o - jnp.dot(mu2, exp_o, preferred_element_type=f32)
    var2 = jnp.dot(oc * oc, avg_o, preferred_element_type=f32)
    on = oc * jnp.dot(jax.lax.rsqrt(var2 + 1e-5), exp_o,
                      preferred_element_type=f32)
    o_ref[0] = (on * ga + ba).astype(o_ref.dtype)             # 128-lane store


# ----------------------------------------------------------------------------
# Parameter / operand preparation (done ONCE, outside the jitted forward)
# ----------------------------------------------------------------------------
def init_params(key, hwd, dim, out_dim):
    """Deterministic synthetic parameters matching the module's shapes
    (PyTorch Linear convention: W is (out_features, in_features))."""
    c4 = dim // 4
    keys = jax.random.split(key, 10)

    def lin(k, out_f, in_f, scale=0.05):
        kw, kb = jax.random.split(k)
        w = jax.random.normal(kw, (out_f, in_f), jnp.float32) * scale
        b = jax.random.normal(kb, (out_f,), jnp.float32) * scale
        return w, b

    p = {}
    p['Wh'], p['bh'] = lin(keys[0], hwd, hwd)          # CCS mlp_h
    p['Ww'], p['bw'] = lin(keys[1], hwd, hwd)          # CCS mlp_w
    p['Wd'], p['bd'] = lin(keys[2], hwd, hwd)          # CCS mlp_d
    p['Wr1'], p['br1'] = lin(keys[3], c4, dim)         # reweight.fc1
    p['Wr2'], p['br2'] = lin(keys[4], dim * 3, c4)     # reweight.fc2
    p['Wproj'], p['bproj'] = lin(keys[5], out_dim, dim)    # proj
    p['Wup'], p['bup'] = lin(keys[6], out_dim, dim)        # up_sample_mlp
    p['Wc1'], p['bc1'] = lin(keys[7], c4, out_dim)     # channle_mlp.fc1
    p['Wc2'], p['bc2'] = lin(keys[8], out_dim, c4)     # channle_mlp.fc2
    p['g_before'] = jnp.ones((dim,), jnp.float32)
    p['b_before'] = jnp.zeros((dim,), jnp.float32)
    p['g_after'] = jnp.ones((out_dim,), jnp.float32)
    p['b_after'] = jnp.zeros((out_dim,), jnp.float32)
    return p


def prepare_pc_mlp_operands(p, hwd, batch_block):
    """Small constant factors / packed operands for the batch-folded layout
    rows = (a1, a2), lanes = (b, a3, c)."""
    A, bb = hwd, batch_block
    C = p['Wr1'].shape[1]          # dim
    C4 = p['Wr1'].shape[0]         # dim // 4
    Co = p['Wproj'].shape[0]       # out_dim
    f32, bf16 = jnp.float32, jnp.bfloat16
    R = A * A
    Lx, Lo, L4 = bb * A * C, bb * A * Co, bb * A * C4
    bbA, bbC, bbC4 = bb * A, bb * C, bb * C4

    eye = lambda n: jnp.eye(n, dtype=f32)
    ones = lambda *s: jnp.ones(s, f32)

    def padw(a, w):
        return jnp.pad(a, ((0, 0), (0, w - a.shape[1])))

    # bf16 MXU factors --------------------------------------------------------
    khw = jnp.concatenate([jnp.kron(eye(A), p['Wh']),            # mixes a2
                           jnp.kron(p['Ww'], eye(A))], axis=0)   # mixes a1
    khw = khw.astype(bf16)                                       # (2R, R)
    kd = jnp.kron(eye(bb), jnp.kron(p['Wd'].T, eye(C))).astype(bf16)   # (Lx, Lx)
    k_pu = jnp.concatenate([jnp.kron(eye(bbA), p['Wproj'].T),
                            jnp.kron(eye(bbA), p['Wup'].T)], axis=1).astype(bf16)
    kc1 = jnp.kron(eye(bbA), p['Wc1'].T).astype(bf16)            # (Lo, L4)
    kc2 = jnp.kron(eye(bbA), p['Wc2'].T).astype(bf16)            # (L4, Lo)

    # packed rows of width Lx (f32) -------------------------------------------
    exp_c = jnp.kron(eye(bbA), ones(1, C))                       # (bbA, Lx)
    exp_rw = jnp.kron(eye(bb), jnp.tile(eye(C), (1, A)))         # (bbC, Lx)
    g_row = jnp.tile(p['g_before'], bbA).reshape(1, Lx)
    b_row = jnp.tile(p['b_before'], bbA).reshape(1, Lx)
    bd_row = jnp.tile(jnp.repeat(p['bd'], C), bb).reshape(1, Lx)
    rows_lx = jnp.concatenate([exp_c, exp_rw, g_row, b_row, bd_row], axis=0)

    # packed narrow columns with height Lx (f32) ------------------------------
    avg_c = jnp.kron(eye(bbA), ones(C, 1) / C)                   # (Lx, bbA)
    t_avg = jnp.kron(eye(bb), jnp.tile(eye(C) / A, (A, 1)))      # (Lx, bbC)
    cols_lx = jnp.concatenate([avg_c, t_avg], axis=1)

    # stacked h/w row bias (column) -------------------------------------------
    bhw = jnp.concatenate([jnp.tile(p['bh'], A),
                           jnp.repeat(p['bw'], A)]).reshape(2 * R, 1)

    # reweight pack (branch-major fc2: output lane = branch*bbC + b*C + c) ----
    W1 = max(128, 3 * bbC, bbC4)
    wr1t = jnp.kron(eye(bb), p['Wr1'].T)                         # (bbC, bbC4)
    wr2p = jnp.concatenate([p['Wr2'][0::3], p['Wr2'][1::3], p['Wr2'][2::3]], 0)
    wr2t_1 = wr2p.T                                              # (C4, 3C)
    wr2t = jnp.concatenate(
        [jnp.kron(eye(bb), wr2t_1[:, i * C:(i + 1) * C]) for i in range(3)],
        axis=1)                                                  # (bbC4, 3bbC)
    br2p_1 = jnp.concatenate([p['br2'][0::3], p['br2'][1::3], p['br2'][2::3]])
    br1 = jnp.tile(p['br1'], bb).reshape(1, bbC4)
    br2 = jnp.concatenate([jnp.tile(br2p_1[i * C:(i + 1) * C], bb)
                           for i in range(3)]).reshape(1, 3 * bbC)
    rw_pack = jnp.concatenate([padw(wr1t, W1), padw(wr2t, W1),
                               padw(br1, W1), padw(br2, W1)], axis=0)

    # output-side pack (width Lo = bb*A*out_dim, lane-dense) ------------------
    W2 = max(Lo, L4)
    exp_o = jnp.kron(eye(bbA), ones(1, Co))                      # (bbA, Lo)
    bpu = jnp.tile(p['bproj'] + p['bup'], bbA).reshape(1, Lo)
    bc1 = jnp.tile(p['bc1'], bbA).reshape(1, L4)
    bc2 = jnp.tile(p['bc2'], bbA).reshape(1, Lo)
    ga_row = jnp.tile(p['g_after'], bbA).reshape(1, Lo)
    ba_row = jnp.tile(p['b_after'], bbA).reshape(1, Lo)
    rows_lo = jnp.concatenate([padw(exp_o, W2), padw(bpu, W2), padw(bc1, W2),
                               padw(bc2, W2), padw(ga_row, W2), padw(ba_row, W2)],
                              axis=0)

    avg_o = jnp.kron(eye(bbA), ones(Co, 1) / Co)                 # (Lo, bbA)

    return dict(khw=khw, bhw=bhw, kd=kd, k_pu=k_pu, kc1=kc1, kc2=kc2,
                rows_lx=rows_lx, cols_lx=cols_lx, rw_pack=rw_pack,
                rows_lo=rows_lo, avg_o=avg_o)


# ----------------------------------------------------------------------------
# JAX glue: upsample / pad / concat / layout + pallas_call wrapper
# ----------------------------------------------------------------------------
def _upsample_trilinear_2x(x):
    """nn.Upsample(scale_factor=2, mode='trilinear', align_corners=True),
    expressed as three small dense interpolation matmuls (no gathers)."""
    def interp_matrix(n_in):
        n_out = 2 * n_in
        m = np.zeros((n_out, n_in), np.float32)
        if n_in == 1:
            m[:, 0] = 1.0
            return jnp.asarray(m)
        pos = np.arange(n_out, dtype=np.float64) * (n_in - 1) / (n_out - 1)
        lo = np.floor(pos).astype(np.int64)
        hi = np.minimum(lo + 1, n_in - 1)
        frac = (pos - lo).astype(np.float32)
        m[np.arange(n_out), lo] += 1.0 - frac
        m[np.arange(n_out), hi] += frac
        return jnp.asarray(m)

    _, _, H, W, D = x.shape
    mh, mw, md = interp_matrix(H), interp_matrix(W), interp_matrix(D)
    y = jnp.einsum('ph,bchwd->bcpwd', mh, x)
    y = jnp.einsum('qw,bcpwd->bcpqd', mw, y)
    y = jnp.einsum('rd,bcpqd->bcpqr', md, y)
    return y


def pc_mlp_pallas(x_bchwd, ops, *, hwd, batch_block):
    """Pc_mlp.forward on a channels-first (B, C, H, W, D) tensor."""
    B, C, A1, A2, A3 = x_bchwd.shape
    A, bb = hwd, batch_block
    assert A1 == A and A2 == A and A3 == A, "CCS requires H == W == D == hwd"
    assert B % bb == 0
    nblk = B // bb
    R = A * A
    Lx = bb * A * C
    Lo = ops['k_pu'].shape[1] // 2
    Co = Lo // (bb * A)
    C4 = ops['kc1'].shape[1] // (bb * A)

    # lane-dense slab: rows=(a1,a2), lanes=(b_in_block,a3,c); kept f32 so
    # layer_norm_before sees unrounded activations (input DMA is tiny).
    xs = x_bchwd.reshape(nblk, bb, C, A, A, A)
    xs = jnp.transpose(xs, (0, 3, 4, 1, 5, 2)).reshape(nblk, R, Lx)

    op_list = [ops[k] for k in ('khw', 'bhw', 'kd', 'k_pu', 'kc1', 'kc2',
                                'rows_lx', 'cols_lx', 'rw_pack', 'rows_lo',
                                'avg_o')]
    in_specs = [pl.BlockSpec((1, R, Lx), lambda i: (i, 0, 0))]
    for op in op_list:
        # grid-invariant weights / packs (constant index map)
        in_specs.append(pl.BlockSpec(op.shape, lambda i: (0, 0)))

    kernel = functools.partial(_pc_mlp_kernel, A=A, C=C, C4=C4, Co=Co, bb=bb)
    out = pl.pallas_call(
        kernel,
        out_shape=jax.ShapeDtypeStruct((nblk, R, Lo), jnp.float32),
        grid=(nblk,),
        in_specs=in_specs,
        out_specs=pl.BlockSpec((1, R, Lo), lambda i: (i, 0, 0)),
        compiler_params=pltpu.CompilerParams(
            dimension_semantics=("parallel",),
            vmem_limit_bytes=8 * 1024 * 1024),
    )(xs, *op_list)

    # (nblk, R, bb*A3*Cout) -> (B, Cout, H, W, D)   (cheap XLA layout glue)
    out = out.reshape(nblk, A, A, bb, A, Co)
    out = jnp.transpose(out, (0, 3, 5, 1, 2, 4)).reshape(B, Co, A, A, A)
    return out


def pc_mlp_up_forward(x1, x2, ops, *, hwd, batch_block):
    """Pc_mlp_up.forward(x1, x2) with trilinear=True."""
    x1u = _upsample_trilinear_2x(x1)
    diffY = x2.shape[2] - x1u.shape[2]
    diffX = x2.shape[3] - x1u.shape[3]
    # F.pad(x1, [dX//2, dX-dX//2, dY//2, dY-dY//2]) pads the LAST two dims
    # (faithful to the original, likely 2-D-copy-pasted, code).
    x1p = jnp.pad(x1u, ((0, 0), (0, 0), (0, 0),
                        (diffY // 2, diffY - diffY // 2),
                        (diffX // 2, diffX - diffX // 2)))
    x = jnp.concatenate([x2, x1p], axis=1)               # (B, C, H, W, D)
    return pc_mlp_pallas(x, ops, hwd=hwd, batch_block=batch_block)


if __name__ == "__main__":
    B = 2
    C1, C2 = 8, 8
    hwd = 8                          # spatial size after upsample/concat
    in_channels = C1 + C2            # dim = 16 (segment_dim = 2)
    out_channels = 8
    batch_block = B                  # fold the whole batch into one grid step
    # TODO(synk): on v7x use batch_block = B // 2 for a 2-wide parallel grid.

    key = jax.random.PRNGKey(0)
    k1, k2, kp = jax.random.split(key, 3)
    x1 = jax.random.normal(k1, (B, C1, hwd // 2, hwd // 2, hwd // 2), jnp.float32)
    x2 = jax.random.normal(k2, (B, C2, hwd, hwd, hwd), jnp.float32)
    params = init_params(kp, hwd, in_channels, out_channels)
    ops = prepare_pc_mlp_operands(params, hwd, batch_block)   # once, outside jit

    fwd = jax.jit(functools.partial(pc_mlp_up_forward,
                                    hwd=hwd, batch_block=batch_block))
    out = fwd(x1, x2, ops)
    out = jax.block_until_ready(out)
    assert out.shape == (B, out_channels, hwd, hwd, hwd)
    assert bool(jnp.all(jnp.isfinite(out)))
    print("KERNEL_OK")
</pallas_src>

<mosaic_0001>
module attributes {stable_mosaic.version = 11 : i64} {
  func.func @_pc_mlp_kernel(%arg0: i32, %arg1: memref<1x64x256xf32, #tpu.memory_space<vmem>>, %arg2: memref<128x64xbf16, #tpu.memory_space<vmem>>, %arg3: memref<128x1xf32, #tpu.memory_space<vmem>>, %arg4: memref<256x256xbf16, #tpu.memory_space<vmem>>, %arg5: memref<256x256xbf16, #tpu.memory_space<vmem>>, %arg6: memref<128x64xbf16, #tpu.memory_space<vmem>>, %arg7: memref<64x128xbf16, #tpu.memory_space<vmem>>, %arg8: memref<51x256xf32, #tpu.memory_space<vmem>>, %arg9: memref<256x48xf32, #tpu.memory_space<vmem>>, %arg10: memref<42x128xf32, #tpu.memory_space<vmem>>, %arg11: memref<21x128xf32, #tpu.memory_space<vmem>>, %arg12: memref<128x16xf32, #tpu.memory_space<vmem>>, %arg13: memref<1x64x128xf32, #tpu.memory_space<vmem>>) attributes {dimension_semantics = [#tpu.dimension_semantics<parallel>], iteration_bounds = array<i64: 1>, scalar_prefetch = 0 : i64, scratch_operands = 0 : i64, tpu.core_type = #tpu.core_type<tc>, window_params = [{transform_indices = @transform_0, window_bounds = array<i64: 1, 64, 256>}, {pipeline_mode = #tpu.pipeline_mode<synchronous>, transform_indices = @transform_1, window_bounds = array<i64: 128, 64>}, {pipeline_mode = #tpu.pipeline_mode<synchronous>, transform_indices = @transform_2, window_bounds = array<i64: 128, 1>}, {pipeline_mode = #tpu.pipeline_mode<synchronous>, transform_indices = @transform_3, window_bounds = array<i64: 256, 256>}, {pipeline_mode = #tpu.pipeline_mode<synchronous>, transform_indices = @transform_4, window_bounds = array<i64: 256, 256>}, {pipeline_mode = #tpu.pipeline_mode<synchronous>, transform_indices = @transform_5, window_bounds = array<i64: 128, 64>}, {pipeline_mode = #tpu.pipeline_mode<synchronous>, transform_indices = @transform_6, window_bounds = array<i64: 64, 128>}, {pipeline_mode = #tpu.pipeline_mode<synchronous>, transform_indices = @transform_7, window_bounds = array<i64: 51, 256>}, {pipeline_mode = #tpu.pipeline_mode<synchronous>, transform_indices = @transform_8, window_bounds = array<i64: 256, 48>}, {pipeline_mode = #tpu.pipeline_mode<synchronous>, transform_indices = @transform_9, window_bounds = array<i64: 42, 128>}, {pipeline_mode = #tpu.pipeline_mode<synchronous>, transform_indices = @transform_10, window_bounds = array<i64: 21, 128>}, {pipeline_mode = #tpu.pipeline_mode<synchronous>, transform_indices = @transform_11, window_bounds = array<i64: 128, 16>}, {transform_indices = @transform_12, window_bounds = array<i64: 1, 64, 128>}]} {
    %c0 = arith.constant 0 : index
    %c0_0 = arith.constant 0 : index
    %c0_1 = arith.constant 0 : index
    %0 = vector.load %arg1[%c0, %c0_0, %c0_1] : memref<1x64x256xf32, #tpu.memory_space<vmem>>, vector<1x64x256xf32>
    %1 = vector.shape_cast %0 : vector<1x64x256xf32> to vector<64x256xf32>
    %c0_2 = arith.constant 0 : index
    %c0_3 = arith.constant 0 : index
    %2 = vector.load %arg8[%c0_2, %c0_3] : memref<51x256xf32, #tpu.memory_space<vmem>>, vector<51x256xf32>
    %3 = vector.extract_strided_slice %2 {offsets = [0, 0], sizes = [16, 256], strides = [1, 1]} : vector<51x256xf32> to vector<16x256xf32>
    %4 = vector.extract_strided_slice %2 {offsets = [16, 0], sizes = [32, 256], strides = [1, 1]} : vector<51x256xf32> to vector<32x256xf32>
    %5 = vector.extract_strided_slice %2 {offsets = [48, 0], sizes = [1, 256], strides = [1, 1]} : vector<51x256xf32> to vector<1x256xf32>
    %6 = vector.extract_strided_slice %2 {offsets = [49, 0], sizes = [1, 256], strides = [1, 1]} : vector<51x256xf32> to vector<1x256xf32>
    %7 = vector.extract_strided_slice %2 {offsets = [50, 0], sizes = [1, 256], strides = [1, 1]} : vector<51x256xf32> to vector<1x256xf32>
    %c0_4 = arith.constant 0 : index
    %c0_5 = arith.constant 0 : index
    %8 = vector.load %arg9[%c0_4, %c0_5] : memref<256x48xf32, #tpu.memory_space<vmem>>, vector<256x48xf32>
    %9 = vector.extract_strided_slice %8 {offsets = [0, 0], sizes = [256, 16], strides = [1, 1]} : vector<256x48xf32> to vector<256x16xf32>
    %10 = vector.extract_strided_slice %8 {offsets = [0, 16], sizes = [256, 32], strides = [1, 1]} : vector<256x48xf32> to vector<256x32xf32>
    %cst = arith.constant dense<0.000000e+00> : vector<64x16xf32>
    %11 = tpu.matmul %1, %9, %cst {dimension_numbers = #tpu.dot_dimension_numbers<[1], [0], [0], [1], [0, 0, 1, 1], [], []>} : vector<64x256xf32>, vector<256x16xf32>, vector<64x16xf32> -> vector<64x16xf32>
    %cst_6 = arith.constant dense<0.000000e+00> : vector<64x256xf32>
    %12 = tpu.matmul %11, %3, %cst_6 {dimension_numbers = #tpu.dot_dimension_numbers<[1], [0], [0], [1], [0, 0, 1, 1], [], []>} : vector<64x16xf32>, vector<16x256xf32>, vector<64x256xf32> -> vector<64x256xf32>
    %13 = arith.subf %1, %12 : vector<64x256xf32>
    %14 = arith.mulf %13, %13 : vector<64x256xf32>
    %cst_7 = arith.constant dense<0.000000e+00> : vector<64x16xf32>
    %15 = tpu.matmul %14, %9, %cst_7 {dimension_numbers = #tpu.dot_dimension_numbers<[1], [0], [0], [1], [0, 0, 1, 1], [], []>} : vector<64x256xf32>, vector<256x16xf32>, vector<64x16xf32> -> vector<64x16xf32>
    %cst_8 = arith.constant 9.99999974E-6 : f32
    %16 = vector.broadcast %cst_8 : f32 to vector<64x16xf32>
    %17 = arith.addf %15, %16 : vector<64x16xf32>
    %18 = math.rsqrt %17 : vector<64x16xf32>
    %cst_9 = arith.constant dense<0.000000e+00> : vector<64x256xf32>
    %19 = tpu.matmul %18, %3, %cst_9 {dimension_numbers = #tpu.dot_dimension_numbers<[1], [0], [0], [1], [0, 0, 1, 1], [], []>} : vector<64x16xf32>, vector<16x256xf32>, vector<64x256xf32> -> vector<64x256xf32>
    %20 = arith.mulf %13, %19 : vector<64x256xf32>
    %21 = vector.broadcast %5 : vector<1x256xf32> to vector<64x256xf32>
    %22 = arith.mulf %20, %21 : vector<64x256xf32>
    %23 = vector.broadcast %6 : vector<1x256xf32> to vector<64x256xf32>
    %24 = arith.addf %22, %23 : vector<64x256xf32>
    %25 = arith.truncf %24 : vector<64x256xf32> to vector<64x256xbf16>
    %c0_10 = arith.constant 0 : index
    %c128 = arith.constant 128 : index
    %26 = vector.load %arg5[%c0_10, %c128] : memref<256x256xbf16, #tpu.memory_space<vmem>>, vector<256x128xbf16>
    %cst_11 = arith.constant dense<0.000000e+00> : vector<64x128xf32>
    %27 = tpu.matmul %25, %26, %cst_11 {dimension_numbers = #tpu.dot_dimension_numbers<[1], [0], [0], [1], [0, 0, 1, 1], [], []>} : vector<64x256xbf16>, vector<256x128xbf16>, vector<64x128xf32> -> vector<64x128xf32>
    %c0_12 = arith.constant 0 : index
    %c0_13 = arith.constant 0 : index
    %28 = vector.load %arg2[%c0_12, %c0_13] : memref<128x64xbf16, #tpu.memory_space<vmem>>, vector<128x64xbf16>
    %cst_14 = arith.constant dense<0.000000e+00> : vector<128x256xf32>
    %29 = tpu.matmul %28, %25, %cst_14 {dimension_numbers = #tpu.dot_dimension_numbers<[1], [0], [0], [1], [0, 0, 1, 1], [], []>} : vector<128x64xbf16>, vector<64x256xbf16>, vector<128x256xf32> -> vector<128x256xf32>
    %c0_15 = arith.constant 0 : index
    %c0_16 = arith.constant 0 : index
    %30 = vector.load %arg3[%c0_15, %c0_16] : memref<128x1xf32, #tpu.memory_space<vmem>>, vector<128x1xf32>
    %31 = vector.broadcast %30 : vector<128x1xf32> to vector<128x256xf32>
    %32 = arith.addf %29, %31 : vector<128x256xf32>
    %33 = vector.extract_strided_slice %32 {offsets = [0, 0], sizes = [64, 256], strides = [1, 1]} : vector<128x256xf32> to vector<64x256xf32>
    %34 = vector.extract_strided_slice %32 {offsets = [64, 0], sizes = [64, 256], strides = [1, 1]} : vector<128x256xf32> to vector<64x256xf32>
    %c0_17 = arith.constant 0 : index
    %c0_18 = arith.constant 0 : index
    %35 = vector.load %arg4[%c0_17, %c0_18] : memref<256x256xbf16, #tpu.memory_space<vmem>>, vector<256x256xbf16>
    %cst_19 = arith.constant dense<0.000000e+00> : vector<64x256xf32>
    %36 = tpu.matmul %25, %35, %cst_19 {dimension_numbers = #tpu.dot_dimension_numbers<[1], [0], [0], [1], [0, 0, 1, 1], [], []>} : vector<64x256xbf16>, vector<256x256xbf16>, vector<64x256xf32> -> vector<64x256xf32>
    %37 = vector.broadcast %7 : vector<1x256xf32> to vector<64x256xf32>
    %38 = arith.addf %36, %37 : vector<64x256xf32>
    %c0_20 = arith.constant 0 : index
    %c0_21 = arith.constant 0 : index
    %39 = vector.load %arg10[%c0_20, %c0_21] : memref<42x128xf32, #tpu.memory_space<vmem>>, vector<42x128xf32>
    %40 = vector.extract_strided_slice %39 {offsets = [0, 0], sizes = [32, 8], strides = [1, 1]} : vector<42x128xf32> to vector<32x8xf32>
    %41 = vector.extract_strided_slice %39 {offsets = [32, 0], sizes = [8, 96], strides = [1, 1]} : vector<42x128xf32> to vector<8x96xf32>
    %42 = vector.extract_strided_slice %39 {offsets = [40, 0], sizes = [1, 8], strides = [1, 1]} : vector<42x128xf32> to vector<1x8xf32>
    %43 = vector.extract_strided_slice %39 {offsets = [41, 0], sizes = [1, 96], strides = [1, 1]} : vector<42x128xf32> to vector<1x96xf32>
    %44 = arith.addf %33, %34 : vector<64x256xf32>
    %45 = arith.addf %44, %38 : vector<64x256xf32>
    %cst_22 = arith.constant dense<0.000000e+00> : vector<256xf32>
    %46 = vector.multi_reduction <add>, %45, %cst_22 [0] : vector<64x256xf32> to vector<256xf32>
    %47 = vector.shape_cast %46 : vector<256xf32> to vector<1x256xf32>
    %cst_23 = arith.constant 6.400000e+01 : f32
    %48 = vector.broadcast %cst_23 : f32 to vector<1x256xf32>
    %49 = arith.divf %47, %48 : vector<1x256xf32>
    %cst_24 = arith.constant dense<0.000000e+00> : vector<1x32xf32>
    %50 = tpu.matmul %49, %10, %cst_24 {dimension_numbers = #tpu.dot_dimension_numbers<[1], [0], [0], [1], [0, 0, 1, 1], [], []>} : vector<1x256xf32>, vector<256x32xf32>, vector<1x32xf32> -> vector<1x32xf32>
    %cst_25 = arith.constant dense<0.000000e+00> : vector<1x8xf32>
    %51 = tpu.matmul %50, %40, %cst_25 {dimension_numbers = #tpu.dot_dimension_numbers<[1], [0], [0], [1], [0, 0, 1, 1], [], []>} : vector<1x32xf32>, vector<32x8xf32>, vector<1x8xf32> -> vector<1x8xf32>
    %52 = arith.addf %51, %42 : vector<1x8xf32>
    %cst_26 = arith.constant 5.000000e-01 : f32
    %53 = vector.broadcast %cst_26 : f32 to vector<1x8xf32>
    %54 = arith.mulf %53, %52 : vector<1x8xf32>
    %cst_27 = arith.constant 4.471500e-02 : f32
    %55 = vector.broadcast %cst_27 : f32 to vector<1x8xf32>
    %56 = arith.mulf %55, %52 : vector<1x8xf32>
    %57 = arith.mulf %56, %52 : vector<1x8xf32>
    %58 = arith.mulf %57, %52 : vector<1x8xf32>
    %59 = arith.addf %52, %58 : vector<1x8xf32>
    %cst_28 = arith.constant 0.797884583 : f32
    %60 = vector.broadcast %cst_28 : f32 to vector<1x8xf32>
    %61 = arith.mulf %60, %59 : vector<1x8xf32>
    %62 = math.tanh %61 : vector<1x8xf32>
    %cst_29 = arith.constant 1.000000e+00 : f32
    %63 = vector.broadcast %cst_29 : f32 to vector<1x8xf32>
    %64 = arith.addf %63, %62 : vector<1x8xf32>
    %65 = arith.mulf %54, %64 : vector<1x8xf32>
    %cst_30 = arith.constant dense<0.000000e+00> : vector<1x96xf32>
    %66 = tpu.matmul %65, %41, %cst_30 {dimension_numbers = #tpu.dot_dimension_numbers<[1], [0], [0], [1], [0, 0, 1, 1], [], []>} : vector<1x8xf32>, vector<8x96xf32>, vector<1x96xf32> -> vector<1x96xf32>
    %67 = arith.addf %66, %43 : vector<1x96xf32>
    %68 = vector.extract_strided_slice %67 {offsets = [0, 0], sizes = [1, 32], strides = [1, 1]} : vector<1x96xf32> to vector<1x32xf32>
    %69 = vector.extract_strided_slice %67 {offsets = [0, 32], sizes = [1, 32], strides = [1, 1]} : vector<1x96xf32> to vector<1x32xf32>
    %70 = vector.extract_strided_slice %67 {offsets = [0, 64], sizes = [1, 32], strides = [1, 1]} : vector<1x96xf32> to vector<1x32xf32>
    %71 = arith.maximumf %68, %69 : vector<1x32xf32>
    %72 = arith.maximumf %71, %70 : vector<1x32xf32>
    %73 = arith.subf %68, %72 : vector<1x32xf32>
    %74 = math.exp %73 : vector<1x32xf32>
    %75 = arith.subf %69, %72 : vector<1x32xf32>
    %76 = math.exp %75 : vector<1x32xf32>
    %77 = arith.subf %70, %72 : vector<1x32xf32>
    %78 = math.exp %77 : vector<1x32xf32>
    %79 = arith.addf %74, %76 : vector<1x32xf32>
    %80 = arith.addf %79, %78 : vector<1x32xf32>
    %cst_31 = arith.constant 1.000000e+00 : f32
    %81 = vector.broadcast %cst_31 : f32 to vector<1x32xf32>
    %82 = arith.divf %81, %80 : vector<1x32xf32>
    %83 = arith.mulf %74, %82 : vector<1x32xf32>
    %84 = arith.mulf %76, %82 : vector<1x32xf32>
    %85 = arith.mulf %78, %82 : vector<1x32xf32>
    %86 = tpu.concatenate %83, %84, %85 in 0 : vector<1x32xf32>, vector<1x32xf32>, vector<1x32xf32> -> vector<3x32xf32>
    %cst_32 = arith.constant dense<0.000000e+00> : vector<3x256xf32>
    %87 = tpu.matmul %86, %4, %cst_32 {dimension_numbers = #tpu.dot_dimension_numbers<[1], [0], [0], [1], [0, 0, 1, 1], [], []>} : vector<3x32xf32>, vector<32x256xf32>, vector<3x256xf32> -> vector<3x256xf32>
    %88 = vector.extract_strided_slice %87 {offsets = [0, 0], sizes = [1, 256], strides = [1, 1]} : vector<3x256xf32> to vector<1x256xf32>
    %89 = vector.broadcast %88 : vector<1x256xf32> to vector<64x256xf32>
    %90 = arith.mulf %33, %89 : vector<64x256xf32>
    %91 = vector.extract_strided_slice %87 {offsets = [1, 0], sizes = [1, 256], strides = [1, 1]} : vector<3x256xf32> to vector<1x256xf32>
    %92 = vector.broadcast %91 : vector<1x256xf32> to vector<64x256xf32>
    %93 = arith.mulf %34, %92 : vector<64x256xf32>
    %94 = arith.addf %90, %93 : vector<64x256xf32>
    %95 = vector.extract_strided_slice %87 {offsets = [2, 0], sizes = [1, 256], strides = [1, 1]} : vector<3x256xf32> to vector<1x256xf32>
    %96 = vector.broadcast %95 : vector<1x256xf32> to vector<64x256xf32>
    %97 = arith.mulf %38, %96 : vector<64x256xf32>
    %98 = arith.addf %94, %97 : vector<64x256xf32>
    %c0_33 = arith.constant 0 : index
    %c0_34 = arith.constant 0 : index
    %99 = vector.load %arg11[%c0_33, %c0_34] : memref<21x128xf32, #tpu.memory_space<vmem>>, vector<21x128xf32>
    %100 = vector.extract_strided_slice %99 {offsets = [0, 0], sizes = [16, 128], strides = [1, 1]} : vector<21x128xf32> to vector<16x128xf32>
    %101 = vector.extract_strided_slice %99 {offsets = [16, 0], sizes = [1, 128], strides = [1, 1]} : vector<21x128xf32> to vector<1x128xf32>
    %102 = vector.extract_strided_slice %99 {offsets = [17, 0], sizes = [1, 64], strides = [1, 1]} : vector<21x128xf32> to vector<1x64xf32>
    %103 = vector.extract_strided_slice %99 {offsets = [18, 0], sizes = [1, 128], strides = [1, 1]} : vector<21x128xf32> to vector<1x128xf32>
    %104 = vector.extract_strided_slice %99 {offsets = [19, 0], sizes = [1, 128], strides = [1, 1]} : vector<21x128xf32> to vector<1x128xf32>
    %105 = vector.extract_strided_slice %99 {offsets = [20, 0], sizes = [1, 128], strides = [1, 1]} : vector<21x128xf32> to vector<1x128xf32>
    %106 = arith.truncf %98 : vector<64x256xf32> to vector<64x256xbf16>
    %c0_35 = arith.constant 0 : index
    %c0_36 = arith.constant 0 : index
    %107 = vector.load %arg5[%c0_35, %c0_36] : memref<256x256xbf16, #tpu.memory_space<vmem>>, vector<256x128xbf16>
    %cst_37 = arith.constant dense<0.000000e+00> : vector<64x128xf32>
    %108 = tpu.matmul %106, %107, %cst_37 {dimension_numbers = #tpu.dot_dimension_numbers<[1], [0], [0], [1], [0, 0, 1, 1], [], []>} : vector<64x256xbf16>, vector<256x128xbf16>, vector<64x128xf32> -> vector<64x128xf32>
    %109 = arith.addf %108, %27 : vector<64x128xf32>
    %110 = vector.broadcast %101 : vector<1x128xf32> to vector<64x128xf32>
    %111 = arith.addf %109, %110 : vector<64x128xf32>
    %112 = arith.truncf %111 : vector<64x128xf32> to vector<64x128xbf16>
    %c0_38 = arith.constant 0 : index
    %c0_39 = arith.constant 0 : index
    %113 = vector.load %arg6[%c0_38, %c0_39] : memref<128x64xbf16, #tpu.memory_space<vmem>>, vector<128x64xbf16>
    %cst_40 = arith.constant dense<0.000000e+00> : vector<64x64xf32>
    %114 = tpu.matmul %112, %113, %cst_40 {dimension_numbers = #tpu.dot_dimension_numbers<[1], [0], [0], [1], [0, 0, 1, 1], [], []>} : vector<64x128xbf16>, vector<128x64xbf16>, vector<64x64xf32> -> vector<64x64xf32>
    %115 = vector.broadcast %102 : vector<1x64xf32> to vector<64x64xf32>
    %116 = arith.addf %114, %115 : vector<64x64xf32>
    %cst_41 = arith.constant 5.000000e-01 : f32
    %117 = vector.broadcast %cst_41 : f32 to vector<64x64xf32>
    %118 = arith.mulf %117, %116 : vector<64x64xf32>
    %cst_42 = arith.constant 4.471500e-02 : f32
    %119 = vector.broadcast %cst_42 : f32 to vector<64x64xf32>
    %120 = arith.mulf %119, %116 : vector<64x64xf32>
    %121 = arith.mulf %120, %116 : vector<64x64xf32>
    %122 = arith.mulf %121, %116 : vector<64x64xf32>
    %123 = arith.addf %116, %122 : vector<64x64xf32>
    %cst_43 = arith.constant 0.797884583 : f32
    %124 = vector.broadcast %cst_43 : f32 to vector<64x64xf32>
    %125 = arith.mulf %124, %123 : vector<64x64xf32>
    %126 = math.tanh %125 : vector<64x64xf32>
    %cst_44 = arith.constant 1.000000e+00 : f32
    %127 = vector.broadcast %cst_44 : f32 to vector<64x64xf32>
    %128 = arith.addf %127, %126 : vector<64x64xf32>
    %129 = arith.mulf %118, %128 : vector<64x64xf32>
    %130 = arith.truncf %129 : vector<64x64xf32> to vector<64x64xbf16>
    %c0_45 = arith.constant 0 : index
    %c0_46 = arith.constant 0 : index
    %131 = vector.load %arg7[%c0_45, %c0_46] : memref<64x128xbf16, #tpu.memory_space<vmem>>, vector<64x128xbf16>
    %cst_47 = arith.constant dense<0.000000e+00> : vector<64x128xf32>
    %132 = tpu.matmul %130, %131, %cst_47 {dimension_numbers = #tpu.dot_dimension_numbers<[1], [0], [0], [1], [0, 0, 1, 1], [], []>} : vector<64x64xbf16>, vector<64x128xbf16>, vector<64x128xf32> -> vector<64x128xf32>
    %133 = vector.broadcast %103 : vector<1x128xf32> to vector<64x128xf32>
    %134 = arith.addf %132, %133 : vector<64x128xf32>
    %135 = arith.addf %111, %134 : vector<64x128xf32>
    %c0_48 = arith.constant 0 : index
    %c0_49 = arith.constant 0 : index
    %136 = vector.load %arg12[%c0_48, %c0_49] : memref<128x16xf32, #tpu.memory_space<vmem>>, vector<128x16xf32>
    %cst_50 = arith.constant dense<0.000000e+00> : vector<64x16xf32>
    %137 = tpu.matmul %135, %136, %cst_50 {dimension_numbers = #tpu.dot_dimension_numbers<[1], [0], [0], [1], [0, 0, 1, 1], [], []>} : vector<64x128xf32>, vector<128x16xf32>, vector<64x16xf32> -> vector<64x16xf32>
    %cst_51 = arith.constant dense<0.000000e+00> : vector<64x128xf32>
    %138 = tpu.matmul %137, %100, %cst_51 {dimension_numbers = #tpu.dot_dimension_numbers<[1], [0], [0], [1], [0, 0, 1, 1], [], []>} : vector<64x16xf32>, vector<16x128xf32>, vector<64x128xf32> -> vector<64x128xf32>
    %139 = arith.subf %135, %138 : vector<64x128xf32>
    %140 = arith.mulf %139, %139 : vector<64x128xf32>
    %cst_52 = arith.constant dense<0.000000e+00> : vector<64x16xf32>
    %141 = tpu.matmul %140, %136, %cst_52 {dimension_numbers = #tpu.dot_dimension_numbers<[1], [0], [0], [1], [0, 0, 1, 1], [], []>} : vector<64x128xf32>, vector<128x16xf32>, vector<64x16xf32> -> vector<64x16xf32>
    %cst_53 = arith.constant 9.99999974E-6 : f32
    %142 = vector.broadcast %cst_53 : f32 to vector<64x16xf32>
    %143 = arith.addf %141, %142 : vector<64x16xf32>
    %144 = math.rsqrt %143 : vector<64x16xf32>
    %cst_54 = arith.constant dense<0.000000e+00> : vector<64x128xf32>
    %145 = tpu.matmul %144, %100, %cst_54 {dimension_numbers = #tpu.dot_dimension_numbers<[1], [0], [0], [1], [0, 0, 1, 1], [], []>} : vector<64x16xf32>, vector<16x128xf32>, vector<64x128xf32> -> vector<64x128xf32>
    %146 = arith.mulf %139, %145 : vector<64x128xf32>
    %147 = vector.broadcast %104 : vector<1x128xf32> to vector<64x128xf32>
    %148 = arith.mulf %146, %147 : vector<64x128xf32>
    %149 = vector.broadcast %105 : vector<1x128xf32> to vector<64x128xf32>
    %150 = arith.addf %148, %149 : vector<64x128xf32>
    %c0_55 = arith.constant 0 : index
    %c0_56 = arith.constant 0 : index
    %c0_57 = arith.constant 0 : index
    %151 = vector.load %arg13[%c0_55, %c0_56, %c0_57] : memref<1x64x128xf32, #tpu.memory_space<vmem>>, vector<1x64x128xf32>
    %152 = vector.shape_cast %151 : vector<1x64x128xf32> to vector<64x128xf32>
    %153 = vector.shape_cast %150 : vector<64x128xf32> to vector<1x64x128xf32>
    tpu.vector_store %arg13[%c0_55, %c0_56, %c0_57], %153 {strides = array<i32>} : memref<1x64x128xf32, #tpu.memory_space<vmem>>, vector<1x64x128xf32>,
    return
  }
  func.func @transform_0(%arg0: i32) -> (i32, i32, i32) {
    %c0_i32 = arith.constant 0 : i32
    %c0_i32_0 = arith.constant 0 : i32
    %c0_i32_1 = arith.constant 0 : i32
    return %arg0, %c0_i32, %c0_i32_0 : i32, i32, i32
  }
  func.func @transform_1(%arg0: i32) -> (i32, i32) {
    %c0_i32 = arith.constant 0 : i32
    %c0_i32_0 = arith.constant 0 : i32
    %c0_i32_1 = arith.constant 0 : i32
    return %c0_i32, %c0_i32_0 : i32, i32
  }
  func.func @transform_2(%arg0: i32) -> (i32, i32) {
    %c0_i32 = arith.constant 0 : i32
    %c0_i32_0 = arith.constant 0 : i32
    %c0_i32_1 = arith.constant 0 : i32
    return %c0_i32, %c0_i32_0 : i32, i32
  }
  func.func @transform_3(%arg0: i32) -> (i32, i32) {
    %c0_i32 = arith.constant 0 : i32
    %c0_i32_0 = arith.constant 0 : i32
    %c0_i32_1 = arith.constant 0 : i32
    return %c0_i32, %c0_i32_0 : i32, i32
  }
  func.func @transform_4(%arg0: i32) -> (i32, i32) {
    %c0_i32 = arith.constant 0 : i32
    %c0_i32_0 = arith.constant 0 : i32
    %c0_i32_1 = arith.constant 0 : i32
    return %c0_i32, %c0_i32_0 : i32, i32
  }
  func.func @transform_5(%arg0: i32) -> (i32, i32) {
    %c0_i32 = arith.constant 0 : i32
    %c0_i32_0 = arith.constant 0 : i32
    %c0_i32_1 = arith.constant 0 : i32
    return %c0_i32, %c0_i32_0 : i32, i32
  }
  func.func @transform_6(%arg0: i32) -> (i32, i32) {
    %c0_i32 = arith.constant 0 : i32
    %c0_i32_0 = arith.constant 0 : i32
    %c0_i32_1 = arith.constant 0 : i32
    return %c0_i32, %c0_i32_0 : i32, i32
  }
  func.func @transform_7(%arg0: i32) -> (i32, i32) {
    %c0_i32 = arith.constant 0 : i32
    %c0_i32_0 = arith.constant 0 : i32
    %c0_i32_1 = arith.constant 0 : i32
    return %c0_i32, %c0_i32_0 : i32, i32
  }
  func.func @transform_8(%arg0: i32) -> (i32, i32) {
    %c0_i32 = arith.constant 0 : i32
    %c0_i32_0 = arith.constant 0 : i32
    %c0_i32_1 = arith.constant 0 : i32
    return %c0_i32, %c0_i32_0 : i32, i32
  }
  func.func @transform_9(%arg0: i32) -> (i32, i32) {
    %c0_i32 = arith.constant 0 : i32
    %c0_i32_0 = arith.constant 0 : i32
    %c0_i32_1 = arith.constant 0 : i32
    return %c0_i32, %c0_i32_0 : i32, i32
  }
  func.func @transform_10(%arg0: i32) -> (i32, i32) {
    %c0_i32 = arith.constant 0 : i32
    %c0_i32_0 = arith.constant 0 : i32
    %c0_i32_1 = arith.constant 0 : i32
    return %c0_i32, %c0_i32_0 : i32, i32
  }
  func.func @transform_11(%arg0: i32) -> (i32, i32) {
    %c0_i32 = arith.constant 0 : i32
    %c0_i32_0 = arith.constant 0 : i32
    %c0_i32_1 = arith.constant 0 : i32
    return %c0_i32, %c0_i32_0 : i32, i32
  }
  func.func @transform_12(%arg0: i32) -> (i32, i32, i32) {
    %c0_i32 = arith.constant 0 : i32
    %c0_i32_0 = arith.constant 0 : i32
    %c0_i32_1 = arith.constant 0 : i32
    return %arg0, %c0_i32, %c0_i32_0 : i32, i32, i32
  }
}

</mosaic_0001>

<llo_original>
// kernel: pc_mlp_up_forward.1
$region0: #{pc_mlp_up_forward.1}
  #allocation0 [shape = 'u32[]', space=smem, size = 0x4, offset = 0x4, fixed_abs, tag = 'smem constant byte address 0x4 - core index']
  #allocation1 [shape = 'u32[144,128]{1,0:T(1,128)}', space=vmem, size = 0x12000, scoped, tag = 'internal scratch']
  %s0 = inlined_call_operand.vmem [shape: f32[1,64,256], index: 0, kind: input, shape index: {}]
  %s1 = inlined_call_operand.vmem [shape: bf16[128,64], index: 1, kind: input, shape index: {}]
  %s2 = inlined_call_operand.vmem [shape: f32[128,1], index: 2, kind: input, shape index: {}]
  %s3 = inlined_call_operand.vmem [shape: bf16[256,256], index: 3, kind: input, shape index: {}]
  %s4 = inlined_call_operand.vmem [shape: bf16[256,256], index: 4, kind: input, shape index: {}]
  %s5 = inlined_call_operand.vmem [shape: bf16[128,64], index: 5, kind: input, shape index: {}]
  %s6 = inlined_call_operand.vmem [shape: bf16[64,128], index: 6, kind: input, shape index: {}]
  %s7 = inlined_call_operand.vmem [shape: f32[51,256], index: 7, kind: input, shape index: {}]
  %s8 = inlined_call_operand.vmem [shape: f32[256,48], index: 8, kind: input, shape index: {}]
  %s9 = inlined_call_operand.vmem [shape: f32[42,128], index: 9, kind: input, shape index: {}]
  %s10 = inlined_call_operand.vmem [shape: f32[21,128], index: 10, kind: input, shape index: {}]
  %s11 = inlined_call_operand.vmem [shape: f32[128,16], index: 11, kind: input, shape index: {}]
  %s12 = inlined_call_operand.vmem [shape: f32[1,64,128], index: 12, kind: output, shape index: {}]
  %s13 = sld [smem:[#allocation0]]
  $region58: #{pc_mlp_up_forward.1} parent=0
    _
  %s15 = ssub.s32 1, %s13
  %s16 = scalar_select 0, %s15, %s13
  // Predicated region
  $region2: #{pc_mlp_up_forward.1} parent=0 // pred_check
    _
  $region3: #{pc_mlp_up_forward.1} parent=0 // pred_check_branch
    %18 = sbr.rel (0) target = $region5
  $region4: #{pc_mlp_up_forward.1} parent=0 // pred_region
    _
  $region5: #{pc_mlp_up_forward.1} parent=0 // pred_fallthru
    _
  // Predicated region
  $region6: #{pc_mlp_up_forward.1} parent=0 // pred_check
    _
  $region7: #{pc_mlp_up_forward.1} parent=0 // pred_check_branch
    %20 = sbr.rel (0) target = $region9
  $region8: #{pc_mlp_up_forward.1} parent=0 // pred_region
    _
  $region9: #{pc_mlp_up_forward.1} parent=0 // pred_fallthru
    _
  // Predicated region
  $region10: #{pc_mlp_up_forward.1} parent=0 // pred_check
    _
  $region11: #{pc_mlp_up_forward.1} parent=0 // pred_check_branch
    %22 = sbr.rel (0) target = $region13
  $region12: #{pc_mlp_up_forward.1} parent=0 // pred_region
    _
  $region13: #{pc_mlp_up_forward.1} parent=0 // pred_fallthru
    _
  // Predicated region
  $region14: #{pc_mlp_up_forward.1} parent=0 // pred_check
    _
  $region15: #{pc_mlp_up_forward.1} parent=0 // pred_check_branch
    %24 = sbr.rel (0) target = $region17
  $region16: #{pc_mlp_up_forward.1} parent=0 // pred_region
    _
  $region17: #{pc_mlp_up_forward.1} parent=0 // pred_fallthru
    _
  // Predicated region
  $region18: #{pc_mlp_up_forward.1} parent=0 // pred_check
    _
  $region19: #{pc_mlp_up_forward.1} parent=0 // pred_check_branch
    %26 = sbr.rel (0) target = $region21
  $region20: #{pc_mlp_up_forward.1} parent=0 // pred_region
    _
  $region21: #{pc_mlp_up_forward.1} parent=0 // pred_fallthru
    _
  // Predicated region
  $region22: #{pc_mlp_up_forward.1} parent=0 // pred_check
    _
  $region23: #{pc_mlp_up_forward.1} parent=0 // pred_check_branch
    %28 = sbr.rel (0) target = $region25
  $region24: #{pc_mlp_up_forward.1} parent=0 // pred_region
    _
  $region25: #{pc_mlp_up_forward.1} parent=0 // pred_fallthru
    _
  // Predicated region
  $region26: #{pc_mlp_up_forward.1} parent=0 // pred_check
    _
  $region27: #{pc_mlp_up_forward.1} parent=0 // pred_check_branch
    %30 = sbr.rel (0) target = $region29
  $region28: #{pc_mlp_up_forward.1} parent=0 // pred_region
    _
  $region29: #{pc_mlp_up_forward.1} parent=0 // pred_fallthru
    _
  // Predicated region
  $region30: #{pc_mlp_up_forward.1} parent=0 // pred_check
    _
  $region31: #{pc_mlp_up_forward.1} parent=0 // pred_check_branch
    %32 = sbr.rel (0) target = $region33
  $region32: #{pc_mlp_up_forward.1} parent=0 // pred_region
    _
  $region33: #{pc_mlp_up_forward.1} parent=0 // pred_fallthru
    _
  // Predicated region
  $region34: #{pc_mlp_up_forward.1} parent=0 // pred_check
    _
  $region35: #{pc_mlp_up_forward.1} parent=0 // pred_check_branch
    %34 = sbr.rel (0) target = $region37
  $region36: #{pc_mlp_up_forward.1} parent=0 // pred_region
    _
  $region37: #{pc_mlp_up_forward.1} parent=0 // pred_fallthru
    _
  // Predicated region
  $region38: #{pc_mlp_up_forward.1} parent=0 // pred_check
    _
  $region39: #{pc_mlp_up_forward.1} parent=0 // pred_check_branch
    %36 = sbr.rel (0) target = $region41
  $region40: #{pc_mlp_up_forward.1} parent=0 // pred_region
    _
  $region41: #{pc_mlp_up_forward.1} parent=0 // pred_fallthru
    _
  // Predicated region
  $region42: #{pc_mlp_up_forward.1} parent=0 // pred_check
    _
  $region43: #{pc_mlp_up_forward.1} parent=0 // pred_check_branch
    %38 = sbr.rel (0) target = $region45
  $region44: #{pc_mlp_up_forward.1} parent=0 // pred_region
    _
  $region45: #{pc_mlp_up_forward.1} parent=0 // pred_fallthru
    _
  // Predicated region
  $region46: #{pc_mlp_up_forward.1} parent=0 // pred_check
    _
  $region47: #{pc_mlp_up_forward.1} parent=0 // pred_check_branch
    %40 = sbr.rel (0) target = $region49
  $region48: #{pc_mlp_up_forward.1} parent=0 // pred_region
    _
  $region49: #{pc_mlp_up_forward.1} parent=0 // pred_fallthru
    _
  %v42 = vld [vmem:[%s0] sm:$0xff]
  %v43 = vld [vmem:[%s0 + $0x8] sm:$0xff]
  %v44 = vld [vmem:[%s0 + $0x10] sm:$0xff]
  %v45 = vld [vmem:[%s0 + $0x18] sm:$0xff]
  %v46 = vld [vmem:[%s0 + $0x20] sm:$0xff]
  %v47 = vld [vmem:[%s0 + $0x28] sm:$0xff]
  %v48 = vld [vmem:[%s0 + $0x30] sm:$0xff]
  %v49 = vld [vmem:[%s0 + $0x38] sm:$0xff]
  %v50 = vld [vmem:[%s0 + $0x40] sm:$0xff]
  %v51 = vld [vmem:[%s0 + $0x48] sm:$0xff]
  %v52 = vld [vmem:[%s0 + $0x50] sm:$0xff]
  %v53 = vld [vmem:[%s0 + $0x58] sm:$0xff]
  %v54 = vld [vmem:[%s0 + $0x60] sm:$0xff]
  %v55 = vld [vmem:[%s0 + $0x68] sm:$0xff]
  %v56 = vld [vmem:[%s0 + $0x70] sm:$0xff]
  %v57 = vld [vmem:[%s0 + $0x78] sm:$0xff]
  %v58 = vld [vmem:[%s7] sm:$0xff]
  %v59 = vld [vmem:[%s7 + $0x8] sm:$0xff]
  %v60 = vld [vmem:[%s7 + $0x10] sm:$0xff]
  %v61 = vld [vmem:[%s7 + $0x18] sm:$0xff]
  %v62 = vld [vmem:[%s7 + $0x20] sm:$0xff]
  %v63 = vld [vmem:[%s7 + $0x28] sm:$0xff]
  %v64 = vld [vmem:[%s7 + $0x30] sm:$0xff]
  %v65 = vld [vmem:[%s7 + $0x38] sm:$0xff]
  %v66 = vld [vmem:[%s7 + $0x40] sm:$0xff]
  %v67 = vld [vmem:[%s7 + $0x48] sm:$0xff]
  %v68 = vld [vmem:[%s7 + $0x50] sm:$0xff]
  %v69 = vld [vmem:[%s7 + $0x58] sm:$0xff]
  %v70 = vld [vmem:[%s7 + $0x60] sm:$0x7]
  %v71 = vld [vmem:[%s7 + $0x68] sm:$0x7]
  %v72 = vld [vmem:[%s8] sm:$0xff]
  %v73 = vld [vmem:[%s8 + $0x8] sm:$0xff]
  %v74 = vld [vmem:[%s8 + $0x10] sm:$0xff]
  %v75 = vld [vmem:[%s8 + $0x18] sm:$0xff]
  %v76 = vld [vmem:[%s8 + $0x20] sm:$0xff]
  %v77 = vld [vmem:[%s8 + $0x28] sm:$0xff]
  %v78 = vld [vmem:[%s8 + $0x30] sm:$0xff]
  %v79 = vld [vmem:[%s8 + $0x38] sm:$0xff]
  %v80 = vld [vmem:[%s8 + $0x40] sm:$0xff]
  %v81 = vld [vmem:[%s8 + $0x48] sm:$0xff]
  %v82 = vld [vmem:[%s8 + $0x50] sm:$0xff]
  %v83 = vld [vmem:[%s8 + $0x58] sm:$0xff]
  %v84 = vld [vmem:[%s8 + $0x60] sm:$0xff]
  %v85 = vld [vmem:[%s8 + $0x68] sm:$0xff]
  %v86 = vld [vmem:[%s8 + $0x70] sm:$0xff]
  %v87 = vld [vmem:[%s8 + $0x78] sm:$0xff]
  %v88 = vld [vmem:[%s8 + $0x80] sm:$0xff]
  %v89 = vld [vmem:[%s8 + $0x88] sm:$0xff]
  %v90 = vld [vmem:[%s8 + $0x90] sm:$0xff]
  %v91 = vld [vmem:[%s8 + $0x98] sm:$0xff]
  %v92 = vld [vmem:[%s8 + $0xa0] sm:$0xff]
  %v93 = vld [vmem:[%s8 + $0xa8] sm:$0xff]
  %v94 = vld [vmem:[%s8 + $0xb0] sm:$0xff]
  %v95 = vld [vmem:[%s8 + $0xb8] sm:$0xff]
  %v96 = vld [vmem:[%s8 + $0xc0] sm:$0xff]
  %v97 = vld [vmem:[%s8 + $0xc8] sm:$0xff]
  %v98 = vld [vmem:[%s8 + $0xd0] sm:$0xff]
  %v99 = vld [vmem:[%s8 + $0xd8] sm:$0xff]
  %v100 = vld [vmem:[%s8 + $0xe0] sm:$0xff]
  %v101 = vld [vmem:[%s8 + $0xe8] sm:$0xff]
  %v102 = vld [vmem:[%s8 + $0xf0] sm:$0xff]
  %v103 = vld [vmem:[%s8 + $0xf8] sm:$0xff]
  %104 = vmatprep.subr.mxu0 0.0
  %105 = vmatpush1.msra.mxu0 %v87
  %106 = vmatprep.subr.mxu0 0.0
  %107 = vmatpush1.msra.mxu0 %v86
  %108 = vmatprep.subr.mxu0 0.0
  %109 = vmatpush1.msra.mxu0 %v85
  %110 = vmatprep.subr.mxu0 0.0
  %111 = vmatpush1.msra.mxu0 %v84
  %112 = vmatprep.subr.mxu0 0.0
  %113 = vmatpush1.msra.mxu0 %v83
  %114 = vmatprep.subr.mxu0 0.0
  %115 = vmatpush1.msra.mxu0 %v82
  %116 = vmatprep.subr.mxu0 0.0
  %117 = vmatpush1.msra.mxu0 %v81
  %118 = vmatprep.subr.mxu0 0.0
  %119 = vmatpush1.msra.mxu0 %v80
  %120 = vmatprep.subr.mxu0 0.0
  %121 = vmatpush1.msra.mxu0 %v79
  %122 = vmatprep.subr.mxu0 0.0
  %123 = vmatpush1.msra.mxu0 %v78
  %124 = vmatprep.subr.mxu0 0.0
  %125 = vmatpush1.msra.mxu0 %v77
  %126 = vmatprep.subr.mxu0 0.0
  %127 = vmatpush1.msra.mxu0 %v76
  %128 = vmatprep.subr.mxu0 0.0
  %129 = vmatpush1.msra.mxu0 %v75
  %130 = vmatprep.subr.mxu0 0.0
  %131 = vmatpush1.msra.mxu0 %v74
  %132 = vmatprep.subr.mxu0 0.0
  %133 = vmatpush1.msra.mxu0 %v73
  %134 = vmatprep.subr.mxu0 0.0
  %135 = vmatpush1.msra.mxu0 %v72
  %136 = vmatprep.subr.mxu0 0.0
  %137 = vmatpush2.msra.mxu0 %v103
  %138 = vmatprep.subr.mxu0 0.0
  %139 = vmatpush2.msra.mxu0 %v102
  %140 = vmatprep.subr.mxu0 0.0
  %141 = vmatpush2.msra.mxu0 %v101
  %142 = vmatprep.subr.mxu0 0.0
  %143 = vmatpush2.msra.mxu0 %v100
  %144 = vmatprep.subr.mxu0 0.0
  %145 = vmatpush2.msra.mxu0 %v99
  %146 = vmatprep.subr.mxu0 0.0
  %147 = vmatpush2.msra.mxu0 %v98
  %148 = vmatprep.subr.mxu0 0.0
  %149 = vmatpush2.msra.mxu0 %v97
  %150 = vmatprep.subr.mxu0 0.0
  %151 = vmatpush2.msra.mxu0 %v96
  %152 = vmatprep.subr.mxu0 0.0
  %153 = vmatpush2.msra.mxu0 %v95
  %154 = vmatprep.subr.mxu0 0.0
  %155 = vmatpush2.msra.mxu0 %v94
  %156 = vmatprep.subr.mxu0 0.0
  %157 = vmatpush2.msra.mxu0 %v93
  %158 = vmatprep.subr.mxu0 0.0
  %159 = vmatpush2.msra.mxu0 %v92
  %160 = vmatprep.subr.mxu0 0.0
  %161 = vmatpush2.msra.mxu0 %v91
  %162 = vmatprep.subr.mxu0 0.0
  %163 = vmatpush2.msra.mxu0 %v90
  %164 = vmatprep.subr.mxu0 0.0
  %165 = vmatpush2.msra.mxu0 %v89
  %166 = vmatprep.subr.mxu0 0.0
  %167 = vmatpush2.msra.mxu0 %v88
  %168 = vmatprep.mubr.f32.mxu0 %v43
  %169 = vmatmul.mubr.f32.gmra.mxu0 %v42
  %v170 = vpop.f32.mrf.mxu0
  %v171 = vadd.f32 0.0, %v170
  %v172 = vpop.f32.mrf.mxu0
  %173 = vmatprep.mubr.f32.mxu0 %v45
  %174 = vmatmul.mubr.f32.gmra.mxu0 %v44
  %v175 = vpop.f32.mrf.mxu0
  %v176 = vadd.f32 0.0, %v175
  %v177 = vpop.f32.mrf.mxu0
  %178 = vmatprep.mubr.f32.mxu0 %v47
  %179 = vmatmul.mubr.f32.gmra.mxu0 %v46
  %v180 = vpop.f32.mrf.mxu0
  %v181 = vadd.f32 0.0, %v180
  %v182 = vpop.f32.mrf.mxu0
  %183 = vmatprep.mubr.f32.mxu0 %v49
  %184 = vmatmul.mubr.f32.gmra.mxu0 %v48
  %v185 = vpop.f32.mrf.mxu0
  %v186 = vadd.f32 0.0, %v185
  %v187 = vpop.f32.mrf.mxu0
  %188 = vmatprep.mubr.f32.mxu0 %v51
  %189 = vmatmul.mubr.f32.gmra.mxu0 %v50
  %v190 = vpop.f32.mrf.mxu0
  %v191 = vadd.f32 0.0, %v190
  %v192 = vpop.f32.mrf.mxu0
  %193 = vmatprep.mubr.f32.mxu0 %v53
  %194 = vmatmul.mubr.f32.gmra.mxu0 %v52
  %v195 = vpop.f32.mrf.mxu0
  %v196 = vadd.f32 0.0, %v195
  %v197 = vpop.f32.mrf.mxu0
  %198 = vmatprep.mubr.f32.mxu0 %v55
  %199 = vmatmul.mubr.f32.gmra.mxu0 %v54
  %v200 = vpop.f32.mrf.mxu0
  %v201 = vadd.f32 0.0, %v200
  %v202 = vpop.f32.mrf.mxu0
  %203 = vmatprep.mubr.f32.mxu0 %v57
  %204 = vmatmul.mubr.f32.gmra.mxu0 %v56
  %v205 = vpop.f32.mrf.mxu0
  %v206 = vadd.f32 0.0, %v205
  %v207 = vpop.f32.mrf.mxu0
  %208 = vdwg.mxu0
  %vm209 = vcmask 130048
  %v211 = vsel %vm209, %v171, 0
  %v214 = vsel %vm209, %v176, 0
  %v217 = vsel %vm209, %v181, 0
  %v220 = vsel %vm209, %v186, 0
  %v223 = vsel %vm209, %v191, 0
  %v226 = vsel %vm209, %v196, 0
  %v229 = vsel %vm209, %v201, 0
  %v232 = vsel %vm209, %v206, 0
  %234 = vmatprep.subr.mxu0 0.0
  %235 = vmatpush1.msra.mxu0 0.0
  %236 = vmatprep.subr.mxu0 0.0
  %237 = vmatpush1.msra.mxu0 0.0
  %238 = vmatprep.subr.mxu0 0.0
  %239 = vmatpush1.msra.mxu0 0.0
  %240 = vmatprep.subr.mxu0 0.0
  %241 = vmatpush1.msra.mxu0 0.0
  %242 = vmatprep.subr.mxu0 0.0
  %243 = vmatpush1.msra.mxu0 0.0
  %244 = vmatprep.subr.mxu0 0.0
  %245 = vmatpush1.msra.mxu0 0.0
  %246 = vmatprep.subr.mxu0 0.0
  %247 = vmatpush1.msra.mxu0 0.0
  %248 = vmatprep.subr.mxu0 0.0
  %249 = vmatpush1.msra.mxu0 0.0
  %250 = vmatprep.subr.mxu0 0.0
  %251 = vmatpush1.msra.mxu0 0.0
  %252 = vmatprep.subr.mxu0 0.0
  %253 = vmatpush1.msra.mxu0 0.0
  %254 = vmatprep.subr.mxu0 0.0
  %255 = vmatpush1.msra.mxu0 0.0
  %256 = vmatprep.subr.mxu0 0.0
  %257 = vmatpush1.msra.mxu0 0.0
  %258 = vmatprep.subr.mxu0 0.0
  %259 = vmatpush1.msra.mxu0 0.0
  %260 = vmatprep.subr.mxu0 0.0
  %261 = vmatpush1.msra.mxu0 0.0
  %262 = vmatprep.subr.mxu0 %v61
  %263 = vmatpush1.msra.mxu0 %v60
  %264 = vmatprep.subr.mxu0 %v59
  %265 = vmatpush1.msra.mxu0 %v58
  %266 = vmatprep.subr.mxu0 0.0
  %267 = vmatpush2.msra.mxu0 0.0
  %268 = vmatprep.subr.mxu0 0.0
  %269 = vmatpush2.msra.mxu0 0.0
  %270 = vmatprep.subr.mxu0 0.0
  %271 = vmatpush2.msra.mxu0 0.0
  %272 = vmatprep.subr.mxu0 0.0
  %273 = vmatpush2.msra.mxu0 0.0
  %274 = vmatprep.subr.mxu0 0.0
  %275 = vmatpush2.msra.mxu0 0.0
  %276 = vmatprep.subr.mxu0 0.0
  %277 = vmatpush2.msra.mxu0 0.0
  %278 = vmatprep.subr.mxu0 0.0
  %279 = vmatpush2.msra.mxu0 0.0
  %280 = vmatprep.subr.mxu0 0.0
  %281 = vmatpush2.msra.mxu0 0.0
  %282 = vmatprep.subr.mxu0 0.0
  %283 = vmatpush2.msra.mxu0 0.0
  %284 = vmatprep.subr.mxu0 0.0
  %285 = vmatpush2.msra.mxu0 0.0
  %286 = vmatprep.subr.mxu0 0.0
  %287 = vmatpush2.msra.mxu0 0.0
  %288 = vmatprep.subr.mxu0 0.0
  %289 = vmatpush2.msra.mxu0 0.0
  %290 = vmatprep.subr.mxu0 0.0
  %291 = vmatpush2.msra.mxu0 0.0
  %292 = vmatprep.subr.mxu0 0.0
  %293 = vmatpush2.msra.mxu0 0.0
  %294 = vmatprep.subr.mxu0 0.0
  %295 = vmatpush2.msra.mxu0 0.0
  %296 = vmatprep.subr.mxu0 0.0
  %297 = vmatpush2.msra.mxu0 0.0
  %298 = vmatprep.mubr.f32.mxu0 0.0
  %299 = vmatmul.mubr.f32.gmra.mxu0 %v211
  %v300 = vpop.f32.mrf.mxu0
  %v301 = vadd.f32 0.0, %v300
  %v302 = vpop.f32.mrf.mxu0
  %v303 = vadd.f32 0.0, %v302
  %304 = vmatprep.mubr.f32.mxu0 0.0
  %305 = vmatmul.mubr.f32.gmra.mxu0 %v214
  %v306 = vpop.f32.mrf.mxu0
  %v307 = vadd.f32 0.0, %v306
  %v308 = vpop.f32.mrf.mxu0
  %v309 = vadd.f32 0.0, %v308
  %310 = vmatprep.mubr.f32.mxu0 0.0
  %311 = vmatmul.mubr.f32.gmra.mxu0 %v217
  %v312 = vpop.f32.mrf.mxu0
  %v313 = vadd.f32 0.0, %v312
  %v314 = vpop.f32.mrf.mxu0
  %v315 = vadd.f32 0.0, %v314
  %316 = vmatprep.mubr.f32.mxu0 0.0
  %317 = vmatmul.mubr.f32.gmra.mxu0 %v220
  %v318 = vpop.f32.mrf.mxu0
  %v319 = vadd.f32 0.0, %v318
  %v320 = vpop.f32.mrf.mxu0
  %v321 = vadd.f32 0.0, %v320
  %322 = vmatprep.mubr.f32.mxu0 0.0
  %323 = vmatmul.mubr.f32.gmra.mxu0 %v223
  %v324 = vpop.f32.mrf.mxu0
  %v325 = vadd.f32 0.0, %v324
  %v326 = vpop.f32.mrf.mxu0
  %v327 = vadd.f32 0.0, %v326
  %328 = vmatprep.mubr.f32.mxu0 0.0
  %329 = vmatmul.mubr.f32.gmra.mxu0 %v226
  %v330 = vpop.f32.mrf.mxu0
  %v331 = vadd.f32 0.0, %v330
  %v332 = vpop.f32.mrf.mxu0
  %v333 = vadd.f32 0.0, %v332
  %334 = vmatprep.mubr.f32.mxu0 0.0
  %335 = vmatmul.mubr.f32.gmra.mxu0 %v229
  %v336 = vpop.f32.mrf.mxu0
  %v337 = vadd.f32 0.0, %v336
  %v338 = vpop.f32.mrf.mxu0
  %v339 = vadd.f32 0.0, %v338
  %340 = vmatprep.mubr.f32.mxu0 0.0
  %341 = vmatmul.mubr.f32.gmra.mxu0 %v232
  %v342 = vpop.f32.mrf.mxu0
  %v343 = vadd.f32 0.0, %v342
  %v344 = vpop.f32.mrf.mxu0
  %v345 = vadd.f32 0.0, %v344
  %346 = vdwg.mxu0
  %v347 = vsub.f32 %v42, %v301
  %v348 = vsub.f32 %v43, %v303
  %v349 = vsub.f32 %v44, %v307
  %v350 = vsub.f32 %v45, %v309
  %v351 = vsub.f32 %v46, %v313
  %v352 = vsub.f32 %v47, %v315
  %v353 = vsub.f32 %v48, %v319
  %v354 = vsub.f32 %v49, %v321
  %v355 = vsub.f32 %v50, %v325
  %v356 = vsub.f32 %v51, %v327
  %v357 = vsub.f32 %v52, %v331
  %v358 = vsub.f32 %v53, %v333
  %v359 = vsub.f32 %v54, %v337
  %v360 = vsub.f32 %v55, %v339
  %v361 = vsub.f32 %v56, %v343
  %v362 = vsub.f32 %v57, %v345
  %v363 = vmul.f32 %v347, %v347
  %v364 = vmul.f32 %v348, %v348
  %v365 = vmul.f32 %v349, %v349
  %v366 = vmul.f32 %v350, %v350
  %v367 = vmul.f32 %v351, %v351
  %v368 = vmul.f32 %v352, %v352
  %v369 = vmul.f32 %v353, %v353
  %v370 = vmul.f32 %v354, %v354
  %v371 = vmul.f32 %v355, %v355
  %v372 = vmul.f32 %v356, %v356
  %v373 = vmul.f32 %v357, %v357
  %v374 = vmul.f32 %v358, %v358
  %v375 = vmul.f32 %v359, %v359
  %v376 = vmul.f32 %v360, %v360
  %v377 = vmul.f32 %v361, %v361
  %v378 = vmul.f32 %v362, %v362
  %379 = vmatprep.subr.mxu0 0.0
  %380 = vmatpush1.msra.mxu0 %v87
  %381 = vmatprep.subr.mxu0 0.0
  %382 = vmatpush1.msra.mxu0 %v86
  %383 = vmatprep.subr.mxu0 0.0
  %384 = vmatpush1.msra.mxu0 %v85
  %385 = vmatprep.subr.mxu0 0.0
  %386 = vmatpush1.msra.mxu0 %v84
  %387 = vmatprep.subr.mxu0 0.0
  %388 = vmatpush1.msra.mxu0 %v83
  %389 = vmatprep.subr.mxu0 0.0
  %390 = vmatpush1.msra.mxu0 %v82
  %391 = vmatprep.subr.mxu0 0.0
  %392 = vmatpush1.msra.mxu0 %v81
  %393 = vmatprep.subr.mxu0 0.0
  %394 = vmatpush1.msra.mxu0 %v80
  %395 = vmatprep.subr.mxu0 0.0
  %396 = vmatpush1.msra.mxu0 %v79
  %397 = vmatprep.subr.mxu0 0.0
  %398 = vmatpush1.msra.mxu0 %v78
  %399 = vmatprep.subr.mxu0 0.0
  %400 = vmatpush1.msra.mxu0 %v77
  %401 = vmatprep.subr.mxu0 0.0
  %402 = vmatpush1.msra.mxu0 %v76
  %403 = vmatprep.subr.mxu0 0.0
  %404 = vmatpush1.msra.mxu0 %v75
  %405 = vmatprep.subr.mxu0 0.0
  %406 = vmatpush1.msra.mxu0 %v74
  %407 = vmatprep.subr.mxu0 0.0
  %408 = vmatpush1.msra.mxu0 %v73
  %409 = vmatprep.subr.mxu0 0.0
  %410 = vmatpush1.msra.mxu0 %v72
  %411 = vmatprep.subr.mxu0 0.0
  %412 = vmatpush2.msra.mxu0 %v103
  %413 = vmatprep.subr.mxu0 0.0
  %414 = vmatpush2.msra.mxu0 %v102
  %415 = vmatprep.subr.mxu0 0.0
  %416 = vmatpush2.msra.mxu0 %v101
  %417 = vmatprep.subr.mxu0 0.0
  %418 = vmatpush2.msra.mxu0 %v100
  %419 = vmatprep.subr.mxu0 0.0
  %420 = vmatpush2.msra.mxu0 %v99
  %421 = vmatprep.subr.mxu0 0.0
  %422 = vmatpush2.msra.mxu0 %v98
  %423 = vmatprep.subr.mxu0 0.0
  %424 = vmatpush2.msra.mxu0 %v97
  %425 = vmatprep.subr.mxu0 0.0
  %426 = vmatpush2.msra.mxu0 %v96
  %427 = vmatprep.subr.mxu0 0.0
  %428 = vmatpush2.msra.mxu0 %v95
  %429 = vmatprep.subr.mxu0 0.0
  %430 = vmatpush2.msra.mxu0 %v94
  %431 = vmatprep.subr.mxu0 0.0
  %432 = vmatpush2.msra.mxu0 %v93
  %433 = vmatprep.subr.mxu0 0.0
  %434 = vmatpush2.msra.mxu0 %v92
  %435 = vmatprep.subr.mxu0 0.0
  %436 = vmatpush2.msra.mxu0 %v91
  %437 = vmatprep.subr.mxu0 0.0
  %438 = vmatpush2.msra.mxu0 %v90
  %439 = vmatprep.subr.mxu0 0.0
  %440 = vmatpush2.msra.mxu0 %v89
  %441 = vmatprep.subr.mxu0 0.0
  %442 = vmatpush2.msra.mxu0 %v88
  %443 = vmatprep.mubr.f32.mxu0 %v364
  %444 = vmatmul.mubr.f32.gmra.mxu0 %v363
  %v445 = vpop.f32.mrf.mxu0
  %v446 = vadd.f32 1e-05, %v445
  %v447 = vpop.f32.mrf.mxu0
  %448 = vmatprep.mubr.f32.mxu0 %v366
  %449 = vmatmul.mubr.f32.gmra.mxu0 %v365
  %v450 = vpop.f32.mrf.mxu0
  %v451 = vadd.f32 1e-05, %v450
  %v452 = vpop.f32.mrf.mxu0
  %453 = vmatprep.mubr.f32.mxu0 %v368
  %454 = vmatmul.mubr.f32.gmra.mxu0 %v367
  %v455 = vpop.f32.mrf.mxu0
  %v456 = vadd.f32 1e-05, %v455
  %v457 = vpop.f32.mrf.mxu0
  %458 = vmatprep.mubr.f32.mxu0 %v370
  %459 = vmatmul.mubr.f32.gmra.mxu0 %v369
  %v460 = vpop.f32.mrf.mxu0
  %v461 = vadd.f32 1e-05, %v460
  %v462 = vpop.f32.mrf.mxu0
  %463 = vmatprep.mubr.f32.mxu0 %v372
  %464 = vmatmul.mubr.f32.gmra.mxu0 %v371
  %v465 = vpop.f32.mrf.mxu0
  %v466 = vadd.f32 1e-05, %v465
  %v467 = vpop.f32.mrf.mxu0
  %468 = vmatprep.mubr.f32.mxu0 %v374
  %469 = vmatmul.mubr.f32.gmra.mxu0 %v373
  %v470 = vpop.f32.mrf.mxu0
  %v471 = vadd.f32 1e-05, %v470
  %v472 = vpop.f32.mrf.mxu0
  %473 = vmatprep.mubr.f32.mxu0 %v376
  %474 = vmatmul.mubr.f32.gmra.mxu0 %v375
  %v475 = vpop.f32.mrf.mxu0
  %v476 = vadd.f32 1e-05, %v475
  %v477 = vpop.f32.mrf.mxu0
  %478 = vmatprep.mubr.f32.mxu0 %v378
  %479 = vmatmul.mubr.f32.gmra.mxu0 %v377
  %v480 = vpop.f32.mrf.mxu0
  %v481 = vadd.f32 1e-05, %v480
  %v482 = vpop.f32.mrf.mxu0
  %483 = vdwg.mxu0
  %v484 = vrsqrt.pop %v446
  %v485 = vrsqrt.pop %v451
  %v486 = vrsqrt.pop %v456
  %v487 = vrsqrt.pop %v461
  %v488 = vrsqrt.pop %v466
  %v489 = vrsqrt.pop %v471
  %v490 = vrsqrt.pop %v476
  %v491 = vrsqrt.pop %v481
  %v493 = vsel %vm209, %v484, 0
  %v496 = vsel %vm209, %v485, 0
  %v499 = vsel %vm209, %v486, 0
  %v502 = vsel %vm209, %v487, 0
  %v505 = vsel %vm209, %v488, 0
  %v508 = vsel %vm209, %v489, 0
  %v511 = vsel %vm209, %v490, 0
  %v514 = vsel %vm209, %v491, 0
  %516 = vmatprep.subr.mxu0 0.0
  %517 = vmatpush1.msra.mxu0 0.0
  %518 = vmatprep.subr.mxu0 0.0
  %519 = vmatpush1.msra.mxu0 0.0
  %520 = vmatprep.subr.mxu0 0.0
  %521 = vmatpush1.msra.mxu0 0.0
  %522 = vmatprep.subr.mxu0 0.0
  %523 = vmatpush1.msra.mxu0 0.0
  %524 = vmatprep.subr.mxu0 0.0
  %525 = vmatpush1.msra.mxu0 0.0
  %526 = vmatprep.subr.mxu0 0.0
  %527 = vmatpush1.msra.mxu0 0.0
  %528 = vmatprep.subr.mxu0 0.0
  %529 = vmatpush1.msra.mxu0 0.0
  %530 = vmatprep.subr.mxu0 0.0
  %531 = vmatpush1.msra.mxu0 0.0
  %532 = vmatprep.subr.mxu0 0.0
  %533 = vmatpush1.msra.mxu0 0.0
  %534 = vmatprep.subr.mxu0 0.0
  %535 = vmatpush1.msra.mxu0 0.0
  %536 = vmatprep.subr.mxu0 0.0
  %537 = vmatpush1.msra.mxu0 0.0
  %538 = vmatprep.subr.mxu0 0.0
  %539 = vmatpush1.msra.mxu0 0.0
  %540 = vmatprep.subr.mxu0 0.0
  %541 = vmatpush1.msra.mxu0 0.0
  %542 = vmatprep.subr.mxu0 0.0
  %543 = vmatpush1.msra.mxu0 0.0
  %544 = vmatprep.subr.mxu0 %v61
  %545 = vmatpush1.msra.mxu0 %v60
  %546 = vmatprep.subr.mxu0 %v59
  %547 = vmatpush1.msra.mxu0 %v58
  %548 = vmatprep.subr.mxu0 0.0
  %549 = vmatpush2.msra.mxu0 0.0
  %550 = vmatprep.subr.mxu0 0.0
  %551 = vmatpush2.msra.mxu0 0.0
  %552 = vmatprep.subr.mxu0 0.0
  %553 = vmatpush2.msra.mxu0 0.0
  %554 = vmatprep.subr.mxu0 0.0
  %555 = vmatpush2.msra.mxu0 0.0
  %556 = vmatprep.subr.mxu0 0.0
  %557 = vmatpush2.msra.mxu0 0.0
  %558 = vmatprep.subr.mxu0 0.0
  %559 = vmatpush2.msra.mxu0 0.0
  %560 = vmatprep.subr.mxu0 0.0
  %561 = vmatpush2.msra.mxu0 0.0
  %562 = vmatprep.subr.mxu0 0.0
  %563 = vmatpush2.msra.mxu0 0.0
  %564 = vmatprep.subr.mxu0 0.0
  %565 = vmatpush2.msra.mxu0 0.0
  %566 = vmatprep.subr.mxu0 0.0
  %567 = vmatpush2.msra.mxu0 0.0
  %568 = vmatprep.subr.mxu0 0.0
  %569 = vmatpush2.msra.mxu0 0.0
  %570 = vmatprep.subr.mxu0 0.0
  %571 = vmatpush2.msra.mxu0 0.0
  %572 = vmatprep.subr.mxu0 0.0
  %573 = vmatpush2.msra.mxu0 0.0
  %574 = vmatprep.subr.mxu0 0.0
  %575 = vmatpush2.msra.mxu0 0.0
  %576 = vmatprep.subr.mxu0 0.0
  %577 = vmatpush2.msra.mxu0 0.0
  %578 = vmatprep.subr.mxu0 0.0
  %579 = vmatpush2.msra.mxu0 0.0
  %580 = vmatprep.mubr.f32.mxu0 0.0
  %581 = vmatmul.mubr.f32.gmra.mxu0 %v493
  %v582 = vpop.f32.mrf.mxu0
  %v583 = vadd.f32 0.0, %v582
  %v584 = vpop.f32.mrf.mxu0
  %v585 = vadd.f32 0.0, %v584
  %586 = vmatprep.mubr.f32.mxu0 0.0
  %587 = vmatmul.mubr.f32.gmra.mxu0 %v496
  %v588 = vpop.f32.mrf.mxu0
  %v589 = vadd.f32 0.0, %v588
  %v590 = vpop.f32.mrf.mxu0
  %v591 = vadd.f32 0.0, %v590
  %592 = vmatprep.mubr.f32.mxu0 0.0
  %593 = vmatmul.mubr.f32.gmra.mxu0 %v499
  %v594 = vpop.f32.mrf.mxu0
  %v595 = vadd.f32 0.0, %v594
  %v596 = vpop.f32.mrf.mxu0
  %v597 = vadd.f32 0.0, %v596
  %598 = vmatprep.mubr.f32.mxu0 0.0
  %599 = vmatmul.mubr.f32.gmra.mxu0 %v502
  %v600 = vpop.f32.mrf.mxu0
  %v601 = vadd.f32 0.0, %v600
  %v602 = vpop.f32.mrf.mxu0
  %v603 = vadd.f32 0.0, %v602
  %604 = vmatprep.mubr.f32.mxu0 0.0
  %605 = vmatmul.mubr.f32.gmra.mxu0 %v505
  %v606 = vpop.f32.mrf.mxu0
  %v607 = vadd.f32 0.0, %v606
  %v608 = vpop.f32.mrf.mxu0
  %v609 = vadd.f32 0.0, %v608
  %610 = vmatprep.mubr.f32.mxu0 0.0
  %611 = vmatmul.mubr.f32.gmra.mxu0 %v508
  %v612 = vpop.f32.mrf.mxu0
  %v613 = vadd.f32 0.0, %v612
  %v614 = vpop.f32.mrf.mxu0
  %v615 = vadd.f32 0.0, %v614
  %616 = vmatprep.mubr.f32.mxu0 0.0
  %617 = vmatmul.mubr.f32.gmra.mxu0 %v511
  %v618 = vpop.f32.mrf.mxu0
  %v619 = vadd.f32 0.0, %v618
  %v620 = vpop.f32.mrf.mxu0
  %v621 = vadd.f32 0.0, %v620
  %622 = vmatprep.mubr.f32.mxu0 0.0
  %623 = vmatmul.mubr.f32.gmra.mxu0 %v514
  %v624 = vpop.f32.mrf.mxu0
  %v625 = vadd.f32 0.0, %v624
  %v626 = vpop.f32.mrf.mxu0
  %v627 = vadd.f32 0.0, %v626
  %628 = vdwg.mxu0
  %v629 = vmul.f32 %v347, %v583
  %v630 = vmul.f32 %v348, %v585
  %v631 = vmul.f32 %v349, %v589
  %v632 = vmul.f32 %v350, %v591
  %v633 = vmul.f32 %v351, %v595
  %v634 = vmul.f32 %v352, %v597
  %v635 = vmul.f32 %v353, %v601
  %v636 = vmul.f32 %v354, %v603
  %v637 = vmul.f32 %v355, %v607
  %v638 = vmul.f32 %v356, %v609
  %v639 = vmul.f32 %v357, %v613
  %v640 = vmul.f32 %v358, %v615
  %v641 = vmul.f32 %v359, %v619
  %v642 = vmul.f32 %v360, %v621
  %v643 = vmul.f32 %v361, %v625
  %v644 = vmul.f32 %v362, %v627
  %v645 = vlaneseq
  %v646 = vshrl.u32 %v645, 7
  %v647 = vsub.s32 0, %v646
  %v648 = vrot.slane %v70, %v647
  %v649 = vlaneseq
  %v650 = vshrl.u32 %v649, 7
  %v651 = vsub.s32 0, %v650
  %v652 = vrot.slane %v71, %v651
  %v653 = vmul.f32 %v629, %v648
  %v654 = vmul.f32 %v630, %v652
  %v655 = vmul.f32 %v631, %v648
  %v656 = vmul.f32 %v632, %v652
  %v657 = vmul.f32 %v633, %v648
  %v658 = vmul.f32 %v634, %v652
  %v659 = vmul.f32 %v635, %v648
  %v660 = vmul.f32 %v636, %v652
  %v661 = vmul.f32 %v637, %v648
  %v662 = vmul.f32 %v638, %v652
  %v663 = vmul.f32 %v639, %v648
  %v664 = vmul.f32 %v640, %v652
  %v665 = vmul.f32 %v641, %v648
  %v666 = vmul.f32 %v642, %v652
  %v667 = vmul.f32 %v643, %v648
  %v668 = vmul.f32 %v644, %v652
  %v669 = vlaneseq
  %v670 = vshrl.u32 %v669, 7
  %v671 = vsub.s32 1, %v670
  %v672 = vrot.slane %v70, %v671
  %v673 = vlaneseq
  %v674 = vshrl.u32 %v673, 7
  %v675 = vsub.s32 1, %v674
  %v676 = vrot.slane %v71, %v675
  %v677 = vadd.f32 %v653, %v672
  %v678 = vadd.f32 %v654, %v676
  %v679 = vadd.f32 %v655, %v672
  %v680 = vadd.f32 %v656, %v676
  %v681 = vadd.f32 %v657, %v672
  %v682 = vadd.f32 %v658, %v676
  %v683 = vadd.f32 %v659, %v672
  %v684 = vadd.f32 %v660, %v676
  %v685 = vadd.f32 %v661, %v672
  %v686 = vadd.f32 %v662, %v676
  %v687 = vadd.f32 %v663, %v672
  %v688 = vadd.f32 %v664, %v676
  %v689 = vadd.f32 %v665, %v672
  %v690 = vadd.f32 %v666, %v676
  %v691 = vadd.f32 %v667, %v672
  %v692 = vadd.f32 %v668, %v676
  %v693 = vpack.c.bf16 %v679, %v677
  %v694 = vpack.c.bf16 %v680, %v678
  %v695 = vpack.c.bf16 %v683, %v681
  %v696 = vpack.c.bf16 %v684, %v682
  %v697 = vpack.c.bf16 %v687, %v685
  %v698 = vpack.c.bf16 %v688, %v686
  %v699 = vpack.c.bf16 %v691, %v689
  %v700 = vpack.c.bf16 %v692, %v690
  %v701 = vld [vmem:[%s4 + $0x4] sm:$0xf]
  %v702 = vld [vmem:[%s4 + $0xc] sm:$0xf]
  %v703 = vld [vmem:[%s4 + $0x14] sm:$0xf]
  %v704 = vld [vmem:[%s4 + $0x1c] sm:$0xf]
  %v705 = vld [vmem:[%s4 + $0x24] sm:$0xf]
  %v706 = vld [vmem:[%s4 + $0x2c] sm:$0xf]
  %v707 = vld [vmem:[%s4 + $0x34] sm:$0xf]
  %v708 = vld [vmem:[%s4 + $0x3c] sm:$0xf]
  %v709 = vld [vmem:[%s4 + $0x44] sm:$0xf]
  %v710 = vld [vmem:[%s4 + $0x4c] sm:$0xf]
  %v711 = vld [vmem:[%s4 + $0x54] sm:$0xf]
  %v712 = vld [vmem:[%s4 + $0x5c] sm:$0xf]
  %v713 = vld [vmem:[%s4 + $0x64] sm:$0xf]
  %v714 = vld [vmem:[%s4 + $0x6c] sm:$0xf]
  %v715 = vld [vmem:[%s4 + $0x74] sm:$0xf]
  %v716 = vld [vmem:[%s4 + $0x7c] sm:$0xf]
  %v717 = vld [vmem:[%s4 + $0x84] sm:$0xf]
  %v718 = vld [vmem:[%s4 + $0x8c] sm:$0xf]
  %v719 = vld [vmem:[%s4 + $0x94] sm:$0xf]
  %v720 = vld [vmem:[%s4 + $0x9c] sm:$0xf]
  %v721 = vld [vmem:[%s4 + $0xa4] sm:$0xf]
  %v722 = vld [vmem:[%s4 + $0xac] sm:$0xf]
  %v723 = vld [vmem:[%s4 + $0xb4] sm:$0xf]
  %v724 = vld [vmem:[%s4 + $0xbc] sm:$0xf]
  %v725 = vld [vmem:[%s4 + $0xc4] sm:$0xf]
  %v726 = vld [vmem:[%s4 + $0xcc] sm:$0xf]
  %v727 = vld [vmem:[%s4 + $0xd4] sm:$0xf]
  %v728 = vld [vmem:[%s4 + $0xdc] sm:$0xf]
  %v729 = vld [vmem:[%s4 + $0xe4] sm:$0xf]
  %v730 = vld [vmem:[%s4 + $0xec] sm:$0xf]
  %v731 = vld [vmem:[%s4 + $0xf4] sm:$0xf]
  %v732 = vld [vmem:[%s4 + $0xfc] sm:$0xf]
  %v765 = vunpack.c.l.b16 %v701
  %v766 = vunpack.c.l.b16 %v702
  %v767 = vunpack.c.l.b16 %v703
  %v768 = vunpack.c.l.b16 %v704
  %v769 = vunpack.c.l.b16 %v705
  %v770 = vunpack.c.l.b16 %v706
  %v771 = vunpack.c.l.b16 %v707
  %v772 = vunpack.c.l.b16 %v708
  %v773 = vunpack.c.l.b16 %v709
  %v774 = vunpack.c.l.b16 %v710
  %v775 = vunpack.c.l.b16 %v711
  %v776 = vunpack.c.l.b16 %v712
  %v777 = vunpack.c.l.b16 %v713
  %v778 = vunpack.c.l.b16 %v714
  %v779 = vunpack.c.l.b16 %v715
  %v780 = vunpack.c.l.b16 %v716
  %v781 = vunpack.c.l.b16 %v717
  %v782 = vunpack.c.l.b16 %v718
  %v783 = vunpack.c.l.b16 %v719
  %v784 = vunpack.c.l.b16 %v720
  %v785 = vunpack.c.l.b16 %v721
  %v786 = vunpack.c.l.b16 %v722
  %v787 = vunpack.c.l.b16 %v723
  %v788 = vunpack.c.l.b16 %v724
  %v789 = vunpack.c.l.b16 %v725
  %v790 = vunpack.c.l.b16 %v726
  %v791 = vunpack.c.l.b16 %v727
  %v792 = vunpack.c.l.b16 %v728
  %v793 = vunpack.c.l.b16 %v729
  %v794 = vunpack.c.l.b16 %v730
  %v795 = vunpack.c.l.b16 %v731
  %v796 = vunpack.c.l.b16 %v732
  %v797 = vpack.c.b16 %v766, %v765
  %v798 = vpack.c.b16 %v768, %v767
  %v799 = vpack.c.b16 %v770, %v769
  %v800 = vpack.c.b16 %v772, %v771
  %v801 = vpack.c.b16 %v774, %v773
  %v802 = vpack.c.b16 %v776, %v775
  %v803 = vpack.c.b16 %v778, %v777
  %v804 = vpack.c.b16 %v780, %v779
  %v805 = vpack.c.b16 %v782, %v781
  %v806 = vpack.c.b16 %v784, %v783
  %v807 = vpack.c.b16 %v786, %v785
  %v808 = vpack.c.b16 %v788, %v787
  %v809 = vpack.c.b16 %v790, %v789
  %v810 = vpack.c.b16 %v792, %v791
  %v811 = vpack.c.b16 %v794, %v793
  %v812 = vpack.c.b16 %v796, %v795
  %829 = vmatprep.subr.bf16.mxu0 0
  %830 = vmatpush1.bf16.msra.mxu0 %v804
  %831 = vmatprep.subr.bf16.mxu0 0
  %832 = vmatpush1.bf16.msra.mxu0 %v803
  %833 = vmatprep.subr.bf16.mxu0 0
  %834 = vmatpush1.bf16.msra.mxu0 %v802
  %835 = vmatprep.subr.bf16.mxu0 0
  %836 = vmatpush1.bf16.msra.mxu0 %v801
  %837 = vmatprep.subr.bf16.mxu0 0
  %838 = vmatpush1.bf16.msra.mxu0 %v800
  %839 = vmatprep.subr.bf16.mxu0 0
  %840 = vmatpush1.bf16.msra.mxu0 %v799
  %841 = vmatprep.subr.bf16.mxu0 0
  %842 = vmatpush1.bf16.msra.mxu0 %v798
  %843 = vmatprep.subr.bf16.mxu0 0
  %844 = vmatpush1.bf16.msra.mxu0 %v797
  %845 = vmatprep.subr.bf16.mxu0 0
  %846 = vmatpush2.bf16.msra.mxu0 %v812
  %847 = vmatprep.subr.bf16.mxu0 0
  %848 = vmatpush2.bf16.msra.mxu0 %v811
  %849 = vmatprep.subr.bf16.mxu0 0
  %850 = vmatpush2.bf16.msra.mxu0 %v810
  %851 = vmatprep.subr.bf16.mxu0 0
  %852 = vmatpush2.bf16.msra.mxu0 %v809
  %853 = vmatprep.subr.bf16.mxu0 0
  %854 = vmatpush2.bf16.msra.mxu0 %v808
  %855 = vmatprep.subr.bf16.mxu0 0
  %856 = vmatpush2.bf16.msra.mxu0 %v807
  %857 = vmatprep.subr.bf16.mxu0 0
  %858 = vmatpush2.bf16.msra.mxu0 %v806
  %859 = vmatprep.subr.bf16.mxu0 0
  %860 = vmatpush2.bf16.msra.mxu0 %v805
  %861 = vmatprep.mubr.bf16.mxu0 %v694
  %862 = vmatmul.mubr.bf16.gmra.mxu0 %v693
  %v863 = vpop.f32.mrf.mxu0
  %v864 = vadd.f32 0.0, %v863
  %v865 = vpop.f32.mrf.mxu0
  %v866 = vpop.f32.mrf.mxu0
  %v867 = vadd.f32 0.0, %v866
  %v868 = vpop.f32.mrf.mxu0
  %869 = vmatprep.mubr.bf16.mxu0 %v696
  %870 = vmatmul.mubr.bf16.gmra.mxu0 %v695
  %v871 = vpop.f32.mrf.mxu0
  %v872 = vadd.f32 0.0, %v871
  %v873 = vpop.f32.mrf.mxu0
  %v874 = vpop.f32.mrf.mxu0
  %v875 = vadd.f32 0.0, %v874
  %v876 = vpop.f32.mrf.mxu0
  %877 = vmatprep.mubr.bf16.mxu0 %v698
  %878 = vmatmul.mubr.bf16.gmra.mxu0 %v697
  %v879 = vpop.f32.mrf.mxu0
  %v880 = vadd.f32 0.0, %v879
  %v881 = vpop.f32.mrf.mxu0
  %v882 = vpop.f32.mrf.mxu0
  %v883 = vadd.f32 0.0, %v882
  %v884 = vpop.f32.mrf.mxu0
  %885 = vmatprep.mubr.bf16.mxu0 %v700
  %886 = vmatmul.mubr.bf16.gmra.mxu0 %v699
  %v887 = vpop.f32.mrf.mxu0
  %v888 = vadd.f32 0.0, %v887
  %v889 = vpop.f32.mrf.mxu0
  %v890 = vpop.f32.mrf.mxu0
  %v891 = vadd.f32 0.0, %v890
  %v892 = vpop.f32.mrf.mxu0
  %893 = vdwg.mxu0
  %v894 = vld [vmem:[%s1] sm:$0xf]
  %v895 = vld [vmem:[%s1 + $0x4] sm:$0xf]
  %v896 = vld [vmem:[%s1 + $0x8] sm:$0xf]
  %v897 = vld [vmem:[%s1 + $0xc] sm:$0xf]
  %v898 = vld [vmem:[%s1 + $0x10] sm:$0xf]
  %v899 = vld [vmem:[%s1 + $0x14] sm:$0xf]
  %v900 = vld [vmem:[%s1 + $0x18] sm:$0xf]
  %v901 = vld [vmem:[%s1 + $0x1c] sm:$0xf]
  %v902 = vld [vmem:[%s1 + $0x20] sm:$0xf]
  %v903 = vld [vmem:[%s1 + $0x24] sm:$0xf]
  %v904 = vld [vmem:[%s1 + $0x28] sm:$0xf]
  %v905 = vld [vmem:[%s1 + $0x2c] sm:$0xf]
  %v906 = vld [vmem:[%s1 + $0x30] sm:$0xf]
  %v907 = vld [vmem:[%s1 + $0x34] sm:$0xf]
  %v908 = vld [vmem:[%s1 + $0x38] sm:$0xf]
  %v909 = vld [vmem:[%s1 + $0x3c] sm:$0xf]
  %v910 = vld [vmem:[%s2] sm:$0xff]
  %v911 = vld [vmem:[%s2 + $0x8] sm:$0xff]
  %v912 = vld [vmem:[%s2 + $0x10] sm:$0xff]
  %v913 = vld [vmem:[%s2 + $0x18] sm:$0xff]
  %v914 = vld [vmem:[%s2 + $0x20] sm:$0xff]
  %v915 = vld [vmem:[%s2 + $0x28] sm:$0xff]
  %v916 = vld [vmem:[%s2 + $0x30] sm:$0xff]
  %v917 = vld [vmem:[%s2 + $0x38] sm:$0xff]
  %v918 = vld [vmem:[%s2 + $0x40] sm:$0xff]
  %v919 = vld [vmem:[%s2 + $0x48] sm:$0xff]
  %v920 = vld [vmem:[%s2 + $0x50] sm:$0xff]
  %v921 = vld [vmem:[%s2 + $0x58] sm:$0xff]
  %v922 = vld [vmem:[%s2 + $0x60] sm:$0xff]
  %v923 = vld [vmem:[%s2 + $0x68] sm:$0xff]
  %v924 = vld [vmem:[%s2 + $0x70] sm:$0xff]
  %v925 = vld [vmem:[%s2 + $0x78] sm:$0xff]
  %927 = vset.pattern.permute.xlu0 0
  %928 = vperm.xlu0 %927, %v910
  %v929 = vpop.permute.xlu0 %928
  %932 = vset.pattern.permute.xlu0 0
  %933 = vperm.xlu0 %932, %v911
  %v934 = vpop.permute.xlu0 %933
  %937 = vset.pattern.permute.xlu0 0
  %938 = vperm.xlu0 %937, %v912
  %v939 = vpop.permute.xlu0 %938
  %942 = vset.pattern.permute.xlu0 0
  %943 = vperm.xlu0 %942, %v913
  %v944 = vpop.permute.xlu0 %943
  %947 = vset.pattern.permute.xlu0 0
  %948 = vperm.xlu0 %947, %v914
  %v949 = vpop.permute.xlu0 %948
  %952 = vset.pattern.permute.xlu0 0
  %953 = vperm.xlu0 %952, %v915
  %v954 = vpop.permute.xlu0 %953
  %957 = vset.pattern.permute.xlu0 0
  %958 = vperm.xlu0 %957, %v916
  %v959 = vpop.permute.xlu0 %958
  %962 = vset.pattern.permute.xlu0 0
  %963 = vperm.xlu0 %962, %v917
  %v964 = vpop.permute.xlu0 %963
  %967 = vset.pattern.permute.xlu0 0
  %968 = vperm.xlu0 %967, %v918
  %v969 = vpop.permute.xlu0 %968
  %972 = vset.pattern.permute.xlu0 0
  %973 = vperm.xlu0 %972, %v919
  %v974 = vpop.permute.xlu0 %973
  %977 = vset.pattern.permute.xlu0 0
  %978 = vperm.xlu0 %977, %v920
  %v979 = vpop.permute.xlu0 %978
  %982 = vset.pattern.permute.xlu0 0
  %983 = vperm.xlu0 %982, %v921
  %v984 = vpop.permute.xlu0 %983
  %987 = vset.pattern.permute.xlu0 0
  %988 = vperm.xlu0 %987, %v922
  %v989 = vpop.permute.xlu0 %988
  %992 = vset.pattern.permute.xlu0 0
  %993 = vperm.xlu0 %992, %v923
  %v994 = vpop.permute.xlu0 %993
  %997 = vset.pattern.permute.xlu0 0
  %998 = vperm.xlu0 %997, %v924
  %v999 = vpop.permute.xlu0 %998
  %1002 = vset.pattern.permute.xlu0 0
  %1003 = vperm.xlu0 %1002, %v925
  %v1004 = vpop.permute.xlu0 %1003
  %v1022 = vunpack.c.l.b16 %v894
  %v1023 = vunpack.c.l.b16 %v895
  %v1024 = vunpack.c.l.b16 %v896
  %v1025 = vunpack.c.l.b16 %v897
  %v1026 = vunpack.c.l.b16 %v898
  %v1027 = vunpack.c.l.b16 %v899
  %v1028 = vunpack.c.l.b16 %v900
  %v1029 = vunpack.c.l.b16 %v901
  %v1030 = vunpack.c.l.b16 %v902
  %v1031 = vunpack.c.l.b16 %v903
  %v1032 = vunpack.c.l.b16 %v904
  %v1033 = vunpack.c.l.b16 %v905
  %v1034 = vunpack.c.l.b16 %v906
  %v1035 = vunpack.c.l.b16 %v907
  %v1036 = vunpack.c.l.b16 %v908
  %v1037 = vunpack.c.l.b16 %v909
  %v1038 = vpack.c.b16 %v1023, %v1022
  %v1039 = vpack.c.b16 %v1025, %v1024
  %v1040 = vpack.c.b16 %v1027, %v1026
  %v1041 = vpack.c.b16 %v1029, %v1028
  %v1042 = vpack.c.b16 %v1031, %v1030
  %v1043 = vpack.c.b16 %v1033, %v1032
  %v1044 = vpack.c.b16 %v1035, %v1034
  %v1045 = vpack.c.b16 %v1037, %v1036
  %vm1046 = vcmask 523264
  %v1048 = vsel %vm1046, %v1038, 0
  %v1051 = vsel %vm1046, %v1039, 0
  %v1054 = vsel %vm1046, %v1040, 0
  %v1057 = vsel %vm1046, %v1041, 0
  %v1060 = vsel %vm1046, %v1042, 0
  %v1063 = vsel %vm1046, %v1043, 0
  %v1066 = vsel %vm1046, %v1044, 0
  %v1069 = vsel %vm1046, %v1045, 0
  %1071 = vmatprep.subr.bf16.mxu0 0
  %1072 = vmatpush1.bf16.msra.mxu0 0
  %1073 = vmatprep.subr.bf16.mxu0 0
  %1074 = vmatpush1.bf16.msra.mxu0 0
  %1075 = vmatprep.subr.bf16.mxu0 0
  %1076 = vmatpush1.bf16.msra.mxu0 0
  %1077 = vmatprep.subr.bf16.mxu0 0
  %1078 = vmatpush1.bf16.msra.mxu0 0
  %1079 = vmatprep.subr.bf16.mxu0 %v700
  %1080 = vmatpush1.bf16.msra.mxu0 %v699
  %1081 = vmatprep.subr.bf16.mxu0 %v698
  %1082 = vmatpush1.bf16.msra.mxu0 %v697
  %1083 = vmatprep.subr.bf16.mxu0 %v696
  %1084 = vmatpush1.bf16.msra.mxu0 %v695
  %1085 = vmatprep.subr.bf16.mxu0 %v694
  %1086 = vmatpush1.bf16.msra.mxu0 %v693
  %1087 = vmatprep.subr.bf16.mxu0 0
  %1088 = vmatpush2.bf16.msra.mxu0 0
  %1089 = vmatprep.subr.bf16.mxu0 0
  %1090 = vmatpush2.bf16.msra.mxu0 0
  %1091 = vmatprep.subr.bf16.mxu0 0
  %1092 = vmatpush2.bf16.msra.mxu0 0
  %1093 = vmatprep.subr.bf16.mxu0 0
  %1094 = vmatpush2.bf16.msra.mxu0 0
  %1095 = vmatprep.subr.bf16.mxu0 0
  %1096 = vmatpush2.bf16.msra.mxu0 0
  %1097 = vmatprep.subr.bf16.mxu0 0
  %1098 = vmatpush2.bf16.msra.mxu0 0
  %1099 = vmatprep.subr.bf16.mxu0 0
  %1100 = vmatpush2.bf16.msra.mxu0 0
  %1101 = vmatprep.subr.bf16.mxu0 0
  %1102 = vmatpush2.bf16.msra.mxu0 0
  %1103 = vmatprep.mubr.bf16.mxu0 0
  %1104 = vmatmul.mubr.bf16.gmra.mxu0 %v1048
  %v1105 = vpop.f32.mrf.mxu0
  %v1106 = vadd.f32 %v929, %v1105
  %v1107 = vpop.f32.mrf.mxu0
  %v1108 = vadd.f32 %v929, %v1107
  %v1109 = vpop.f32.mrf.mxu0
  %v1110 = vadd.f32 %v934, %v1109
  %v1111 = vpop.f32.mrf.mxu0
  %v1112 = vadd.f32 %v934, %v1111
  %1113 = vmatprep.mubr.bf16.mxu0 0
  %1114 = vmatmul.mubr.bf16.gmra.mxu0 %v1051
  %v1115 = vpop.f32.mrf.mxu0
  %v1116 = vadd.f32 %v939, %v1115
  %v1117 = vpop.f32.mrf.mxu0
  %v1118 = vadd.f32 %v939, %v1117
  %v1119 = vpop.f32.mrf.mxu0
  %v1120 = vadd.f32 %v944, %v1119
  %v1121 = vpop.f32.mrf.mxu0
  %v1122 = vadd.f32 %v944, %v1121
  %1123 = vmatprep.mubr.bf16.mxu0 0
  %1124 = vmatmul.mubr.bf16.gmra.mxu0 %v1054
  %v1125 = vpop.f32.mrf.mxu0
  %v1126 = vadd.f32 %v949, %v1125
  %v1127 = vpop.f32.mrf.mxu0
  %v1128 = vadd.f32 %v949, %v1127
  %v1129 = vpop.f32.mrf.mxu0
  %v1130 = vadd.f32 %v954, %v1129
  %v1131 = vpop.f32.mrf.mxu0
  %v1132 = vadd.f32 %v954, %v1131
  %1133 = vmatprep.mubr.bf16.mxu0 0
  %1134 = vmatmul.mubr.bf16.gmra.mxu0 %v1057
  %v1135 = vpop.f32.mrf.mxu0
  %v1136 = vadd.f32 %v959, %v1135
  %v1137 = vpop.f32.mrf.mxu0
  %v1138 = vadd.f32 %v959, %v1137
  %v1139 = vpop.f32.mrf.mxu0
  %v1140 = vadd.f32 %v964, %v1139
  %v1141 = vpop.f32.mrf.mxu0
  %v1142 = vadd.f32 %v964, %v1141
  %1143 = vmatprep.mubr.bf16.mxu0 0
  %1144 = vmatmul.mubr.bf16.gmra.mxu0 %v1060
  %v1145 = vpop.f32.mrf.mxu0
  %v1146 = vadd.f32 %v969, %v1145
  %v1147 = vpop.f32.mrf.mxu0
  %v1148 = vadd.f32 %v969, %v1147
  %v1149 = vpop.f32.mrf.mxu0
  %v1150 = vadd.f32 %v974, %v1149
  %v1151 = vpop.f32.mrf.mxu0
  %v1152 = vadd.f32 %v974, %v1151
  %1153 = vmatprep.mubr.bf16.mxu0 0
  %1154 = vmatmul.mubr.bf16.gmra.mxu0 %v1063
  %v1155 = vpop.f32.mrf.mxu0
  %v1156 = vadd.f32 %v979, %v1155
  %v1157 = vpop.f32.mrf.mxu0
  %v1158 = vadd.f32 %v979, %v1157
  %v1159 = vpop.f32.mrf.mxu0
  %v1160 = vadd.f32 %v984, %v1159
  %v1161 = vpop.f32.mrf.mxu0
  %v1162 = vadd.f32 %v984, %v1161
  %1163 = vmatprep.mubr.bf16.mxu0 0
  %1164 = vmatmul.mubr.bf16.gmra.mxu0 %v1066
  %v1165 = vpop.f32.mrf.mxu0
  %v1166 = vadd.f32 %v989, %v1165
  %v1167 = vpop.f32.mrf.mxu0
  %v1168 = vadd.f32 %v989, %v1167
  %v1169 = vpop.f32.mrf.mxu0
  %v1170 = vadd.f32 %v994, %v1169
  %v1171 = vpop.f32.mrf.mxu0
  %v1172 = vadd.f32 %v994, %v1171
  %1173 = vmatprep.mubr.bf16.mxu0 0
  %1174 = vmatmul.mubr.bf16.gmra.mxu0 %v1069
  %v1175 = vpop.f32.mrf.mxu0
  %v1176 = vadd.f32 %v999, %v1175
  %v1177 = vpop.f32.mrf.mxu0
  %v1178 = vadd.f32 %v999, %v1177
  %v1179 = vpop.f32.mrf.mxu0
  %v1180 = vadd.f32 %v1004, %v1179
  %v1181 = vpop.f32.mrf.mxu0
  %v1182 = vadd.f32 %v1004, %v1181
  %1183 = vdwg.mxu0
  %v1184 = vld [vmem:[%s3] sm:$0xff]
  %v1185 = vld [vmem:[%s3 + $0x8] sm:$0xff]
  %v1186 = vld [vmem:[%s3 + $0x10] sm:$0xff]
  %v1187 = vld [vmem:[%s3 + $0x18] sm:$0xff]
  %v1188 = vld [vmem:[%s3 + $0x20] sm:$0xff]
  %v1189 = vld [vmem:[%s3 + $0x28] sm:$0xff]
  %v1190 = vld [vmem:[%s3 + $0x30] sm:$0xff]
  %v1191 = vld [vmem:[%s3 + $0x38] sm:$0xff]
  %v1192 = vld [vmem:[%s3 + $0x40] sm:$0xff]
  %v1193 = vld [vmem:[%s3 + $0x48] sm:$0xff]
  %v1194 = vld [vmem:[%s3 + $0x50] sm:$0xff]
  %v1195 = vld [vmem:[%s3 + $0x58] sm:$0xff]
  %v1196 = vld [vmem:[%s3 + $0x60] sm:$0xff]
  %v1197 = vld [vmem:[%s3 + $0x68] sm:$0xff]
  %v1198 = vld [vmem:[%s3 + $0x70] sm:$0xff]
  %v1199 = vld [vmem:[%s3 + $0x78] sm:$0xff]
  %v1200 = vld [vmem:[%s3 + $0x80] sm:$0xff]
  %v1201 = vld [vmem:[%s3 + $0x88] sm:$0xff]
  %v1202 = vld [vmem:[%s3 + $0x90] sm:$0xff]
  %v1203 = vld [vmem:[%s3 + $0x98] sm:$0xff]
  %v1204 = vld [vmem:[%s3 + $0xa0] sm:$0xff]
  %v1205 = vld [vmem:[%s3 + $0xa8] sm:$0xff]
  %v1206 = vld [vmem:[%s3 + $0xb0] sm:$0xff]
  %v1207 = vld [vmem:[%s3 + $0xb8] sm:$0xff]
  %v1208 = vld [vmem:[%s3 + $0xc0] sm:$0xff]
  %v1209 = vld [vmem:[%s3 + $0xc8] sm:$0xff]
  %v1210 = vld [vmem:[%s3 + $0xd0] sm:$0xff]
  %v1211 = vld [vmem:[%s3 + $0xd8] sm:$0xff]
  %v1212 = vld [vmem:[%s3 + $0xe0] sm:$0xff]
  %v1213 = vld [vmem:[%s3 + $0xe8] sm:$0xff]
  %v1214 = vld [vmem:[%s3 + $0xf0] sm:$0xff]
  %v1215 = vld [vmem:[%s3 + $0xf8] sm:$0xff]
  %v1216 = vlaneseq
  %v1217 = vshrl.u32 %v1216, 7
  %v1218 = vsub.s32 2, %v1217
  %v1219 = vrot.slane %v70, %v1218
  %v1220 = vlaneseq
  %v1221 = vshrl.u32 %v1220, 7
  %v1222 = vsub.s32 2, %v1221
  %v1223 = vrot.slane %v71, %v1222
  %v1256 = vunpack.c.l.b16 %v1184
  %v1257 = vunpack.c.h.b16 %v1184
  %v1258 = vunpack.c.l.b16 %v1185
  %v1259 = vunpack.c.h.b16 %v1185
  %v1260 = vunpack.c.l.b16 %v1186
  %v1261 = vunpack.c.h.b16 %v1186
  %v1262 = vunpack.c.l.b16 %v1187
  %v1263 = vunpack.c.h.b16 %v1187
  %v1264 = vunpack.c.l.b16 %v1188
  %v1265 = vunpack.c.h.b16 %v1188
  %v1266 = vunpack.c.l.b16 %v1189
  %v1267 = vunpack.c.h.b16 %v1189
  %v1268 = vunpack.c.l.b16 %v1190
  %v1269 = vunpack.c.h.b16 %v1190
  %v1270 = vunpack.c.l.b16 %v1191
  %v1271 = vunpack.c.h.b16 %v1191
  %v1272 = vunpack.c.l.b16 %v1192
  %v1273 = vunpack.c.h.b16 %v1192
  %v1274 = vunpack.c.l.b16 %v1193
  %v1275 = vunpack.c.h.b16 %v1193
  %v1276 = vunpack.c.l.b16 %v1194
  %v1277 = vunpack.c.h.b16 %v1194
  %v1278 = vunpack.c.l.b16 %v1195
  %v1279 = vunpack.c.h.b16 %v1195
  %v1280 = vunpack.c.l.b16 %v1196
  %v1281 = vunpack.c.h.b16 %v1196
  %v1282 = vunpack.c.l.b16 %v1197
  %v1283 = vunpack.c.h.b16 %v1197
  %v1284 = vunpack.c.l.b16 %v1198
  %v1285 = vunpack.c.h.b16 %v1198
  %v1286 = vunpack.c.l.b16 %v1199
  %v1287 = vunpack.c.h.b16 %v1199
  %v1288 = vunpack.c.l.b16 %v1200
  %v1289 = vunpack.c.h.b16 %v1200
  %v1290 = vunpack.c.l.b16 %v1201
  %v1291 = vunpack.c.h.b16 %v1201
  %v1292 = vunpack.c.l.b16 %v1202
  %v1293 = vunpack.c.h.b16 %v1202
  %v1294 = vunpack.c.l.b16 %v1203
  %v1295 = vunpack.c.h.b16 %v1203
  %v1296 = vunpack.c.l.b16 %v1204
  %v1297 = vunpack.c.h.b16 %v1204
  %v1298 = vunpack.c.l.b16 %v1205
  %v1299 = vunpack.c.h.b16 %v1205
  %v1300 = vunpack.c.l.b16 %v1206
  %v1301 = vunpack.c.h.b16 %v1206
  %v1302 = vunpack.c.l.b16 %v1207
  %v1303 = vunpack.c.h.b16 %v1207
  %v1304 = vunpack.c.l.b16 %v1208
  %v1305 = vunpack.c.h.b16 %v1208
  %v1306 = vunpack.c.l.b16 %v1209
  %v1307 = vunpack.c.h.b16 %v1209
  %v1308 = vunpack.c.l.b16 %v1210
  %v1309 = vunpack.c.h.b16 %v1210
  %v1310 = vunpack.c.l.b16 %v1211
  %v1311 = vunpack.c.h.b16 %v1211
  %v1312 = vunpack.c.l.b16 %v1212
  %v1313 = vunpack.c.h.b16 %v1212
  %v1314 = vunpack.c.l.b16 %v1213
  %v1315 = vunpack.c.h.b16 %v1213
  %v1316 = vunpack.c.l.b16 %v1214
  %v1317 = vunpack.c.h.b16 %v1214
  %v1318 = vunpack.c.l.b16 %v1215
  %v1319 = vunpack.c.h.b16 %v1215
  %v1320 = vpack.c.b16 %v1258, %v1256
  %v1321 = vpack.c.b16 %v1259, %v1257
  %v1322 = vpack.c.b16 %v1262, %v1260
  %v1323 = vpack.c.b16 %v1263, %v1261
  %v1324 = vpack.c.b16 %v1266, %v1264
  %v1325 = vpack.c.b16 %v1267, %v1265
  %v1326 = vpack.c.b16 %v1270, %v1268
  %v1327 = vpack.c.b16 %v1271, %v1269
  %v1328 = vpack.c.b16 %v1274, %v1272
  %v1329 = vpack.c.b16 %v1275, %v1273
  %v1330 = vpack.c.b16 %v1278, %v1276
  %v1331 = vpack.c.b16 %v1279, %v1277
  %v1332 = vpack.c.b16 %v1282, %v1280
  %v1333 = vpack.c.b16 %v1283, %v1281
  %v1334 = vpack.c.b16 %v1286, %v1284
  %v1335 = vpack.c.b16 %v1287, %v1285
  %v1336 = vpack.c.b16 %v1290, %v1288
  %v1337 = vpack.c.b16 %v1291, %v1289
  %v1338 = vpack.c.b16 %v1294, %v1292
  %v1339 = vpack.c.b16 %v1295, %v1293
  %v1340 = vpack.c.b16 %v1298, %v1296
  %v1341 = vpack.c.b16 %v1299, %v1297
  %v1342 = vpack.c.b16 %v1302, %v1300
  %v1343 = vpack.c.b16 %v1303, %v1301
  %v1344 = vpack.c.b16 %v1306, %v1304
  %v1345 = vpack.c.b16 %v1307, %v1305
  %v1346 = vpack.c.b16 %v1310, %v1308
  %v1347 = vpack.c.b16 %v1311, %v1309
  %v1348 = vpack.c.b16 %v1314, %v1312
  %v1349 = vpack.c.b16 %v1315, %v1313
  %v1350 = vpack.c.b16 %v1318, %v1316
  %v1351 = vpack.c.b16 %v1319, %v1317
  %1384 = vmatprep.subr.bf16.mxu0 %v1335
  %1385 = vmatpush1.bf16.msra.mxu0 %v1334
  %1386 = vmatprep.subr.bf16.mxu0 %v1333
  %1387 = vmatpush1.bf16.msra.mxu0 %v1332
  %1388 = vmatprep.subr.bf16.mxu0 %v1331
  %1389 = vmatpush1.bf16.msra.mxu0 %v1330
  %1390 = vmatprep.subr.bf16.mxu0 %v1329
  %1391 = vmatpush1.bf16.msra.mxu0 %v1328
  %1392 = vmatprep.subr.bf16.mxu0 %v1327
  %1393 = vmatpush1.bf16.msra.mxu0 %v1326
  %1394 = vmatprep.subr.bf16.mxu0 %v1325
  %1395 = vmatpush1.bf16.msra.mxu0 %v1324
  %1396 = vmatprep.subr.bf16.mxu0 %v1323
  %1397 = vmatpush1.bf16.msra.mxu0 %v1322
  %1398 = vmatprep.subr.bf16.mxu0 %v1321
  %1399 = vmatpush1.bf16.msra.mxu0 %v1320
  %1400 = vmatprep.subr.bf16.mxu0 %v1351
  %1401 = vmatpush2.bf16.msra.mxu0 %v1350
  %1402 = vmatprep.subr.bf16.mxu0 %v1349
  %1403 = vmatpush2.bf16.msra.mxu0 %v1348
  %1404 = vmatprep.subr.bf16.mxu0 %v1347
  %1405 = vmatpush2.bf16.msra.mxu0 %v1346
  %1406 = vmatprep.subr.bf16.mxu0 %v1345
  %1407 = vmatpush2.bf16.msra.mxu0 %v1344
  %1408 = vmatprep.subr.bf16.mxu0 %v1343
  %1409 = vmatpush2.bf16.msra.mxu0 %v1342
  %1410 = vmatprep.subr.bf16.mxu0 %v1341
  %1411 = vmatpush2.bf16.msra.mxu0 %v1340
  %1412 = vmatprep.subr.bf16.mxu0 %v1339
  %1413 = vmatpush2.bf16.msra.mxu0 %v1338
  %1414 = vmatprep.subr.bf16.mxu0 %v1337
  %1415 = vmatpush2.bf16.msra.mxu0 %v1336
  %1416 = vmatprep.mubr.bf16.mxu0 %v694
  %1417 = vmatmul.mubr.bf16.gmra.mxu0 %v693
  %v1418 = vpop.f32.mrf.mxu0
  %v1419 = vadd.f32 %v1219, %v1418
  %v1420 = vpop.f32.mrf.mxu0
  %v1421 = vadd.f32 %v1223, %v1420
  %v1422 = vpop.f32.mrf.mxu0
  %v1423 = vadd.f32 %v1219, %v1422
  %v1424 = vpop.f32.mrf.mxu0
  %v1425 = vadd.f32 %v1223, %v1424
  %1426 = vmatprep.mubr.bf16.mxu0 %v696
  %1427 = vmatmul.mubr.bf16.gmra.mxu0 %v695
  %v1428 = vpop.f32.mrf.mxu0
  %v1429 = vadd.f32 %v1219, %v1428
  %v1430 = vpop.f32.mrf.mxu0
  %v1431 = vadd.f32 %v1223, %v1430
  %v1432 = vpop.f32.mrf.mxu0
  %v1433 = vadd.f32 %v1219, %v1432
  %v1434 = vpop.f32.mrf.mxu0
  %v1435 = vadd.f32 %v1223, %v1434
  %1436 = vmatprep.mubr.bf16.mxu0 %v698
  %1437 = vmatmul.mubr.bf16.gmra.mxu0 %v697
  %v1438 = vpop.f32.mrf.mxu0
  %v1439 = vadd.f32 %v1219, %v1438
  %v1440 = vpop.f32.mrf.mxu0
  %v1441 = vadd.f32 %v1223, %v1440
  %v1442 = vpop.f32.mrf.mxu0
  %v1443 = vadd.f32 %v1219, %v1442
  %v1444 = vpop.f32.mrf.mxu0
  %v1445 = vadd.f32 %v1223, %v1444
  %1446 = vmatprep.mubr.bf16.mxu0 %v700
  %1447 = vmatmul.mubr.bf16.gmra.mxu0 %v699
  %v1448 = vpop.f32.mrf.mxu0
  %v1449 = vadd.f32 %v1219, %v1448
  %v1450 = vpop.f32.mrf.mxu0
  %v1451 = vadd.f32 %v1223, %v1450
  %v1452 = vpop.f32.mrf.mxu0
  %v1453 = vadd.f32 %v1219, %v1452
  %v1454 = vpop.f32.mrf.mxu0
  %v1455 = vadd.f32 %v1223, %v1454
  %1456 = vdwg.mxu0
  %v1457 = vld [vmem:[%s9] sm:$0xff]
  %v1458 = vld [vmem:[%s9 + $0x8] sm:$0xff]
  %v1459 = vld [vmem:[%s9 + $0x10] sm:$0xff]
  %v1460 = vld [vmem:[%s9 + $0x18] sm:$0xff]
  %v1461 = vld [vmem:[%s9 + $0x20] sm:$0xff]
  %v1462 = vld [vmem:[%s9 + $0x28] sm:$0x3]
  %v1463 = vadd.f32 %v1106, %v1146
  %v1464 = vadd.f32 %v1108, %v1148
  %v1465 = vadd.f32 %v1110, %v1150
  %v1466 = vadd.f32 %v1112, %v1152
  %v1467 = vadd.f32 %v1116, %v1156
  %v1468 = vadd.f32 %v1118, %v1158
  %v1469 = vadd.f32 %v1120, %v1160
  %v1470 = vadd.f32 %v1122, %v1162
  %v1471 = vadd.f32 %v1126, %v1166
  %v1472 = vadd.f32 %v1128, %v1168
  %v1473 = vadd.f32 %v1130, %v1170
  %v1474 = vadd.f32 %v1132, %v1172
  %v1475 = vadd.f32 %v1136, %v1176
  %v1476 = vadd.f32 %v1138, %v1178
  %v1477 = vadd.f32 %v1140, %v1180
  %v1478 = vadd.f32 %v1142, %v1182
  %v1479 = vadd.f32 %v1463, %v1419
  %v1480 = vadd.f32 %v1464, %v1421
  %v1481 = vadd.f32 %v1465, %v1423
  %v1482 = vadd.f32 %v1466, %v1425
  %v1483 = vadd.f32 %v1467, %v1429
  %v1484 = vadd.f32 %v1468, %v1431
  %v1485 = vadd.f32 %v1469, %v1433
  %v1486 = vadd.f32 %v1470, %v1435
  %v1487 = vadd.f32 %v1471, %v1439
  %v1488 = vadd.f32 %v1472, %v1441
  %v1489 = vadd.f32 %v1473, %v1443
  %v1490 = vadd.f32 %v1474, %v1445
  %v1491 = vadd.f32 %v1475, %v1449
  %v1492 = vadd.f32 %v1476, %v1451
  %v1493 = vadd.f32 %v1477, %v1453
  %v1494 = vadd.f32 %v1478, %v1455
  %v1495 = vadd.f32 %v1479, %v1481
  %v1496 = vadd.f32 %v1495, %v1483
  %v1497 = vadd.f32 %v1496, %v1485
  %v1498 = vadd.f32 %v1497, %v1487
  %v1499 = vadd.f32 %v1498, %v1489
  %v1500 = vadd.f32 %v1499, %v1491
  %v1501 = vadd.f32 %v1500, %v1493
  %v1502 = vrot.slane %v1501, 4
  %v1503 = vadd.f32 %v1501, %v1502
  %v1504 = vrot.slane %v1503, 2
  %v1505 = vadd.f32 %v1503, %v1504
  %v1506 = vrot.slane %v1505, 1
  %v1507 = vadd.f32 %v1505, %v1506
  %v1508 = vadd.f32 %v1480, %v1482
  %v1509 = vadd.f32 %v1508, %v1484
  %v1510 = vadd.f32 %v1509, %v1486
  %v1511 = vadd.f32 %v1510, %v1488
  %v1512 = vadd.f32 %v1511, %v1490
  %v1513 = vadd.f32 %v1512, %v1492
  %v1514 = vadd.f32 %v1513, %v1494
  %v1515 = vrot.slane %v1514, 4
  %v1516 = vadd.f32 %v1514, %v1515
  %v1517 = vrot.slane %v1516, 2
  %v1518 = vadd.f32 %v1516, %v1517
  %v1519 = vrot.slane %v1518, 1
  %v1520 = vadd.f32 %v1518, %v1519
  %v1521 = vrcp.pop 64.0
  %v1522 = vmul.f32 %v1507, %v1521
  %v1523 = vmul.f32 %v1520, %v1521
  %1556 = vrot.lane.b32.xlu0 %v72, 112
  %v1557 = vpop.permute.xlu0 %1556
  %1558 = vrot.lane.b32.xlu0 %v73, 112
  %v1559 = vpop.permute.xlu0 %1558
  %1560 = vrot.lane.b32.xlu0 %v74, 112
  %v1561 = vpop.permute.xlu0 %1560
  %1562 = vrot.lane.b32.xlu0 %v75, 112
  %v1563 = vpop.permute.xlu0 %1562
  %1564 = vrot.lane.b32.xlu0 %v76, 112
  %v1565 = vpop.permute.xlu0 %1564
  %1566 = vrot.lane.b32.xlu0 %v77, 112
  %v1567 = vpop.permute.xlu0 %1566
  %1568 = vrot.lane.b32.xlu0 %v78, 112
  %v1569 = vpop.permute.xlu0 %1568
  %1570 = vrot.lane.b32.xlu0 %v79, 112
  %v1571 = vpop.permute.xlu0 %1570
  %1572 = vrot.lane.b32.xlu0 %v80, 112
  %v1573 = vpop.permute.xlu0 %1572
  %1574 = vrot.lane.b32.xlu0 %v81, 112
  %v1575 = vpop.permute.xlu0 %1574
  %1576 = vrot.lane.b32.xlu0 %v82, 112
  %v1577 = vpop.permute.xlu0 %1576
  %1578 = vrot.lane.b32.xlu0 %v83, 112
  %v1579 = vpop.permute.xlu0 %1578
  %1580 = vrot.lane.b32.xlu0 %v84, 112
  %v1581 = vpop.permute.xlu0 %1580
  %1582 = vrot.lane.b32.xlu0 %v85, 112
  %v1583 = vpop.permute.xlu0 %1582
  %1584 = vrot.lane.b32.xlu0 %v86, 112
  %v1585 = vpop.permute.xlu0 %1584
  %1586 = vrot.lane.b32.xlu0 %v87, 112
  %v1587 = vpop.permute.xlu0 %1586
  %1588 = vrot.lane.b32.xlu0 %v88, 112
  %v1589 = vpop.permute.xlu0 %1588
  %1590 = vrot.lane.b32.xlu0 %v89, 112
  %v1591 = vpop.permute.xlu0 %1590
  %1592 = vrot.lane.b32.xlu0 %v90, 112
  %v1593 = vpop.permute.xlu0 %1592
  %1594 = vrot.lane.b32.xlu0 %v91, 112
  %v1595 = vpop.permute.xlu0 %1594
  %1596 = vrot.lane.b32.xlu0 %v92, 112
  %v1597 = vpop.permute.xlu0 %1596
  %1598 = vrot.lane.b32.xlu0 %v93, 112
  %v1599 = vpop.permute.xlu0 %1598
  %1600 = vrot.lane.b32.xlu0 %v94, 112
  %v1601 = vpop.permute.xlu0 %1600
  %1602 = vrot.lane.b32.xlu0 %v95, 112
  %v1603 = vpop.permute.xlu0 %1602
  %1604 = vrot.lane.b32.xlu0 %v96, 112
  %v1605 = vpop.permute.xlu0 %1604
  %1606 = vrot.lane.b32.xlu0 %v97, 112
  %v1607 = vpop.permute.xlu0 %1606
  %1608 = vrot.lane.b32.xlu0 %v98, 112
  %v1609 = vpop.permute.xlu0 %1608
  %1610 = vrot.lane.b32.xlu0 %v99, 112
  %v1611 = vpop.permute.xlu0 %1610
  %1612 = vrot.lane.b32.xlu0 %v100, 112
  %v1613 = vpop.permute.xlu0 %1612
  %1614 = vrot.lane.b32.xlu0 %v101, 112
  %v1615 = vpop.permute.xlu0 %1614
  %1616 = vrot.lane.b32.xlu0 %v102, 112
  %v1617 = vpop.permute.xlu0 %1616
  %1618 = vrot.lane.b32.xlu0 %v103, 112
  %v1619 = vpop.permute.xlu0 %1618
  %1652 = vmatprep.subr.mxu0 0.0
  %1653 = vmatpush1.msra.mxu0 %v1587
  %1654 = vmatprep.subr.mxu0 0.0
  %1655 = vmatpush1.msra.mxu0 %v1585
  %1656 = vmatprep.subr.mxu0 0.0
  %1657 = vmatpush1.msra.mxu0 %v1583
  %1658 = vmatprep.subr.mxu0 0.0
  %1659 = vmatpush1.msra.mxu0 %v1581
  %1660 = vmatprep.subr.mxu0 0.0
  %1661 = vmatpush1.msra.mxu0 %v1579
  %1662 = vmatprep.subr.mxu0 0.0
  %1663 = vmatpush1.msra.mxu0 %v1577
  %1664 = vmatprep.subr.mxu0 0.0
  %1665 = vmatpush1.msra.mxu0 %v1575
  %1666 = vmatprep.subr.mxu0 0.0
  %1667 = vmatpush1.msra.mxu0 %v1573
  %1668 = vmatprep.subr.mxu0 0.0
  %1669 = vmatpush1.msra.mxu0 %v1571
  %1670 = vmatprep.subr.mxu0 0.0
  %1671 = vmatpush1.msra.mxu0 %v1569
  %1672 = vmatprep.subr.mxu0 0.0
  %1673 = vmatpush1.msra.mxu0 %v1567
  %1674 = vmatprep.subr.mxu0 0.0
  %1675 = vmatpush1.msra.mxu0 %v1565
  %1676 = vmatprep.subr.mxu0 0.0
  %1677 = vmatpush1.msra.mxu0 %v1563
  %1678 = vmatprep.subr.mxu0 0.0
  %1679 = vmatpush1.msra.mxu0 %v1561
  %1680 = vmatprep.subr.mxu0 0.0
  %1681 = vmatpush1.msra.mxu0 %v1559
  %1682 = vmatprep.subr.mxu0 0.0
  %1683 = vmatpush1.msra.mxu0 %v1557
  %1684 = vmatprep.subr.mxu0 0.0
  %1685 = vmatpush2.msra.mxu0 %v1619
  %1686 = vmatprep.subr.mxu0 0.0
  %1687 = vmatpush2.msra.mxu0 %v1617
  %1688 = vmatprep.subr.mxu0 0.0
  %1689 = vmatpush2.msra.mxu0 %v1615
  %1690 = vmatprep.subr.mxu0 0.0
  %1691 = vmatpush2.msra.mxu0 %v1613
  %1692 = vmatprep.subr.mxu0 0.0
  %1693 = vmatpush2.msra.mxu0 %v1611
  %1694 = vmatprep.subr.mxu0 0.0
  %1695 = vmatpush2.msra.mxu0 %v1609
  %1696 = vmatprep.subr.mxu0 0.0
  %1697 = vmatpush2.msra.mxu0 %v1607
  %1698 = vmatprep.subr.mxu0 0.0
  %1699 = vmatpush2.msra.mxu0 %v1605
  %1700 = vmatprep.subr.mxu0 0.0
  %1701 = vmatpush2.msra.mxu0 %v1603
  %1702 = vmatprep.subr.mxu0 0.0
  %1703 = vmatpush2.msra.mxu0 %v1601
  %1704 = vmatprep.subr.mxu0 0.0
  %1705 = vmatpush2.msra.mxu0 %v1599
  %1706 = vmatprep.subr.mxu0 0.0
  %1707 = vmatpush2.msra.mxu0 %v1597
  %1708 = vmatprep.subr.mxu0 0.0
  %1709 = vmatpush2.msra.mxu0 %v1595
  %1710 = vmatprep.subr.mxu0 0.0
  %1711 = vmatpush2.msra.mxu0 %v1593
  %1712 = vmatprep.subr.mxu0 0.0
  %1713 = vmatpush2.msra.mxu0 %v1591
  %1714 = vmatprep.subr.mxu0 0.0
  %1715 = vmatpush2.msra.mxu0 %v1589
  %1716 = vmatprep.mubr.f32.mxu0 %v1523
  %1717 = vmatmul.mubr.f32.gmra.mxu0 %v1522
  %v1718 = vpop.f32.mrf.mxu0
  %v1719 = vadd.f32 0.0, %v1718
  %v1720 = vpop.f32.mrf.mxu0
  %1721 = vdwg.mxu0
  %vm1722 = vcmask 261120
  %v1724 = vsel %vm1722, %v1719, 0
  %1726 = vmatprep.subr.mxu0 0.0
  %1727 = vmatpush1.msra.mxu0 0.0
  %1728 = vmatprep.subr.mxu0 0.0
  %1729 = vmatpush1.msra.mxu0 0.0
  %1730 = vmatprep.subr.mxu0 0.0
  %1731 = vmatpush1.msra.mxu0 0.0
  %1732 = vmatprep.subr.mxu0 0.0
  %1733 = vmatpush1.msra.mxu0 0.0
  %1734 = vmatprep.subr.mxu0 0.0
  %1735 = vmatpush1.msra.mxu0 0.0
  %1736 = vmatprep.subr.mxu0 0.0
  %1737 = vmatpush1.msra.mxu0 0.0
  %1738 = vmatprep.subr.mxu0 0.0
  %1739 = vmatpush1.msra.mxu0 0.0
  %1740 = vmatprep.subr.mxu0 0.0
  %1741 = vmatpush1.msra.mxu0 0.0
  %1742 = vmatprep.subr.mxu0 0.0
  %1743 = vmatpush1.msra.mxu0 0.0
  %1744 = vmatprep.subr.mxu0 0.0
  %1745 = vmatpush1.msra.mxu0 0.0
  %1746 = vmatprep.subr.mxu0 0.0
  %1747 = vmatpush1.msra.mxu0 0.0
  %1748 = vmatprep.subr.mxu0 0.0
  %1749 = vmatpush1.msra.mxu0 0.0
  %1750 = vmatprep.subr.mxu0 0.0
  %1751 = vmatpush1.msra.mxu0 %v1460
  %1752 = vmatprep.subr.mxu0 0.0
  %1753 = vmatpush1.msra.mxu0 %v1459
  %1754 = vmatprep.subr.mxu0 0.0
  %1755 = vmatpush1.msra.mxu0 %v1458
  %1756 = vmatprep.subr.mxu0 0.0
  %1757 = vmatpush1.msra.mxu0 %v1457
  %1758 = vmatprep.subr.mxu0 0.0
  %1759 = vmatpush2.msra.mxu0 0.0
  %1760 = vmatprep.subr.mxu0 0.0
  %1761 = vmatpush2.msra.mxu0 0.0
  %1762 = vmatprep.subr.mxu0 0.0
  %1763 = vmatpush2.msra.mxu0 0.0
  %1764 = vmatprep.subr.mxu0 0.0
  %1765 = vmatpush2.msra.mxu0 0.0
  %1766 = vmatprep.subr.mxu0 0.0
  %1767 = vmatpush2.msra.mxu0 0.0
  %1768 = vmatprep.subr.mxu0 0.0
  %1769 = vmatpush2.msra.mxu0 0.0
  %1770 = vmatprep.subr.mxu0 0.0
  %1771 = vmatpush2.msra.mxu0 0.0
  %1772 = vmatprep.subr.mxu0 0.0
  %1773 = vmatpush2.msra.mxu0 0.0
  %1774 = vmatprep.subr.mxu0 0.0
  %1775 = vmatpush2.msra.mxu0 0.0
  %1776 = vmatprep.subr.mxu0 0.0
  %1777 = vmatpush2.msra.mxu0 0.0
  %1778 = vmatprep.subr.mxu0 0.0
  %1779 = vmatpush2.msra.mxu0 0.0
  %1780 = vmatprep.subr.mxu0 0.0
  %1781 = vmatpush2.msra.mxu0 0.0
  %1782 = vmatprep.subr.mxu0 0.0
  %1783 = vmatpush2.msra.mxu0 0.0
  %1784 = vmatprep.subr.mxu0 0.0
  %1785 = vmatpush2.msra.mxu0 0.0
  %1786 = vmatprep.subr.mxu0 0.0
  %1787 = vmatpush2.msra.mxu0 0.0
  %1788 = vmatprep.subr.mxu0 0.0
  %1789 = vmatpush2.msra.mxu0 0.0
  %1790 = vmatprep.mubr.f32.mxu0 0.0
  %1791 = vmatmul.mubr.f32.gmra.mxu0 %v1724
  %v1792 = vpop.f32.mrf.mxu0
  %v1793 = vadd.f32 %v1462, %v1792
  %v1794 = vpop.f32.mrf.mxu0
  %1795 = vdwg.mxu0
  %v1796 = vmul.f32 %v1793, 0.5
  %v1797 = vmul.f32 %v1793, 0.044715
  %v1798 = vmul.f32 %v1797, %v1793
  %v1799 = vmul.f32 %v1798, %v1793
  %v1800 = vadd.f32 %v1793, %v1799
  %v1801 = vmul.f32 %v1800, 0.7978846
  %v1802 = vtanh.pop %v1801
  %v1803 = vadd.f32 %v1802, 1.0
  %v1804 = vmul.f32 %v1796, %v1803
  %v1806 = vrot.slane %v1462, 1
  %vm1808 = vcmask 64512
  %v1810 = vsel %vm1808, %v1804, 0
  %1812 = vmatprep.subr.mxu0 0.0
  %1813 = vmatpush1.msra.mxu0 0.0
  %1814 = vmatprep.subr.mxu0 0.0
  %1815 = vmatpush1.msra.mxu0 0.0
  %1816 = vmatprep.subr.mxu0 0.0
  %1817 = vmatpush1.msra.mxu0 0.0
  %1818 = vmatprep.subr.mxu0 0.0
  %1819 = vmatpush1.msra.mxu0 0.0
  %1820 = vmatprep.subr.mxu0 0.0
  %1821 = vmatpush1.msra.mxu0 0.0
  %1822 = vmatprep.subr.mxu0 0.0
  %1823 = vmatpush1.msra.mxu0 0.0
  %1824 = vmatprep.subr.mxu0 0.0
  %1825 = vmatpush1.msra.mxu0 0.0
  %1826 = vmatprep.subr.mxu0 0.0
  %1827 = vmatpush1.msra.mxu0 0.0
  %1828 = vmatprep.subr.mxu0 0.0
  %1829 = vmatpush1.msra.mxu0 0.0
  %1830 = vmatprep.subr.mxu0 0.0
  %1831 = vmatpush1.msra.mxu0 0.0
  %1832 = vmatprep.subr.mxu0 0.0
  %1833 = vmatpush1.msra.mxu0 0.0
  %1834 = vmatprep.subr.mxu0 0.0
  %1835 = vmatpush1.msra.mxu0 0.0
  %1836 = vmatprep.subr.mxu0 0.0
  %1837 = vmatpush1.msra.mxu0 0.0
  %1838 = vmatprep.subr.mxu0 0.0
  %1839 = vmatpush1.msra.mxu0 0.0
  %1840 = vmatprep.subr.mxu0 0.0
  %1841 = vmatpush1.msra.mxu0 0.0
  %1842 = vmatprep.subr.mxu0 0.0
  %1843 = vmatpush1.msra.mxu0 %v1461
  %1844 = vmatprep.subr.mxu0 0.0
  %1845 = vmatpush2.msra.mxu0 0.0
  %1846 = vmatprep.subr.mxu0 0.0
  %1847 = vmatpush2.msra.mxu0 0.0
  %1848 = vmatprep.subr.mxu0 0.0
  %1849 = vmatpush2.msra.mxu0 0.0
  %1850 = vmatprep.subr.mxu0 0.0
  %1851 = vmatpush2.msra.mxu0 0.0
  %1852 = vmatprep.subr.mxu0 0.0
  %1853 = vmatpush2.msra.mxu0 0.0
  %1854 = vmatprep.subr.mxu0 0.0
  %1855 = vmatpush2.msra.mxu0 0.0
  %1856 = vmatprep.subr.mxu0 0.0
  %1857 = vmatpush2.msra.mxu0 0.0
  %1858 = vmatprep.subr.mxu0 0.0
  %1859 = vmatpush2.msra.mxu0 0.0
  %1860 = vmatprep.subr.mxu0 0.0
  %1861 = vmatpush2.msra.mxu0 0.0
  %1862 = vmatprep.subr.mxu0 0.0
  %1863 = vmatpush2.msra.mxu0 0.0
  %1864 = vmatprep.subr.mxu0 0.0
  %1865 = vmatpush2.msra.mxu0 0.0
  %1866 = vmatprep.subr.mxu0 0.0
  %1867 = vmatpush2.msra.mxu0 0.0
  %1868 = vmatprep.subr.mxu0 0.0
  %1869 = vmatpush2.msra.mxu0 0.0
  %1870 = vmatprep.subr.mxu0 0.0
  %1871 = vmatpush2.msra.mxu0 0.0
  %1872 = vmatprep.subr.mxu0 0.0
  %1873 = vmatpush2.msra.mxu0 0.0
  %1874 = vmatprep.subr.mxu0 0.0
  %1875 = vmatpush2.msra.mxu0 0.0
  %1876 = vmatprep.mubr.f32.mxu0 0.0
  %1877 = vmatmul.mubr.f32.gmra.mxu0 %v1810
  %v1878 = vpop.f32.mrf.mxu0
  %v1879 = vadd.f32 %v1806, %v1878
  %v1880 = vpop.f32.mrf.mxu0
  %1881 = vdwg.mxu0
  %1883 = vrot.lane.b32.xlu0 %v1879, 96
  %v1884 = vpop.permute.xlu0 %1883
  %v1886 = vmax.f32 %v1879, %v1884
  %1887 = vrot.lane.b32.xlu0 %v1879, 64
  %v1888 = vpop.permute.xlu0 %1887
  %v1890 = vmax.f32 %v1886, %v1888
  %v1891 = vsub.f32 %v1879, %v1890
  %v1892 = vmul.f32 %v1891, 1.442695
  %v1893 = vpow.pop %v1892
  %1895 = vrot.lane.b32.xlu0 %v1890, 32
  %v1896 = vpop.permute.xlu0 %1895
  %v1898 = vsub.f32 %v1879, %v1896
  %v1899 = vmul.f32 %v1898, 1.442695
  %v1900 = vpow.pop %v1899
  %1901 = vrot.lane.b32.xlu0 %v1890, 64
  %v1902 = vpop.permute.xlu0 %1901
  %v1904 = vsub.f32 %v1879, %v1902
  %v1905 = vmul.f32 %v1904, 1.442695
  %v1906 = vpow.pop %v1905
  %1908 = vrot.lane.b32.xlu0 %v1900, 96
  %v1909 = vpop.permute.xlu0 %1908
  %v1911 = vadd.f32 %v1893, %v1909
  %1913 = vrot.lane.b32.xlu0 %v1906, 64
  %v1914 = vpop.permute.xlu0 %1913
  %v1916 = vadd.f32 %v1911, %v1914
  %v1917 = vrcp.pop %v1916
  %v1918 = vmul.f32 1.0, %v1917
  %v1919 = vmul.f32 %v1893, %v1918
  %1921 = vrot.lane.b32.xlu0 %v1918, 32
  %v1922 = vpop.permute.xlu0 %1921
  %v1924 = vmul.f32 %v1900, %v1922
  %1925 = vrot.lane.b32.xlu0 %v1918, 64
  %v1926 = vpop.permute.xlu0 %1925
  %v1928 = vmul.f32 %v1906, %v1926
  %v1930 = vrot.slane %v1924, 7
  %1931 = vrot.lane.b32.xlu0 %v1930, 96
  %v1932 = vpop.permute.xlu0 %1931
  %v1935 = vrot.slane %v1928, 6
  %1936 = vrot.lane.b32.xlu0 %v1935, 64
  %v1937 = vpop.permute.xlu0 %1936
  %vm1939 = vcmask 1040384
  %v1940 = vsel %vm1939, %v1919, %v1932
  %vm1941 = vcmask 1041408
  %v1942 = vsel %vm1941, %v1940, %v1937
  %v1944 = vsel %vm1722, %v1942, 0
  %1946 = vmatprep.subr.mxu0 0.0
  %1947 = vmatpush1.msra.mxu0 0.0
  %1948 = vmatprep.subr.mxu0 0.0
  %1949 = vmatpush1.msra.mxu0 0.0
  %1950 = vmatprep.subr.mxu0 0.0
  %1951 = vmatpush1.msra.mxu0 0.0
  %1952 = vmatprep.subr.mxu0 0.0
  %1953 = vmatpush1.msra.mxu0 0.0
  %1954 = vmatprep.subr.mxu0 0.0
  %1955 = vmatpush1.msra.mxu0 0.0
  %1956 = vmatprep.subr.mxu0 0.0
  %1957 = vmatpush1.msra.mxu0 0.0
  %1958 = vmatprep.subr.mxu0 0.0
  %1959 = vmatpush1.msra.mxu0 0.0
  %1960 = vmatprep.subr.mxu0 0.0
  %1961 = vmatpush1.msra.mxu0 0.0
  %1962 = vmatprep.subr.mxu0 0.0
  %1963 = vmatpush1.msra.mxu0 0.0
  %1964 = vmatprep.subr.mxu0 0.0
  %1965 = vmatpush1.msra.mxu0 0.0
  %1966 = vmatprep.subr.mxu0 0.0
  %1967 = vmatpush1.msra.mxu0 0.0
  %1968 = vmatprep.subr.mxu0 0.0
  %1969 = vmatpush1.msra.mxu0 0.0
  %1970 = vmatprep.subr.mxu0 %v69
  %1971 = vmatpush1.msra.mxu0 %v68
  %1972 = vmatprep.subr.mxu0 %v67
  %1973 = vmatpush1.msra.mxu0 %v66
  %1974 = vmatprep.subr.mxu0 %v65
  %1975 = vmatpush1.msra.mxu0 %v64
  %1976 = vmatprep.subr.mxu0 %v63
  %1977 = vmatpush1.msra.mxu0 %v62
  %1978 = vmatprep.subr.mxu0 0.0
  %1979 = vmatpush2.msra.mxu0 0.0
  %1980 = vmatprep.subr.mxu0 0.0
  %1981 = vmatpush2.msra.mxu0 0.0
  %1982 = vmatprep.subr.mxu0 0.0
  %1983 = vmatpush2.msra.mxu0 0.0
  %1984 = vmatprep.subr.mxu0 0.0
  %1985 = vmatpush2.msra.mxu0 0.0
  %1986 = vmatprep.subr.mxu0 0.0
  %1987 = vmatpush2.msra.mxu0 0.0
  %1988 = vmatprep.subr.mxu0 0.0
  %1989 = vmatpush2.msra.mxu0 0.0
  %1990 = vmatprep.subr.mxu0 0.0
  %1991 = vmatpush2.msra.mxu0 0.0
  %1992 = vmatprep.subr.mxu0 0.0
  %1993 = vmatpush2.msra.mxu0 0.0
  %1994 = vmatprep.subr.mxu0 0.0
  %1995 = vmatpush2.msra.mxu0 0.0
  %1996 = vmatprep.subr.mxu0 0.0
  %1997 = vmatpush2.msra.mxu0 0.0
  %1998 = vmatprep.subr.mxu0 0.0
  %1999 = vmatpush2.msra.mxu0 0.0
  %2000 = vmatprep.subr.mxu0 0.0
  %2001 = vmatpush2.msra.mxu0 0.0
  %2002 = vmatprep.subr.mxu0 0.0
  %2003 = vmatpush2.msra.mxu0 0.0
  %2004 = vmatprep.subr.mxu0 0.0
  %2005 = vmatpush2.msra.mxu0 0.0
  %2006 = vmatprep.subr.mxu0 0.0
  %2007 = vmatpush2.msra.mxu0 0.0
  %2008 = vmatprep.subr.mxu0 0.0
  %2009 = vmatpush2.msra.mxu0 0.0
  %2010 = vmatprep.mubr.f32.mxu0 0.0
  %2011 = vmatmul.mubr.f32.gmra.mxu0 %v1944
  %v2012 = vpop.f32.mrf.mxu0
  %v2013 = vadd.f32 0.0, %v2012
  %v2014 = vpop.f32.mrf.mxu0
  %v2015 = vadd.f32 0.0, %v2014
  %2016 = vdwg.mxu0
  %v2017 = vlaneseq
  %v2018 = vshrl.u32 %v2017, 7
  %v2019 = vsub.s32 0, %v2018
  %v2020 = vrot.slane %v2013, %v2019
  %v2021 = vlaneseq
  %v2022 = vshrl.u32 %v2021, 7
  %v2023 = vsub.s32 0, %v2022
  %v2024 = vrot.slane %v2015, %v2023
  %v2025 = vmul.f32 %v1106, %v2020
  %v2026 = vmul.f32 %v1108, %v2024
  %v2027 = vmul.f32 %v1110, %v2020
  %v2028 = vmul.f32 %v1112, %v2024
  %v2029 = vmul.f32 %v1116, %v2020
  %v2030 = vmul.f32 %v1118, %v2024
  %v2031 = vmul.f32 %v1120, %v2020
  %v2032 = vmul.f32 %v1122, %v2024
  %v2033 = vmul.f32 %v1126, %v2020
  %v2034 = vmul.f32 %v1128, %v2024
  %v2035 = vmul.f32 %v1130, %v2020
  %v2036 = vmul.f32 %v1132, %v2024
  %v2037 = vmul.f32 %v1136, %v2020
  %v2038 = vmul.f32 %v1138, %v2024
  %v2039 = vmul.f32 %v1140, %v2020
  %v2040 = vmul.f32 %v1142, %v2024
  %v2041 = vlaneseq
  %v2042 = vshrl.u32 %v2041, 7
  %v2043 = vsub.s32 1, %v2042
  %v2044 = vrot.slane %v2013, %v2043
  %v2045 = vlaneseq
  %v2046 = vshrl.u32 %v2045, 7
  %v2047 = vsub.s32 1, %v2046
  %v2048 = vrot.slane %v2015, %v2047
  %v2049 = vmul.f32 %v1146, %v2044
  %v2050 = vmul.f32 %v1148, %v2048
  %v2051 = vmul.f32 %v1150, %v2044
  %v2052 = vmul.f32 %v1152, %v2048
  %v2053 = vmul.f32 %v1156, %v2044
  %v2054 = vmul.f32 %v1158, %v2048
  %v2055 = vmul.f32 %v1160, %v2044
  %v2056 = vmul.f32 %v1162, %v2048
  %v2057 = vmul.f32 %v1166, %v2044
  %v2058 = vmul.f32 %v1168, %v2048
  %v2059 = vmul.f32 %v1170, %v2044
  %v2060 = vmul.f32 %v1172, %v2048
  %v2061 = vmul.f32 %v1176, %v2044
  %v2062 = vmul.f32 %v1178, %v2048
  %v2063 = vmul.f32 %v1180, %v2044
  %v2064 = vmul.f32 %v1182, %v2048
  %v2065 = vadd.f32 %v2025, %v2049
  %v2066 = vadd.f32 %v2026, %v2050
  %v2067 = vadd.f32 %v2027, %v2051
  %v2068 = vadd.f32 %v2028, %v2052
  %v2069 = vadd.f32 %v2029, %v2053
  %v2070 = vadd.f32 %v2030, %v2054
  %v2071 = vadd.f32 %v2031, %v2055
  %v2072 = vadd.f32 %v2032, %v2056
  %v2073 = vadd.f32 %v2033, %v2057
  %v2074 = vadd.f32 %v2034, %v2058
  %v2075 = vadd.f32 %v2035, %v2059
  %v2076 = vadd.f32 %v2036, %v2060
  %v2077 = vadd.f32 %v2037, %v2061
  %v2078 = vadd.f32 %v2038, %v2062
  %v2079 = vadd.f32 %v2039, %v2063
  %v2080 = vadd.f32 %v2040, %v2064
  %v2081 = vlaneseq
  %v2082 = vshrl.u32 %v2081, 7
  %v2083 = vsub.s32 2, %v2082
  %v2084 = vrot.slane %v2013, %v2083
  %v2085 = vlaneseq
  %v2086 = vshrl.u32 %v2085, 7
  %v2087 = vsub.s32 2, %v2086
  %v2088 = vrot.slane %v2015, %v2087
  %v2089 = vmul.f32 %v1419, %v2084
  %v2090 = vmul.f32 %v1421, %v2088
  %v2091 = vmul.f32 %v1423, %v2084
  %v2092 = vmul.f32 %v1425, %v2088
  %v2093 = vmul.f32 %v1429, %v2084
  %v2094 = vmul.f32 %v1431, %v2088
  %v2095 = vmul.f32 %v1433, %v2084
  %v2096 = vmul.f32 %v1435, %v2088
  %v2097 = vmul.f32 %v1439, %v2084
  %v2098 = vmul.f32 %v1441, %v2088
  %v2099 = vmul.f32 %v1443, %v2084
  %v2100 = vmul.f32 %v1445, %v2088
  %v2101 = vmul.f32 %v1449, %v2084
  %v2102 = vmul.f32 %v1451, %v2088
  %v2103 = vmul.f32 %v1453, %v2084
  %v2104 = vmul.f32 %v1455, %v2088
  %v2105 = vadd.f32 %v2065, %v2089
  %v2106 = vadd.f32 %v2066, %v2090
  %v2107 = vadd.f32 %v2067, %v2091
  %v2108 = vadd.f32 %v2068, %v2092
  %v2109 = vadd.f32 %v2069, %v2093
  %v2110 = vadd.f32 %v2070, %v2094
  %v2111 = vadd.f32 %v2071, %v2095
  %v2112 = vadd.f32 %v2072, %v2096
  %v2113 = vadd.f32 %v2073, %v2097
  %v2114 = vadd.f32 %v2074, %v2098
  %v2115 = vadd.f32 %v2075, %v2099
  %v2116 = vadd.f32 %v2076, %v2100
  %v2117 = vadd.f32 %v2077, %v2101
  %v2118 = vadd.f32 %v2078, %v2102
  %v2119 = vadd.f32 %v2079, %v2103
  %v2120 = vadd.f32 %v2080, %v2104
  %v2121 = vld [vmem:[%s10] sm:$0xff]
  %v2122 = vld [vmem:[%s10 + $0x8] sm:$0xff]
  %v2123 = vld [vmem:[%s10 + $0x10] sm:$0x1f]
  %v2124 = vpack.c.bf16 %v2107, %v2105
  %v2125 = vpack.c.bf16 %v2108, %v2106
  %v2126 = vpack.c.bf16 %v2111, %v2109
  %v2127 = vpack.c.bf16 %v2112, %v2110
  %v2128 = vpack.c.bf16 %v2115, %v2113
  %v2129 = vpack.c.bf16 %v2116, %v2114
  %v2130 = vpack.c.bf16 %v2119, %v2117
  %v2131 = vpack.c.bf16 %v2120, %v2118
  %v2132 = vld [vmem:[%s4] sm:$0xf]
  %v2133 = vld [vmem:[%s4 + $0x8] sm:$0xf]
  %v2134 = vld [vmem:[%s4 + $0x10] sm:$0xf]
  %v2135 = vld [vmem:[%s4 + $0x18] sm:$0xf]
  %v2136 = vld [vmem:[%s4 + $0x20] sm:$0xf]
  %v2137 = vld [vmem:[%s4 + $0x28] sm:$0xf]
  %v2138 = vld [vmem:[%s4 + $0x30] sm:$0xf]
  %v2139 = vld [vmem:[%s4 + $0x38] sm:$0xf]
  %v2140 = vld [vmem:[%s4 + $0x40] sm:$0xf]
  %v2141 = vld [vmem:[%s4 + $0x48] sm:$0xf]
  %v2142 = vld [vmem:[%s4 + $0x50] sm:$0xf]
  %v2143 = vld [vmem:[%s4 + $0x58] sm:$0xf]
  %v2144 = vld [vmem:[%s4 + $0x60] sm:$0xf]
  %v2145 = vld [vmem:[%s4 + $0x68] sm:$0xf]
  %v2146 = vld [vmem:[%s4 + $0x70] sm:$0xf]
  %v2147 = vld [vmem:[%s4 + $0x78] sm:$0xf]
  %v2148 = vld [vmem:[%s4 + $0x80] sm:$0xf]
  %v2149 = vld [vmem:[%s4 + $0x88] sm:$0xf]
  %v2150 = vld [vmem:[%s4 + $0x90] sm:$0xf]
  %v2151 = vld [vmem:[%s4 + $0x98] sm:$0xf]
  %v2152 = vld [vmem:[%s4 + $0xa0] sm:$0xf]
  %v2153 = vld [vmem:[%s4 + $0xa8] sm:$0xf]
  %v2154 = vld [vmem:[%s4 + $0xb0] sm:$0xf]
  %v2155 = vld [vmem:[%s4 + $0xb8] sm:$0xf]
  %v2156 = vld [vmem:[%s4 + $0xc0] sm:$0xf]
  %v2157 = vld [vmem:[%s4 + $0xc8] sm:$0xf]
  %v2158 = vld [vmem:[%s4 + $0xd0] sm:$0xf]
  %v2159 = vld [vmem:[%s4 + $0xd8] sm:$0xf]
  %v2160 = vld [vmem:[%s4 + $0xe0] sm:$0xf]
  %v2161 = vld [vmem:[%s4 + $0xe8] sm:$0xf]
  %v2162 = vld [vmem:[%s4 + $0xf0] sm:$0xf]
  %v2163 = vld [vmem:[%s4 + $0xf8] sm:$0xf]
  %v2196 = vunpack.c.l.b16 %v2132
  %v2197 = vunpack.c.l.b16 %v2133
  %v2198 = vunpack.c.l.b16 %v2134
  %v2199 = vunpack.c.l.b16 %v2135
  %v2200 = vunpack.c.l.b16 %v2136
  %v2201 = vunpack.c.l.b16 %v2137
  %v2202 = vunpack.c.l.b16 %v2138
  %v2203 = vunpack.c.l.b16 %v2139
  %v2204 = vunpack.c.l.b16 %v2140
  %v2205 = vunpack.c.l.b16 %v2141
  %v2206 = vunpack.c.l.b16 %v2142
  %v2207 = vunpack.c.l.b16 %v2143
  %v2208 = vunpack.c.l.b16 %v2144
  %v2209 = vunpack.c.l.b16 %v2145
  %v2210 = vunpack.c.l.b16 %v2146
  %v2211 = vunpack.c.l.b16 %v2147
  %v2212 = vunpack.c.l.b16 %v2148
  %v2213 = vunpack.c.l.b16 %v2149
  %v2214 = vunpack.c.l.b16 %v2150
  %v2215 = vunpack.c.l.b16 %v2151
  %v2216 = vunpack.c.l.b16 %v2152
  %v2217 = vunpack.c.l.b16 %v2153
  %v2218 = vunpack.c.l.b16 %v2154
  %v2219 = vunpack.c.l.b16 %v2155
  %v2220 = vunpack.c.l.b16 %v2156
  %v2221 = vunpack.c.l.b16 %v2157
  %v2222 = vunpack.c.l.b16 %v2158
  %v2223 = vunpack.c.l.b16 %v2159
  %v2224 = vunpack.c.l.b16 %v2160
  %v2225 = vunpack.c.l.b16 %v2161
  %v2226 = vunpack.c.l.b16 %v2162
  %v2227 = vunpack.c.l.b16 %v2163
  %v2228 = vpack.c.b16 %v2197, %v2196
  %v2229 = vpack.c.b16 %v2199, %v2198
  %v2230 = vpack.c.b16 %v2201, %v2200
  %v2231 = vpack.c.b16 %v2203, %v2202
  %v2232 = vpack.c.b16 %v2205, %v2204
  %v2233 = vpack.c.b16 %v2207, %v2206
  %v2234 = vpack.c.b16 %v2209, %v2208
  %v2235 = vpack.c.b16 %v2211, %v2210
  %v2236 = vpack.c.b16 %v2213, %v2212
  %v2237 = vpack.c.b16 %v2215, %v2214
  %v2238 = vpack.c.b16 %v2217, %v2216
  %v2239 = vpack.c.b16 %v2219, %v2218
  %v2240 = vpack.c.b16 %v2221, %v2220
  %v2241 = vpack.c.b16 %v2223, %v2222
  %v2242 = vpack.c.b16 %v2225, %v2224
  %v2243 = vpack.c.b16 %v2227, %v2226
  %2260 = vmatprep.subr.bf16.mxu0 0
  %2261 = vmatpush1.bf16.msra.mxu0 %v2235
  %2262 = vmatprep.subr.bf16.mxu0 0
  %2263 = vmatpush1.bf16.msra.mxu0 %v2234
  %2264 = vmatprep.subr.bf16.mxu0 0
  %2265 = vmatpush1.bf16.msra.mxu0 %v2233
  %2266 = vmatprep.subr.bf16.mxu0 0
  %2267 = vmatpush1.bf16.msra.mxu0 %v2232
  %2268 = vmatprep.subr.bf16.mxu0 0
  %2269 = vmatpush1.bf16.msra.mxu0 %v2231
  %2270 = vmatprep.subr.bf16.mxu0 0
  %2271 = vmatpush1.bf16.msra.mxu0 %v2230
  %2272 = vmatprep.subr.bf16.mxu0 0
  %2273 = vmatpush1.bf16.msra.mxu0 %v2229
  %2274 = vmatprep.subr.bf16.mxu0 0
  %2275 = vmatpush1.bf16.msra.mxu0 %v2228
  %2276 = vmatprep.subr.bf16.mxu0 0
  %2277 = vmatpush2.bf16.msra.mxu0 %v2243
  %2278 = vmatprep.subr.bf16.mxu0 0
  %2279 = vmatpush2.bf16.msra.mxu0 %v2242
  %2280 = vmatprep.subr.bf16.mxu0 0
  %2281 = vmatpush2.bf16.msra.mxu0 %v2241
  %2282 = vmatprep.subr.bf16.mxu0 0
  %2283 = vmatpush2.bf16.msra.mxu0 %v2240
  %2284 = vmatprep.subr.bf16.mxu0 0
  %2285 = vmatpush2.bf16.msra.mxu0 %v2239
  %2286 = vmatprep.subr.bf16.mxu0 0
  %2287 = vmatpush2.bf16.msra.mxu0 %v2238
  %2288 = vmatprep.subr.bf16.mxu0 0
  %2289 = vmatpush2.bf16.msra.mxu0 %v2237
  %2290 = vmatprep.subr.bf16.mxu0 0
  %2291 = vmatpush2.bf16.msra.mxu0 %v2236
  %2292 = vmatprep.mubr.bf16.mxu0 %v2125
  %2293 = vmatmul.mubr.bf16.gmra.mxu0 %v2124
  %v2294 = vpop.f32.mrf.mxu0
  %v2295 = vadd.f32 %v864, %v2294
  %v2296 = vpop.f32.mrf.mxu0
  %v2297 = vpop.f32.mrf.mxu0
  %v2298 = vadd.f32 %v867, %v2297
  %v2299 = vpop.f32.mrf.mxu0
  %2300 = vmatprep.mubr.bf16.mxu0 %v2127
  %2301 = vmatmul.mubr.bf16.gmra.mxu0 %v2126
  %v2302 = vpop.f32.mrf.mxu0
  %v2303 = vadd.f32 %v872, %v2302
  %v2304 = vpop.f32.mrf.mxu0
  %v2305 = vpop.f32.mrf.mxu0
  %v2306 = vadd.f32 %v875, %v2305
  %v2307 = vpop.f32.mrf.mxu0
  %2308 = vmatprep.mubr.bf16.mxu0 %v2129
  %2309 = vmatmul.mubr.bf16.gmra.mxu0 %v2128
  %v2310 = vpop.f32.mrf.mxu0
  %v2311 = vadd.f32 %v880, %v2310
  %v2312 = vpop.f32.mrf.mxu0
  %v2313 = vpop.f32.mrf.mxu0
  %v2314 = vadd.f32 %v883, %v2313
  %v2315 = vpop.f32.mrf.mxu0
  %2316 = vmatprep.mubr.bf16.mxu0 %v2131
  %2317 = vmatmul.mubr.bf16.gmra.mxu0 %v2130
  %v2318 = vpop.f32.mrf.mxu0
  %v2319 = vadd.f32 %v888, %v2318
  %v2320 = vpop.f32.mrf.mxu0
  %v2321 = vpop.f32.mrf.mxu0
  %v2322 = vadd.f32 %v891, %v2321
  %v2323 = vpop.f32.mrf.mxu0
  %2324 = vdwg.mxu0
  %v2325 = vlaneseq
  %v2326 = vshrl.u32 %v2325, 7
  %v2327 = vsub.s32 0, %v2326
  %v2328 = vrot.slane %v2123, %v2327
  %v2329 = vadd.f32 %v2295, %v2328
  %v2330 = vadd.f32 %v2298, %v2328
  %v2331 = vadd.f32 %v2303, %v2328
  %v2332 = vadd.f32 %v2306, %v2328
  %v2333 = vadd.f32 %v2311, %v2328
  %v2334 = vadd.f32 %v2314, %v2328
  %v2335 = vadd.f32 %v2319, %v2328
  %v2336 = vadd.f32 %v2322, %v2328
  %v2337 = vpack.c.bf16 %v2330, %v2329
  %v2338 = vpack.c.bf16 %v2332, %v2331
  %v2339 = vpack.c.bf16 %v2334, %v2333
  %v2340 = vpack.c.bf16 %v2336, %v2335
  %v2341 = vld [vmem:[%s5] sm:$0xf]
  %v2342 = vld [vmem:[%s5 + $0x4] sm:$0xf]
  %v2343 = vld [vmem:[%s5 + $0x8] sm:$0xf]
  %v2344 = vld [vmem:[%s5 + $0xc] sm:$0xf]
  %v2345 = vld [vmem:[%s5 + $0x10] sm:$0xf]
  %v2346 = vld [vmem:[%s5 + $0x14] sm:$0xf]
  %v2347 = vld [vmem:[%s5 + $0x18] sm:$0xf]
  %v2348 = vld [vmem:[%s5 + $0x1c] sm:$0xf]
  %v2349 = vld [vmem:[%s5 + $0x20] sm:$0xf]
  %v2350 = vld [vmem:[%s5 + $0x24] sm:$0xf]
  %v2351 = vld [vmem:[%s5 + $0x28] sm:$0xf]
  %v2352 = vld [vmem:[%s5 + $0x2c] sm:$0xf]
  %v2353 = vld [vmem:[%s5 + $0x30] sm:$0xf]
  %v2354 = vld [vmem:[%s5 + $0x34] sm:$0xf]
  %v2355 = vld [vmem:[%s5 + $0x38] sm:$0xf]
  %v2356 = vld [vmem:[%s5 + $0x3c] sm:$0xf]
  %v2357 = vlaneseq
  %v2358 = vshrl.u32 %v2357, 7
  %v2359 = vsub.s32 1, %v2358
  %v2360 = vrot.slane %v2123, %v2359
  %v2377 = vunpack.c.l.b16 %v2341
  %v2378 = vunpack.c.l.b16 %v2342
  %v2379 = vunpack.c.l.b16 %v2343
  %v2380 = vunpack.c.l.b16 %v2344
  %v2381 = vunpack.c.l.b16 %v2345
  %v2382 = vunpack.c.l.b16 %v2346
  %v2383 = vunpack.c.l.b16 %v2347
  %v2384 = vunpack.c.l.b16 %v2348
  %v2385 = vunpack.c.l.b16 %v2349
  %v2386 = vunpack.c.l.b16 %v2350
  %v2387 = vunpack.c.l.b16 %v2351
  %v2388 = vunpack.c.l.b16 %v2352
  %v2389 = vunpack.c.l.b16 %v2353
  %v2390 = vunpack.c.l.b16 %v2354
  %v2391 = vunpack.c.l.b16 %v2355
  %v2392 = vunpack.c.l.b16 %v2356
  %v2393 = vpack.c.b16 %v2378, %v2377
  %v2394 = vpack.c.b16 %v2380, %v2379
  %v2395 = vpack.c.b16 %v2382, %v2381
  %v2396 = vpack.c.b16 %v2384, %v2383
  %v2397 = vpack.c.b16 %v2386, %v2385
  %v2398 = vpack.c.b16 %v2388, %v2387
  %v2399 = vpack.c.b16 %v2390, %v2389
  %v2400 = vpack.c.b16 %v2392, %v2391
  %2409 = vmatprep.subr.bf16.mxu0 0
  %2410 = vmatpush1.bf16.msra.mxu0 %v2400
  %2411 = vmatprep.subr.bf16.mxu0 0
  %2412 = vmatpush1.bf16.msra.mxu0 %v2399
  %2413 = vmatprep.subr.bf16.mxu0 0
  %2414 = vmatpush1.bf16.msra.mxu0 %v2398
  %2415 = vmatprep.subr.bf16.mxu0 0
  %2416 = vmatpush1.bf16.msra.mxu0 %v2397
  %2417 = vmatprep.subr.bf16.mxu0 0
  %2418 = vmatpush1.bf16.msra.mxu0 %v2396
  %2419 = vmatprep.subr.bf16.mxu0 0
  %2420 = vmatpush1.bf16.msra.mxu0 %v2395
  %2421 = vmatprep.subr.bf16.mxu0 0
  %2422 = vmatpush1.bf16.msra.mxu0 %v2394
  %2423 = vmatprep.subr.bf16.mxu0 0
  %2424 = vmatpush1.bf16.msra.mxu0 %v2393
  %2425 = vmatprep.subr.bf16.mxu0 0
  %2426 = vmatpush2.bf16.msra.mxu0 0
  %2427 = vmatprep.subr.bf16.mxu0 0
  %2428 = vmatpush2.bf16.msra.mxu0 0
  %2429 = vmatprep.subr.bf16.mxu0 0
  %2430 = vmatpush2.bf16.msra.mxu0 0
  %2431 = vmatprep.subr.bf16.mxu0 0
  %2432 = vmatpush2.bf16.msra.mxu0 0
  %2433 = vmatprep.subr.bf16.mxu0 0
  %2434 = vmatpush2.bf16.msra.mxu0 0
  %2435 = vmatprep.subr.bf16.mxu0 0
  %2436 = vmatpush2.bf16.msra.mxu0 0
  %2437 = vmatprep.subr.bf16.mxu0 0
  %2438 = vmatpush2.bf16.msra.mxu0 0
  %2439 = vmatprep.subr.bf16.mxu0 0
  %2440 = vmatpush2.bf16.msra.mxu0 0
  %2441 = vmatprep.mubr.bf16.mxu0 0
  %2442 = vmatmul.mubr.bf16.gmra.mxu0 %v2337
  %v2443 = vpop.f32.mrf.mxu0
  %v2444 = vadd.f32 %v2360, %v2443
  %v2445 = vpop.f32.mrf.mxu0
  %v2446 = vpop.f32.mrf.mxu0
  %v2447 = vadd.f32 %v2360, %v2446
  %v2448 = vpop.f32.mrf.mxu0
  %2449 = vmatprep.mubr.bf16.mxu0 0
  %2450 = vmatmul.mubr.bf16.gmra.mxu0 %v2338
  %v2451 = vpop.f32.mrf.mxu0
  %v2452 = vadd.f32 %v2360, %v2451
  %v2453 = vpop.f32.mrf.mxu0
  %v2454 = vpop.f32.mrf.mxu0
  %v2455 = vadd.f32 %v2360, %v2454
  %v2456 = vpop.f32.mrf.mxu0
  %2457 = vmatprep.mubr.bf16.mxu0 0
  %2458 = vmatmul.mubr.bf16.gmra.mxu0 %v2339
  %v2459 = vpop.f32.mrf.mxu0
  %v2460 = vadd.f32 %v2360, %v2459
  %v2461 = vpop.f32.mrf.mxu0
  %v2462 = vpop.f32.mrf.mxu0
  %v2463 = vadd.f32 %v2360, %v2462
  %v2464 = vpop.f32.mrf.mxu0
  %2465 = vmatprep.mubr.bf16.mxu0 0
  %2466 = vmatmul.mubr.bf16.gmra.mxu0 %v2340
  %v2467 = vpop.f32.mrf.mxu0
  %v2468 = vadd.f32 %v2360, %v2467
  %v2469 = vpop.f32.mrf.mxu0
  %v2470 = vpop.f32.mrf.mxu0
  %v2471 = vadd.f32 %v2360, %v2470
  %v2472 = vpop.f32.mrf.mxu0
  %2473 = vdwg.mxu0
  %v2474 = vmul.f32 %v2444, 0.5
  %v2475 = vmul.f32 %v2447, 0.5
  %v2476 = vmul.f32 %v2452, 0.5
  %v2477 = vmul.f32 %v2455, 0.5
  %v2478 = vmul.f32 %v2460, 0.5
  %v2479 = vmul.f32 %v2463, 0.5
  %v2480 = vmul.f32 %v2468, 0.5
  %v2481 = vmul.f32 %v2471, 0.5
  %v2482 = vmul.f32 %v2444, 0.044715
  %v2483 = vmul.f32 %v2447, 0.044715
  %v2484 = vmul.f32 %v2452, 0.044715
  %v2485 = vmul.f32 %v2455, 0.044715
  %v2486 = vmul.f32 %v2460, 0.044715
  %v2487 = vmul.f32 %v2463, 0.044715
  %v2488 = vmul.f32 %v2468, 0.044715
  %v2489 = vmul.f32 %v2471, 0.044715
  %v2490 = vmul.f32 %v2482, %v2444
  %v2491 = vmul.f32 %v2483, %v2447
  %v2492 = vmul.f32 %v2484, %v2452
  %v2493 = vmul.f32 %v2485, %v2455
  %v2494 = vmul.f32 %v2486, %v2460
  %v2495 = vmul.f32 %v2487, %v2463
  %v2496 = vmul.f32 %v2488, %v2468
  %v2497 = vmul.f32 %v2489, %v2471
  %v2498 = vmul.f32 %v2490, %v2444
  %v2499 = vmul.f32 %v2491, %v2447
  %v2500 = vmul.f32 %v2492, %v2452
  %v2501 = vmul.f32 %v2493, %v2455
  %v2502 = vmul.f32 %v2494, %v2460
  %v2503 = vmul.f32 %v2495, %v2463
  %v2504 = vmul.f32 %v2496, %v2468
  %v2505 = vmul.f32 %v2497, %v2471
  %v2506 = vadd.f32 %v2444, %v2498
  %v2507 = vadd.f32 %v2447, %v2499
  %v2508 = vadd.f32 %v2452, %v2500
  %v2509 = vadd.f32 %v2455, %v2501
  %v2510 = vadd.f32 %v2460, %v2502
  %v2511 = vadd.f32 %v2463, %v2503
  %v2512 = vadd.f32 %v2468, %v2504
  %v2513 = vadd.f32 %v2471, %v2505
  %v2514 = vmul.f32 %v2506, 0.7978846
  %v2515 = vmul.f32 %v2507, 0.7978846
  %v2516 = vmul.f32 %v2508, 0.7978846
  %v2517 = vmul.f32 %v2509, 0.7978846
  %v2518 = vmul.f32 %v2510, 0.7978846
  %v2519 = vmul.f32 %v2511, 0.7978846
  %v2520 = vmul.f32 %v2512, 0.7978846
  %v2521 = vmul.f32 %v2513, 0.7978846
  %v2522 = vtanh.pop %v2514
  %v2523 = vtanh.pop %v2515
  %v2524 = vtanh.pop %v2516
  %v2525 = vtanh.pop %v2517
  %v2526 = vtanh.pop %v2518
  %v2527 = vtanh.pop %v2519
  %v2528 = vtanh.pop %v2520
  %v2529 = vtanh.pop %v2521
  %v2530 = vadd.f32 %v2522, 1.0
  %v2531 = vadd.f32 %v2523, 1.0
  %v2532 = vadd.f32 %v2524, 1.0
  %v2533 = vadd.f32 %v2525, 1.0
  %v2534 = vadd.f32 %v2526, 1.0
  %v2535 = vadd.f32 %v2527, 1.0
  %v2536 = vadd.f32 %v2528, 1.0
  %v2537 = vadd.f32 %v2529, 1.0
  %v2538 = vmul.f32 %v2474, %v2530
  %v2539 = vmul.f32 %v2475, %v2531
  %v2540 = vmul.f32 %v2476, %v2532
  %v2541 = vmul.f32 %v2477, %v2533
  %v2542 = vmul.f32 %v2478, %v2534
  %v2543 = vmul.f32 %v2479, %v2535
  %v2544 = vmul.f32 %v2480, %v2536
  %v2545 = vmul.f32 %v2481, %v2537
  %v2546 = vpack.c.bf16 %v2539, %v2538
  %v2547 = vpack.c.bf16 %v2541, %v2540
  %v2548 = vpack.c.bf16 %v2543, %v2542
  %v2549 = vpack.c.bf16 %v2545, %v2544
  %v2550 = vld [vmem:[%s6] sm:$0xf]
  %v2551 = vld [vmem:[%s6 + $0x4] sm:$0xf]
  %v2552 = vld [vmem:[%s6 + $0x8] sm:$0xf]
  %v2553 = vld [vmem:[%s6 + $0xc] sm:$0xf]
  %v2554 = vld [vmem:[%s6 + $0x10] sm:$0xf]
  %v2555 = vld [vmem:[%s6 + $0x14] sm:$0xf]
  %v2556 = vld [vmem:[%s6 + $0x18] sm:$0xf]
  %v2557 = vld [vmem:[%s6 + $0x1c] sm:$0xf]
  %v2558 = vlaneseq
  %v2559 = vshrl.u32 %v2558, 7
  %v2560 = vsub.s32 2, %v2559
  %v2561 = vrot.slane %v2123, %v2560
  %v2570 = vunpack.c.l.b16 %v2550
  %v2571 = vunpack.c.l.b16 %v2551
  %v2572 = vunpack.c.l.b16 %v2552
  %v2573 = vunpack.c.l.b16 %v2553
  %v2574 = vunpack.c.l.b16 %v2554
  %v2575 = vunpack.c.l.b16 %v2555
  %v2576 = vunpack.c.l.b16 %v2556
  %v2577 = vunpack.c.l.b16 %v2557
  %v2578 = vpack.c.b16 %v2571, %v2570
  %v2579 = vpack.c.b16 %v2573, %v2572
  %v2580 = vpack.c.b16 %v2575, %v2574
  %v2581 = vpack.c.b16 %v2577, %v2576
  %v2587 = vsel %vm1046, %v2546, 0
  %v2590 = vsel %vm1046, %v2547, 0
  %v2593 = vsel %vm1046, %v2548, 0
  %v2596 = vsel %vm1046, %v2549, 0
  %2598 = vmatprep.subr.bf16.mxu0 0
  %2599 = vmatpush1.bf16.msra.mxu0 0
  %2600 = vmatprep.subr.bf16.mxu0 0
  %2601 = vmatpush1.bf16.msra.mxu0 0
  %2602 = vmatprep.subr.bf16.mxu0 0
  %2603 = vmatpush1.bf16.msra.mxu0 0
  %2604 = vmatprep.subr.bf16.mxu0 0
  %2605 = vmatpush1.bf16.msra.mxu0 0
  %2606 = vmatprep.subr.bf16.mxu0 0
  %2607 = vmatpush1.bf16.msra.mxu0 %v2581
  %2608 = vmatprep.subr.bf16.mxu0 0
  %2609 = vmatpush1.bf16.msra.mxu0 %v2580
  %2610 = vmatprep.subr.bf16.mxu0 0
  %2611 = vmatpush1.bf16.msra.mxu0 %v2579
  %2612 = vmatprep.subr.bf16.mxu0 0
  %2613 = vmatpush1.bf16.msra.mxu0 %v2578
  %2614 = vmatprep.subr.bf16.mxu0 0
  %2615 = vmatpush2.bf16.msra.mxu0 0
  %2616 = vmatprep.subr.bf16.mxu0 0
  %2617 = vmatpush2.bf16.msra.mxu0 0
  %2618 = vmatprep.subr.bf16.mxu0 0
  %2619 = vmatpush2.bf16.msra.mxu0 0
  %2620 = vmatprep.subr.bf16.mxu0 0
  %2621 = vmatpush2.bf16.msra.mxu0 0
  %2622 = vmatprep.subr.bf16.mxu0 0
  %2623 = vmatpush2.bf16.msra.mxu0 0
  %2624 = vmatprep.subr.bf16.mxu0 0
  %2625 = vmatpush2.bf16.msra.mxu0 0
  %2626 = vmatprep.subr.bf16.mxu0 0
  %2627 = vmatpush2.bf16.msra.mxu0 0
  %2628 = vmatprep.subr.bf16.mxu0 0
  %2629 = vmatpush2.bf16.msra.mxu0 0
  %2630 = vmatprep.mubr.bf16.mxu0 0
  %2631 = vmatmul.mubr.bf16.gmra.mxu0 %v2587
  %v2632 = vpop.f32.mrf.mxu0
  %v2633 = vadd.f32 %v2561, %v2632
  %v2634 = vpop.f32.mrf.mxu0
  %v2635 = vpop.f32.mrf.mxu0
  %v2636 = vadd.f32 %v2561, %v2635
  %v2637 = vpop.f32.mrf.mxu0
  %2638 = vmatprep.mubr.bf16.mxu0 0
  %2639 = vmatmul.mubr.bf16.gmra.mxu0 %v2590
  %v2640 = vpop.f32.mrf.mxu0
  %v2641 = vadd.f32 %v2561, %v2640
  %v2642 = vpop.f32.mrf.mxu0
  %v2643 = vpop.f32.mrf.mxu0
  %v2644 = vadd.f32 %v2561, %v2643
  %v2645 = vpop.f32.mrf.mxu0
  %2646 = vmatprep.mubr.bf16.mxu0 0
  %2647 = vmatmul.mubr.bf16.gmra.mxu0 %v2593
  %v2648 = vpop.f32.mrf.mxu0
  %v2649 = vadd.f32 %v2561, %v2648
  %v2650 = vpop.f32.mrf.mxu0
  %v2651 = vpop.f32.mrf.mxu0
  %v2652 = vadd.f32 %v2561, %v2651
  %v2653 = vpop.f32.mrf.mxu0
  %2654 = vmatprep.mubr.bf16.mxu0 0
  %2655 = vmatmul.mubr.bf16.gmra.mxu0 %v2596
  %v2656 = vpop.f32.mrf.mxu0
  %v2657 = vadd.f32 %v2561, %v2656
  %v2658 = vpop.f32.mrf.mxu0
  %v2659 = vpop.f32.mrf.mxu0
  %v2660 = vadd.f32 %v2561, %v2659
  %v2661 = vpop.f32.mrf.mxu0
  %2662 = vdwg.mxu0
  %v2663 = vadd.f32 %v2329, %v2633
  %v2664 = vadd.f32 %v2330, %v2636
  %v2665 = vadd.f32 %v2331, %v2641
  %v2666 = vadd.f32 %v2332, %v2644
  %v2667 = vadd.f32 %v2333, %v2649
  %v2668 = vadd.f32 %v2334, %v2652
  %v2669 = vadd.f32 %v2335, %v2657
  %v2670 = vadd.f32 %v2336, %v2660
  %v2671 = vld [vmem:[%s11] sm:$0xff]
  %v2672 = vld [vmem:[%s11 + $0x8] sm:$0xff]
  %v2673 = vld [vmem:[%s11 + $0x10] sm:$0xff]
  %v2674 = vld [vmem:[%s11 + $0x18] sm:$0xff]
  %v2675 = vld [vmem:[%s11 + $0x20] sm:$0xff]
  %v2676 = vld [vmem:[%s11 + $0x28] sm:$0xff]
  %v2677 = vld [vmem:[%s11 + $0x30] sm:$0xff]
  %v2678 = vld [vmem:[%s11 + $0x38] sm:$0xff]
  %v2679 = vld [vmem:[%s11 + $0x40] sm:$0xff]
  %v2680 = vld [vmem:[%s11 + $0x48] sm:$0xff]
  %v2681 = vld [vmem:[%s11 + $0x50] sm:$0xff]
  %v2682 = vld [vmem:[%s11 + $0x58] sm:$0xff]
  %v2683 = vld [vmem:[%s11 + $0x60] sm:$0xff]
  %v2684 = vld [vmem:[%s11 + $0x68] sm:$0xff]
  %v2685 = vld [vmem:[%s11 + $0x70] sm:$0xff]
  %v2686 = vld [vmem:[%s11 + $0x78] sm:$0xff]
  %2687 = vmatprep.subr.mxu0 0.0
  %2688 = vmatpush1.msra.mxu0 %v2686
  %2689 = vmatprep.subr.mxu0 0.0
  %2690 = vmatpush1.msra.mxu0 %v2685
  %2691 = vmatprep.subr.mxu0 0.0
  %2692 = vmatpush1.msra.mxu0 %v2684
  %2693 = vmatprep.subr.mxu0 0.0
  %2694 = vmatpush1.msra.mxu0 %v2683
  %2695 = vmatprep.subr.mxu0 0.0
  %2696 = vmatpush1.msra.mxu0 %v2682
  %2697 = vmatprep.subr.mxu0 0.0
  %2698 = vmatpush1.msra.mxu0 %v2681
  %2699 = vmatprep.subr.mxu0 0.0
  %2700 = vmatpush1.msra.mxu0 %v2680
  %2701 = vmatprep.subr.mxu0 0.0
  %2702 = vmatpush1.msra.mxu0 %v2679
  %2703 = vmatprep.subr.mxu0 0.0
  %2704 = vmatpush1.msra.mxu0 %v2678
  %2705 = vmatprep.subr.mxu0 0.0
  %2706 = vmatpush1.msra.mxu0 %v2677
  %2707 = vmatprep.subr.mxu0 0.0
  %2708 = vmatpush1.msra.mxu0 %v2676
  %2709 = vmatprep.subr.mxu0 0.0
  %2710 = vmatpush1.msra.mxu0 %v2675
  %2711 = vmatprep.subr.mxu0 0.0
  %2712 = vmatpush1.msra.mxu0 %v2674
  %2713 = vmatprep.subr.mxu0 0.0
  %2714 = vmatpush1.msra.mxu0 %v2673
  %2715 = vmatprep.subr.mxu0 0.0
  %2716 = vmatpush1.msra.mxu0 %v2672
  %2717 = vmatprep.subr.mxu0 0.0
  %2718 = vmatpush1.msra.mxu0 %v2671
  %2719 = vmatprep.subr.mxu0 0.0
  %2720 = vmatpush2.msra.mxu0 0.0
  %2721 = vmatprep.subr.mxu0 0.0
  %2722 = vmatpush2.msra.mxu0 0.0
  %2723 = vmatprep.subr.mxu0 0.0
  %2724 = vmatpush2.msra.mxu0 0.0
  %2725 = vmatprep.subr.mxu0 0.0
  %2726 = vmatpush2.msra.mxu0 0.0
  %2727 = vmatprep.subr.mxu0 0.0
  %2728 = vmatpush2.msra.mxu0 0.0
  %2729 = vmatprep.subr.mxu0 0.0
  %2730 = vmatpush2.msra.mxu0 0.0
  %2731 = vmatprep.subr.mxu0 0.0
  %2732 = vmatpush2.msra.mxu0 0.0
  %2733 = vmatprep.subr.mxu0 0.0
  %2734 = vmatpush2.msra.mxu0 0.0
  %2735 = vmatprep.subr.mxu0 0.0
  %2736 = vmatpush2.msra.mxu0 0.0
  %2737 = vmatprep.subr.mxu0 0.0
  %2738 = vmatpush2.msra.mxu0 0.0
  %2739 = vmatprep.subr.mxu0 0.0
  %2740 = vmatpush2.msra.mxu0 0.0
  %2741 = vmatprep.subr.mxu0 0.0
  %2742 = vmatpush2.msra.mxu0 0.0
  %2743 = vmatprep.subr.mxu0 0.0
  %2744 = vmatpush2.msra.mxu0 0.0
  %2745 = vmatprep.subr.mxu0 0.0
  %2746 = vmatpush2.msra.mxu0 0.0
  %2747 = vmatprep.subr.mxu0 0.0
  %2748 = vmatpush2.msra.mxu0 0.0
  %2749 = vmatprep.subr.mxu0 0.0
  %2750 = vmatpush2.msra.mxu0 0.0
  %2751 = vmatprep.mubr.f32.mxu0 0.0
  %2752 = vmatmul.mubr.f32.gmra.mxu0 %v2663
  %v2753 = vpop.f32.mrf.mxu0
  %v2754 = vadd.f32 0.0, %v2753
  %v2755 = vpop.f32.mrf.mxu0
  %2756 = vmatprep.mubr.f32.mxu0 0.0
  %2757 = vmatmul.mubr.f32.gmra.mxu0 %v2664
  %v2758 = vpop.f32.mrf.mxu0
  %v2759 = vadd.f32 0.0, %v2758
  %v2760 = vpop.f32.mrf.mxu0
  %2761 = vmatprep.mubr.f32.mxu0 0.0
  %2762 = vmatmul.mubr.f32.gmra.mxu0 %v2665
  %v2763 = vpop.f32.mrf.mxu0
  %v2764 = vadd.f32 0.0, %v2763
  %v2765 = vpop.f32.mrf.mxu0
  %2766 = vmatprep.mubr.f32.mxu0 0.0
  %2767 = vmatmul.mubr.f32.gmra.mxu0 %v2666
  %v2768 = vpop.f32.mrf.mxu0
  %v2769 = vadd.f32 0.0, %v2768
  %v2770 = vpop.f32.mrf.mxu0
  %2771 = vmatprep.mubr.f32.mxu0 0.0
  %2772 = vmatmul.mubr.f32.gmra.mxu0 %v2667
  %v2773 = vpop.f32.mrf.mxu0
  %v2774 = vadd.f32 0.0, %v2773
  %v2775 = vpop.f32.mrf.mxu0
  %2776 = vmatprep.mubr.f32.mxu0 0.0
  %2777 = vmatmul.mubr.f32.gmra.mxu0 %v2668
  %v2778 = vpop.f32.mrf.mxu0
  %v2779 = vadd.f32 0.0, %v2778
  %v2780 = vpop.f32.mrf.mxu0
  %2781 = vmatprep.mubr.f32.mxu0 0.0
  %2782 = vmatmul.mubr.f32.gmra.mxu0 %v2669
  %v2783 = vpop.f32.mrf.mxu0
  %v2784 = vadd.f32 0.0, %v2783
  %v2785 = vpop.f32.mrf.mxu0
  %2786 = vmatprep.mubr.f32.mxu0 0.0
  %2787 = vmatmul.mubr.f32.gmra.mxu0 %v2670
  %v2788 = vpop.f32.mrf.mxu0
  %v2789 = vadd.f32 0.0, %v2788
  %v2790 = vpop.f32.mrf.mxu0
  %2791 = vdwg.mxu0
  %v2793 = vsel %vm209, %v2754, 0
  %v2796 = vsel %vm209, %v2759, 0
  %v2799 = vsel %vm209, %v2764, 0
  %v2802 = vsel %vm209, %v2769, 0
  %v2805 = vsel %vm209, %v2774, 0
  %v2808 = vsel %vm209, %v2779, 0
  %v2811 = vsel %vm209, %v2784, 0
  %v2814 = vsel %vm209, %v2789, 0
  %2816 = vmatprep.subr.mxu0 0.0
  %2817 = vmatpush1.msra.mxu0 0.0
  %2818 = vmatprep.subr.mxu0 0.0
  %2819 = vmatpush1.msra.mxu0 0.0
  %2820 = vmatprep.subr.mxu0 0.0
  %2821 = vmatpush1.msra.mxu0 0.0
  %2822 = vmatprep.subr.mxu0 0.0
  %2823 = vmatpush1.msra.mxu0 0.0
  %2824 = vmatprep.subr.mxu0 0.0
  %2825 = vmatpush1.msra.mxu0 0.0
  %2826 = vmatprep.subr.mxu0 0.0
  %2827 = vmatpush1.msra.mxu0 0.0
  %2828 = vmatprep.subr.mxu0 0.0
  %2829 = vmatpush1.msra.mxu0 0.0
  %2830 = vmatprep.subr.mxu0 0.0
  %2831 = vmatpush1.msra.mxu0 0.0
  %2832 = vmatprep.subr.mxu0 0.0
  %2833 = vmatpush1.msra.mxu0 0.0
  %2834 = vmatprep.subr.mxu0 0.0
  %2835 = vmatpush1.msra.mxu0 0.0
  %2836 = vmatprep.subr.mxu0 0.0
  %2837 = vmatpush1.msra.mxu0 0.0
  %2838 = vmatprep.subr.mxu0 0.0
  %2839 = vmatpush1.msra.mxu0 0.0
  %2840 = vmatprep.subr.mxu0 0.0
  %2841 = vmatpush1.msra.mxu0 0.0
  %2842 = vmatprep.subr.mxu0 0.0
  %2843 = vmatpush1.msra.mxu0 0.0
  %2844 = vmatprep.subr.mxu0 0.0
  %2845 = vmatpush1.msra.mxu0 %v2122
  %2846 = vmatprep.subr.mxu0 0.0
  %2847 = vmatpush1.msra.mxu0 %v2121
  %2848 = vmatprep.subr.mxu0 0.0
  %2849 = vmatpush2.msra.mxu0 0.0
  %2850 = vmatprep.subr.mxu0 0.0
  %2851 = vmatpush2.msra.mxu0 0.0
  %2852 = vmatprep.subr.mxu0 0.0
  %2853 = vmatpush2.msra.mxu0 0.0
  %2854 = vmatprep.subr.mxu0 0.0
  %2855 = vmatpush2.msra.mxu0 0.0
  %2856 = vmatprep.subr.mxu0 0.0
  %2857 = vmatpush2.msra.mxu0 0.0
  %2858 = vmatprep.subr.mxu0 0.0
  %2859 = vmatpush2.msra.mxu0 0.0
  %2860 = vmatprep.subr.mxu0 0.0
  %2861 = vmatpush2.msra.mxu0 0.0
  %2862 = vmatprep.subr.mxu0 0.0
  %2863 = vmatpush2.msra.mxu0 0.0
  %2864 = vmatprep.subr.mxu0 0.0
  %2865 = vmatpush2.msra.mxu0 0.0
  %2866 = vmatprep.subr.mxu0 0.0
  %2867 = vmatpush2.msra.mxu0 0.0
  %2868 = vmatprep.subr.mxu0 0.0
  %2869 = vmatpush2.msra.mxu0 0.0
  %2870 = vmatprep.subr.mxu0 0.0
  %2871 = vmatpush2.msra.mxu0 0.0
  %2872 = vmatprep.subr.mxu0 0.0
  %2873 = vmatpush2.msra.mxu0 0.0
  %2874 = vmatprep.subr.mxu0 0.0
  %2875 = vmatpush2.msra.mxu0 0.0
  %2876 = vmatprep.subr.mxu0 0.0
  %2877 = vmatpush2.msra.mxu0 0.0
  %2878 = vmatprep.subr.mxu0 0.0
  %2879 = vmatpush2.msra.mxu0 0.0
  %2880 = vmatprep.mubr.f32.mxu0 0.0
  %2881 = vmatmul.mubr.f32.gmra.mxu0 %v2793
  %v2882 = vpop.f32.mrf.mxu0
  %v2883 = vadd.f32 0.0, %v2882
  %v2884 = vpop.f32.mrf.mxu0
  %2885 = vmatprep.mubr.f32.mxu0 0.0
  %2886 = vmatmul.mubr.f32.gmra.mxu0 %v2796
  %v2887 = vpop.f32.mrf.mxu0
  %v2888 = vadd.f32 0.0, %v2887
  %v2889 = vpop.f32.mrf.mxu0
  %2890 = vmatprep.mubr.f32.mxu0 0.0
  %2891 = vmatmul.mubr.f32.gmra.mxu0 %v2799
  %v2892 = vpop.f32.mrf.mxu0
  %v2893 = vadd.f32 0.0, %v2892
  %v2894 = vpop.f32.mrf.mxu0
  %2895 = vmatprep.mubr.f32.mxu0 0.0
  %2896 = vmatmul.mubr.f32.gmra.mxu0 %v2802
  %v2897 = vpop.f32.mrf.mxu0
  %v2898 = vadd.f32 0.0, %v2897
  %v2899 = vpop.f32.mrf.mxu0
  %2900 = vmatprep.mubr.f32.mxu0 0.0
  %2901 = vmatmul.mubr.f32.gmra.mxu0 %v2805
  %v2902 = vpop.f32.mrf.mxu0
  %v2903 = vadd.f32 0.0, %v2902
  %v2904 = vpop.f32.mrf.mxu0
  %2905 = vmatprep.mubr.f32.mxu0 0.0
  %2906 = vmatmul.mubr.f32.gmra.mxu0 %v2808
  %v2907 = vpop.f32.mrf.mxu0
  %v2908 = vadd.f32 0.0, %v2907
  %v2909 = vpop.f32.mrf.mxu0
  %2910 = vmatprep.mubr.f32.mxu0 0.0
  %2911 = vmatmul.mubr.f32.gmra.mxu0 %v2811
  %v2912 = vpop.f32.mrf.mxu0
  %v2913 = vadd.f32 0.0, %v2912
  %v2914 = vpop.f32.mrf.mxu0
  %2915 = vmatprep.mubr.f32.mxu0 0.0
  %2916 = vmatmul.mubr.f32.gmra.mxu0 %v2814
  %v2917 = vpop.f32.mrf.mxu0
  %v2918 = vadd.f32 0.0, %v2917
  %v2919 = vpop.f32.mrf.mxu0
  %2920 = vdwg.mxu0
  %v2921 = vsub.f32 %v2663, %v2883
  %v2922 = vsub.f32 %v2664, %v2888
  %v2923 = vsub.f32 %v2665, %v2893
  %v2924 = vsub.f32 %v2666, %v2898
  %v2925 = vsub.f32 %v2667, %v2903
  %v2926 = vsub.f32 %v2668, %v2908
  %v2927 = vsub.f32 %v2669, %v2913
  %v2928 = vsub.f32 %v2670, %v2918
  %v2929 = vmul.f32 %v2921, %v2921
  %v2930 = vmul.f32 %v2922, %v2922
  %v2931 = vmul.f32 %v2923, %v2923
  %v2932 = vmul.f32 %v2924, %v2924
  %v2933 = vmul.f32 %v2925, %v2925
  %v2934 = vmul.f32 %v2926, %v2926
  %v2935 = vmul.f32 %v2927, %v2927
  %v2936 = vmul.f32 %v2928, %v2928
  %2937 = vmatprep.subr.mxu0 0.0
  %2938 = vmatpush1.msra.mxu0 %v2686
  %2939 = vmatprep.subr.mxu0 0.0
  %2940 = vmatpush1.msra.mxu0 %v2685
  %2941 = vmatprep.subr.mxu0 0.0
  %2942 = vmatpush1.msra.mxu0 %v2684
  %2943 = vmatprep.subr.mxu0 0.0
  %2944 = vmatpush1.msra.mxu0 %v2683
  %2945 = vmatprep.subr.mxu0 0.0
  %2946 = vmatpush1.msra.mxu0 %v2682
  %2947 = vmatprep.subr.mxu0 0.0
  %2948 = vmatpush1.msra.mxu0 %v2681
  %2949 = vmatprep.subr.mxu0 0.0
  %2950 = vmatpush1.msra.mxu0 %v2680
  %2951 = vmatprep.subr.mxu0 0.0
  %2952 = vmatpush1.msra.mxu0 %v2679
  %2953 = vmatprep.subr.mxu0 0.0
  %2954 = vmatpush1.msra.mxu0 %v2678
  %2955 = vmatprep.subr.mxu0 0.0
  %2956 = vmatpush1.msra.mxu0 %v2677
  %2957 = vmatprep.subr.mxu0 0.0
  %2958 = vmatpush1.msra.mxu0 %v2676
  %2959 = vmatprep.subr.mxu0 0.0
  %2960 = vmatpush1.msra.mxu0 %v2675
  %2961 = vmatprep.subr.mxu0 0.0
  %2962 = vmatpush1.msra.mxu0 %v2674
  %2963 = vmatprep.subr.mxu0 0.0
  %2964 = vmatpush1.msra.mxu0 %v2673
  %2965 = vmatprep.subr.mxu0 0.0
  %2966 = vmatpush1.msra.mxu0 %v2672
  %2967 = vmatprep.subr.mxu0 0.0
  %2968 = vmatpush1.msra.mxu0 %v2671
  %2969 = vmatprep.subr.mxu0 0.0
  %2970 = vmatpush2.msra.mxu0 0.0
  %2971 = vmatprep.subr.mxu0 0.0
  %2972 = vmatpush2.msra.mxu0 0.0
  %2973 = vmatprep.subr.mxu0 0.0
  %2974 = vmatpush2.msra.mxu0 0.0
  %2975 = vmatprep.subr.mxu0 0.0
  %2976 = vmatpush2.msra.mxu0 0.0
  %2977 = vmatprep.subr.mxu0 0.0
  %2978 = vmatpush2.msra.mxu0 0.0
  %2979 = vmatprep.subr.mxu0 0.0
  %2980 = vmatpush2.msra.mxu0 0.0
  %2981 = vmatprep.subr.mxu0 0.0
  %2982 = vmatpush2.msra.mxu0 0.0
  %2983 = vmatprep.subr.mxu0 0.0
  %2984 = vmatpush2.msra.mxu0 0.0
  %2985 = vmatprep.subr.mxu0 0.0
  %2986 = vmatpush2.msra.mxu0 0.0
  %2987 = vmatprep.subr.mxu0 0.0
  %2988 = vmatpush2.msra.mxu0 0.0
  %2989 = vmatprep.subr.mxu0 0.0
  %2990 = vmatpush2.msra.mxu0 0.0
  %2991 = vmatprep.subr.mxu0 0.0
  %2992 = vmatpush2.msra.mxu0 0.0
  %2993 = vmatprep.subr.mxu0 0.0
  %2994 = vmatpush2.msra.mxu0 0.0
  %2995 = vmatprep.subr.mxu0 0.0
  %2996 = vmatpush2.msra.mxu0 0.0
  %2997 = vmatprep.subr.mxu0 0.0
  %2998 = vmatpush2.msra.mxu0 0.0
  %2999 = vmatprep.subr.mxu0 0.0
  %3000 = vmatpush2.msra.mxu0 0.0
  %3001 = vmatprep.mubr.f32.mxu0 0.0
  %3002 = vmatmul.mubr.f32.gmra.mxu0 %v2929
  %v3003 = vpop.f32.mrf.mxu0
  %v3004 = vadd.f32 1e-05, %v3003
  %v3005 = vpop.f32.mrf.mxu0
  %3006 = vmatprep.mubr.f32.mxu0 0.0
  %3007 = vmatmul.mubr.f32.gmra.mxu0 %v2930
  %v3008 = vpop.f32.mrf.mxu0
  %v3009 = vadd.f32 1e-05, %v3008
  %v3010 = vpop.f32.mrf.mxu0
  %3011 = vmatprep.mubr.f32.mxu0 0.0
  %3012 = vmatmul.mubr.f32.gmra.mxu0 %v2931
  %v3013 = vpop.f32.mrf.mxu0
  %v3014 = vadd.f32 1e-05, %v3013
  %v3015 = vpop.f32.mrf.mxu0
  %3016 = vmatprep.mubr.f32.mxu0 0.0
  %3017 = vmatmul.mubr.f32.gmra.mxu0 %v2932
  %v3018 = vpop.f32.mrf.mxu0
  %v3019 = vadd.f32 1e-05, %v3018
  %v3020 = vpop.f32.mrf.mxu0
  %3021 = vmatprep.mubr.f32.mxu0 0.0
  %3022 = vmatmul.mubr.f32.gmra.mxu0 %v2933
  %v3023 = vpop.f32.mrf.mxu0
  %v3024 = vadd.f32 1e-05, %v3023
  %v3025 = vpop.f32.mrf.mxu0
  %3026 = vmatprep.mubr.f32.mxu0 0.0
  %3027 = vmatmul.mubr.f32.gmra.mxu0 %v2934
  %v3028 = vpop.f32.mrf.mxu0
  %v3029 = vadd.f32 1e-05, %v3028
  %v3030 = vpop.f32.mrf.mxu0
  %3031 = vmatprep.mubr.f32.mxu0 0.0
  %3032 = vmatmul.mubr.f32.gmra.mxu0 %v2935
  %v3033 = vpop.f32.mrf.mxu0
  %v3034 = vadd.f32 1e-05, %v3033
  %v3035 = vpop.f32.mrf.mxu0
  %3036 = vmatprep.mubr.f32.mxu0 0.0
  %3037 = vmatmul.mubr.f32.gmra.mxu0 %v2936
  %v3038 = vpop.f32.mrf.mxu0
  %v3039 = vadd.f32 1e-05, %v3038
  %v3040 = vpop.f32.mrf.mxu0
  %3041 = vdwg.mxu0
  %v3042 = vrsqrt.pop %v3004
  %v3043 = vrsqrt.pop %v3009
  %v3044 = vrsqrt.pop %v3014
  %v3045 = vrsqrt.pop %v3019
  %v3046 = vrsqrt.pop %v3024
  %v3047 = vrsqrt.pop %v3029
  %v3048 = vrsqrt.pop %v3034
  %v3049 = vrsqrt.pop %v3039
  %v3051 = vsel %vm209, %v3042, 0
  %v3054 = vsel %vm209, %v3043, 0
  %v3057 = vsel %vm209, %v3044, 0
  %v3060 = vsel %vm209, %v3045, 0
  %v3063 = vsel %vm209, %v3046, 0
  %v3066 = vsel %vm209, %v3047, 0
  %v3069 = vsel %vm209, %v3048, 0
  %v3072 = vsel %vm209, %v3049, 0
  %3074 = vmatprep.subr.mxu0 0.0
  %3075 = vmatpush1.msra.mxu0 0.0
  %3076 = vmatprep.subr.mxu0 0.0
  %3077 = vmatpush1.msra.mxu0 0.0
  %3078 = vmatprep.subr.mxu0 0.0
  %3079 = vmatpush1.msra.mxu0 0.0
  %3080 = vmatprep.subr.mxu0 0.0
  %3081 = vmatpush1.msra.mxu0 0.0
  %3082 = vmatprep.subr.mxu0 0.0
  %3083 = vmatpush1.msra.mxu0 0.0
  %3084 = vmatprep.subr.mxu0 0.0
  %3085 = vmatpush1.msra.mxu0 0.0
  %3086 = vmatprep.subr.mxu0 0.0
  %3087 = vmatpush1.msra.mxu0 0.0
  %3088 = vmatprep.subr.mxu0 0.0
  %3089 = vmatpush1.msra.mxu0 0.0
  %3090 = vmatprep.subr.mxu0 0.0
  %3091 = vmatpush1.msra.mxu0 0.0
  %3092 = vmatprep.subr.mxu0 0.0
  %3093 = vmatpush1.msra.mxu0 0.0
  %3094 = vmatprep.subr.mxu0 0.0
  %3095 = vmatpush1.msra.mxu0 0.0
  %3096 = vmatprep.subr.mxu0 0.0
  %3097 = vmatpush1.msra.mxu0 0.0
  %3098 = vmatprep.subr.mxu0 0.0
  %3099 = vmatpush1.msra.mxu0 0.0
  %3100 = vmatprep.subr.mxu0 0.0
  %3101 = vmatpush1.msra.mxu0 0.0
  %3102 = vmatprep.subr.mxu0 0.0
  %3103 = vmatpush1.msra.mxu0 %v2122
  %3104 = vmatprep.subr.mxu0 0.0
  %3105 = vmatpush1.msra.mxu0 %v2121
  %3106 = vmatprep.subr.mxu0 0.0
  %3107 = vmatpush2.msra.mxu0 0.0
  %3108 = vmatprep.subr.mxu0 0.0
  %3109 = vmatpush2.msra.mxu0 0.0
  %3110 = vmatprep.subr.mxu0 0.0
  %3111 = vmatpush2.msra.mxu0 0.0
  %3112 = vmatprep.subr.mxu0 0.0
  %3113 = vmatpush2.msra.mxu0 0.0
  %3114 = vmatprep.subr.mxu0 0.0
  %3115 = vmatpush2.msra.mxu0 0.0
  %3116 = vmatprep.subr.mxu0 0.0
  %3117 = vmatpush2.msra.mxu0 0.0
  %3118 = vmatprep.subr.mxu0 0.0
  %3119 = vmatpush2.msra.mxu0 0.0
  %3120 = vmatprep.subr.mxu0 0.0
  %3121 = vmatpush2.msra.mxu0 0.0
  %3122 = vmatprep.subr.mxu0 0.0
  %3123 = vmatpush2.msra.mxu0 0.0
  %3124 = vmatprep.subr.mxu0 0.0
  %3125 = vmatpush2.msra.mxu0 0.0
  %3126 = vmatprep.subr.mxu0 0.0
  %3127 = vmatpush2.msra.mxu0 0.0
  %3128 = vmatprep.subr.mxu0 0.0
  %3129 = vmatpush2.msra.mxu0 0.0
  %3130 = vmatprep.subr.mxu0 0.0
  %3131 = vmatpush2.msra.mxu0 0.0
  %3132 = vmatprep.subr.mxu0 0.0
  %3133 = vmatpush2.msra.mxu0 0.0
  %3134 = vmatprep.subr.mxu0 0.0
  %3135 = vmatpush2.msra.mxu0 0.0
  %3136 = vmatprep.subr.mxu0 0.0
  %3137 = vmatpush2.msra.mxu0 0.0
  %3138 = vmatprep.mubr.f32.mxu0 0.0
  %3139 = vmatmul.mubr.f32.gmra.mxu0 %v3051
  %v3140 = vpop.f32.mrf.mxu0
  %v3141 = vadd.f32 0.0, %v3140
  %v3142 = vpop.f32.mrf.mxu0
  %3143 = vmatprep.mubr.f32.mxu0 0.0
  %3144 = vmatmul.mubr.f32.gmra.mxu0 %v3054
  %v3145 = vpop.f32.mrf.mxu0
  %v3146 = vadd.f32 0.0, %v3145
  %v3147 = vpop.f32.mrf.mxu0
  %3148 = vmatprep.mubr.f32.mxu0 0.0
  %3149 = vmatmul.mubr.f32.gmra.mxu0 %v3057
  %v3150 = vpop.f32.mrf.mxu0
  %v3151 = vadd.f32 0.0, %v3150
  %v3152 = vpop.f32.mrf.mxu0
  %3153 = vmatprep.mubr.f32.mxu0 0.0
  %3154 = vmatmul.mubr.f32.gmra.mxu0 %v3060
  %v3155 = vpop.f32.mrf.mxu0
  %v3156 = vadd.f32 0.0, %v3155
  %v3157 = vpop.f32.mrf.mxu0
  %3158 = vmatprep.mubr.f32.mxu0 0.0
  %3159 = vmatmul.mubr.f32.gmra.mxu0 %v3063
  %v3160 = vpop.f32.mrf.mxu0
  %v3161 = vadd.f32 0.0, %v3160
  %v3162 = vpop.f32.mrf.mxu0
  %3163 = vmatprep.mubr.f32.mxu0 0.0
  %3164 = vmatmul.mubr.f32.gmra.mxu0 %v3066
  %v3165 = vpop.f32.mrf.mxu0
  %v3166 = vadd.f32 0.0, %v3165
  %v3167 = vpop.f32.mrf.mxu0
  %3168 = vmatprep.mubr.f32.mxu0 0.0
  %3169 = vmatmul.mubr.f32.gmra.mxu0 %v3069
  %v3170 = vpop.f32.mrf.mxu0
  %v3171 = vadd.f32 0.0, %v3170
  %v3172 = vpop.f32.mrf.mxu0
  %3173 = vmatprep.mubr.f32.mxu0 0.0
  %3174 = vmatmul.mubr.f32.gmra.mxu0 %v3072
  %v3175 = vpop.f32.mrf.mxu0
  %v3176 = vadd.f32 0.0, %v3175
  %v3177 = vpop.f32.mrf.mxu0
  %3178 = vdwg.mxu0
  %v3179 = vmul.f32 %v2921, %v3141
  %v3180 = vmul.f32 %v2922, %v3146
  %v3181 = vmul.f32 %v2923, %v3151
  %v3182 = vmul.f32 %v2924, %v3156
  %v3183 = vmul.f32 %v2925, %v3161
  %v3184 = vmul.f32 %v2926, %v3166
  %v3185 = vmul.f32 %v2927, %v3171
  %v3186 = vmul.f32 %v2928, %v3176
  %v3187 = vlaneseq
  %v3188 = vshrl.u32 %v3187, 7
  %v3189 = vsub.s32 3, %v3188
  %v3190 = vrot.slane %v2123, %v3189
  %v3191 = vmul.f32 %v3179, %v3190
  %v3192 = vmul.f32 %v3180, %v3190
  %v3193 = vmul.f32 %v3181, %v3190
  %v3194 = vmul.f32 %v3182, %v3190
  %v3195 = vmul.f32 %v3183, %v3190
  %v3196 = vmul.f32 %v3184, %v3190
  %v3197 = vmul.f32 %v3185, %v3190
  %v3198 = vmul.f32 %v3186, %v3190
  %v3199 = vlaneseq
  %v3200 = vshrl.u32 %v3199, 7
  %v3201 = vsub.s32 4, %v3200
  %v3202 = vrot.slane %v2123, %v3201
  %v3203 = vadd.f32 %v3191, %v3202
  %v3204 = vadd.f32 %v3192, %v3202
  %v3205 = vadd.f32 %v3193, %v3202
  %v3206 = vadd.f32 %v3194, %v3202
  %v3207 = vadd.f32 %v3195, %v3202
  %v3208 = vadd.f32 %v3196, %v3202
  %v3209 = vadd.f32 %v3197, %v3202
  %v3210 = vadd.f32 %v3198, %v3202
  %3211 = vst [vmem:[%s12] sm:$0xff] %v3203
  %3212 = vst [vmem:[%s12 + $0x8] sm:$0xff] %v3204
  %3213 = vst [vmem:[%s12 + $0x10] sm:$0xff] %v3205
  %3214 = vst [vmem:[%s12 + $0x18] sm:$0xff] %v3206
  %3215 = vst [vmem:[%s12 + $0x20] sm:$0xff] %v3207
  %3216 = vst [vmem:[%s12 + $0x28] sm:$0xff] %v3208
  %3217 = vst [vmem:[%s12 + $0x30] sm:$0xff] %v3209
  %3218 = vst [vmem:[%s12 + $0x38] sm:$0xff] %v3210
  // Predicated region
  $region50: #{pc_mlp_up_forward.1} parent=0 // pred_check
    _
  $region51: #{pc_mlp_up_forward.1} parent=0 // pred_check_branch
    %3220 = sbr.rel (0) target = $region53
  $region52: #{pc_mlp_up_forward.1} parent=0 // pred_region
    _
  $region53: #{pc_mlp_up_forward.1} parent=0 // pred_fallthru
    _
  // Predicated region
  $region54: #{pc_mlp_up_forward.1} parent=0 // pred_check
    _
  $region55: #{pc_mlp_up_forward.1} parent=0 // pred_check_branch
    %3222 = sbr.rel (0) target = $region57
  $region56: #{pc_mlp_up_forward.1} parent=0 // pred_region
    _
  $region57: #{pc_mlp_up_forward.1} parent=0 // pred_fallthru
    _

</llo_original>
